<compile_context>
chip_gen: v7x
topology: tpu7x:2x2x1
jax: 0.10.0
libtpu: 0.0.40
codegen_flags: <defaults>
</compile_context>

<pallas_src>
import functools

import jax
import jax.numpy as jnp
from jax.experimental import pallas as pl
from jax.experimental.pallas import tpu as pltpu


def _conv_cell_kernel(x_ref, w1_ref, w2_ref, o_ref, *, H, W, Ho, Wo, stride,
                      eps=1e-5, neg_slope=0.1):
    """One batch element: (reflect-pad -> 3x3 conv -> IN -> LeakyReLU) x2."""
    cout = w1_ref.shape[0]

    def reflect_pad1(z, h, w):
        # PyTorch 'reflect' pad=1: padded[0] = z[1], padded[-1] = z[-2].
        z = jnp.concatenate([z[:, 1:2, :], z, z[:, h - 2:h - 1, :]], axis=1)
        z = jnp.concatenate([z[:, :, 1:2], z, z[:, :, w - 2:w - 1]], axis=2)
        return z                                            # (C, h+2, w+2)

    def im2col(zp, ho, wo, s, dtype):
        # (C, hp, wp) -> (9*C, ho*wo), tap order (dy, dx) major, channel minor.
        c = zp.shape[0]
        taps = []
        for dy in range(3):
            for dx in range(3):
                t = zp[:, dy:dy + s * (ho - 1) + 1:s,
                       dx:dx + s * (wo - 1) + 1:s]           # (C, ho, wo)
                taps.append(t.reshape(c, ho * wo))
        return jnp.concatenate(taps, axis=0).astype(dtype)

    def inorm_lrelu(acc):
        # InstanceNorm2d (affine=False, biased var, eps) + LeakyReLU(0.1), f32.
        mean = jnp.mean(acc, axis=1, keepdims=True)
        var = jnp.mean(jnp.square(acc - mean), axis=1, keepdims=True)
        y = (acc - mean) * jax.lax.rsqrt(var + eps)
        return jnp.where(y > 0, y, neg_slope * y)

    # ---- layer 1: conv (stride) + IN + LeakyReLU ----
    x = x_ref[0].astype(jnp.float32)                        # (Cin, H, W)
    p1 = im2col(reflect_pad1(x, H, W), Ho, Wo, stride, w1_ref.dtype)
    acc1 = jnp.dot(w1_ref[...], p1,
                   preferred_element_type=jnp.float32)      # (Cout, Ho*Wo) f32
    y1 = inorm_lrelu(acc1).reshape(cout, Ho, Wo)

    # ---- layer 2: conv (stride 1) + IN + LeakyReLU (intermediate stays in VMEM) ----
    p2 = im2col(reflect_pad1(y1, Ho, Wo), Ho, Wo, 1, w2_ref.dtype)
    acc2 = jnp.dot(w2_ref[...], p2,
                   preferred_element_type=jnp.float32)      # (Cout, Ho*Wo) f32
    y2 = inorm_lrelu(acc2)

    o_ref[0] = y2.astype(o_ref.dtype)                       # lane-dense store


def _prep_weight(w_oihw, compute_dtype):
    """(Cout, Cin, 3, 3) PyTorch layout -> resident 2D (Cout, 9*Cin) tile.

    Row ordering matches the im2col tap order: (dy, dx) major, channel minor.
    """
    cout, cin = w_oihw.shape[0], w_oihw.shape[1]
    return (jnp.transpose(w_oihw, (0, 2, 3, 1))
            .reshape(cout, 9 * cin)
            .astype(compute_dtype))


def conv_cell_forward(x_nchw, w1_oihw, w2_oihw, stride=1,
                      compute_dtype=jnp.bfloat16, eps=1e-5, neg_slope=0.1):
    """Matches ConvCell.forward. NCHW in / NCHW out, no wrapper transposes."""
    N, Cin, H, W = x_nchw.shape
    Cout = w1_oihw.shape[0]
    Ho = (H + 2 - 3) // stride + 1
    Wo = (W + 2 - 3) // stride + 1

    x_in = x_nchw.astype(compute_dtype)       # halves HBM DMA bytes in bf16 mode
    w1 = _prep_weight(w1_oihw, compute_dtype)
    w2 = _prep_weight(w2_oihw, compute_dtype)

    kernel = functools.partial(_conv_cell_kernel, H=H, W=W, Ho=Ho, Wo=Wo,
                               stride=stride, eps=eps, neg_slope=neg_slope)

    out = pl.pallas_call(
        kernel,
        out_shape=jax.ShapeDtypeStruct((N, Cout, Ho * Wo), x_nchw.dtype),
        grid=(N,),
        in_specs=[
            pl.BlockSpec((1, Cin, H, W), lambda n: (n, 0, 0, 0)),
            pl.BlockSpec((Cout, 9 * Cin), lambda n: (0, 0)),   # resident weight
            pl.BlockSpec((Cout, 9 * Cout), lambda n: (0, 0)),  # resident weight
        ],
        out_specs=pl.BlockSpec((1, Cout, Ho * Wo), lambda n: (n, 0, 0)),
        compiler_params=pltpu.CompilerParams(
            dimension_semantics=("parallel",),
            # Explicit budget sized well under the v7x 64 MiB physical VMEM.
            vmem_limit_bytes=32 * 1024 * 1024),
    )(x_in, w1, w2)

    # Free metadata reshape back to NCHW spatial layout.
    return out.reshape(N, Cout, Ho, Wo)


# ----- pure-JAX reference (for correctness check only) -----
def _ref_block(x_nchw, w_oihw, stride):
    xpad = jnp.pad(x_nchw, ((0, 0), (0, 0), (1, 1), (1, 1)), mode="reflect")
    y = jax.lax.conv_general_dilated(
        xpad, w_oihw, (stride, stride), "VALID",
        dimension_numbers=("NCHW", "OIHW", "NCHW"))
    mean = jnp.mean(y, axis=(2, 3), keepdims=True)
    var = jnp.mean(jnp.square(y - mean), axis=(2, 3), keepdims=True)
    y = (y - mean) * jax.lax.rsqrt(var + 1e-5)
    return jnp.where(y > 0, y, 0.1 * y)


def _ref_forward(x_nchw, w1, w2, stride=1):
    y = _ref_block(x_nchw, w1, stride)
    return _ref_block(y, w2, 1)


if __name__ == "__main__":
    key = jax.random.PRNGKey(0)
    k_x, k_w1, k_w2 = jax.random.split(key, 3)

    N, Cin, H, W = 2, 4, 16, 16
    Cout = 8
    stride = 1

    x = jax.random.normal(k_x, (N, Cin, H, W), dtype=jnp.float32)

    # Conv2d weights in PyTorch OIHW layout, deterministic uniform init.
    bound1 = 1.0 / (Cin * 9) ** 0.5
    bound2 = 1.0 / (Cout * 9) ** 0.5
    w1 = jax.random.uniform(k_w1, (Cout, Cin, 3, 3), jnp.float32, -bound1, bound1)
    w2 = jax.random.uniform(k_w2, (Cout, Cout, 3, 3), jnp.float32, -bound2, bound2)

    ref = jax.block_until_ready(_ref_forward(x, w1, w2, stride))

    # 1) f32 matmul path: tight numerics check against the conv reference.
    out_f32 = jax.block_until_ready(
        conv_cell_forward(x, w1, w2, stride=stride, compute_dtype=jnp.float32))
    assert out_f32.shape == (N, Cout, H, W), out_f32.shape
    assert jnp.allclose(out_f32, ref, atol=1e-4, rtol=1e-4), float(
        jnp.max(jnp.abs(out_f32 - ref)))

    # 2) bf16 matmul path (default perf mode): reduced precision, loose check.
    out_bf16 = jax.block_until_ready(
        conv_cell_forward(x, w1, w2, stride=stride))
    assert out_bf16.shape == (N, Cout, H, W), out_bf16.shape
    assert jnp.allclose(out_bf16, ref, atol=1e-1, rtol=1e-1), float(
        jnp.max(jnp.abs(out_bf16 - ref)))

    print("KERNEL_OK")
</pallas_src>

<mosaic_0001>
module attributes {stable_mosaic.version = 11 : i64} {
  func.func @_conv_cell_kernel(%arg0: i32, %arg1: memref<1x4x16x16xf32, #tpu.memory_space<vmem>>, %arg2: memref<8x36xf32, #tpu.memory_space<vmem>>, %arg3: memref<8x72xf32, #tpu.memory_space<vmem>>, %arg4: memref<1x8x256xf32, #tpu.memory_space<vmem>>) attributes {dimension_semantics = [#tpu.dimension_semantics<parallel>], iteration_bounds = array<i64: 2>, scalar_prefetch = 0 : i64, scratch_operands = 0 : i64, tpu.core_type = #tpu.core_type<tc>, window_params = [{transform_indices = @transform_0, window_bounds = array<i64: 1, 4, 16, 16>}, {pipeline_mode = #tpu.pipeline_mode<synchronous>, transform_indices = @transform_1, window_bounds = array<i64: 8, 36>}, {pipeline_mode = #tpu.pipeline_mode<synchronous>, transform_indices = @transform_2, window_bounds = array<i64: 8, 72>}, {transform_indices = @transform_3, window_bounds = array<i64: 1, 8, 256>}]} {
    %c0 = arith.constant 0 : index
    %c0_0 = arith.constant 0 : index
    %c0_1 = arith.constant 0 : index
    %c0_2 = arith.constant 0 : index
    %0 = vector.load %arg1[%c0, %c0_0, %c0_1, %c0_2] : memref<1x4x16x16xf32, #tpu.memory_space<vmem>>, vector<1x4x16x16xf32>
    %1 = vector.shape_cast %0 : vector<1x4x16x16xf32> to vector<4x16x16xf32>
    %2 = vector.extract_strided_slice %1 {offsets = [0, 1, 0], sizes = [4, 1, 16], strides = [1, 1, 1]} : vector<4x16x16xf32> to vector<4x1x16xf32>
    %3 = vector.extract_strided_slice %1 {offsets = [0, 14, 0], sizes = [4, 1, 16], strides = [1, 1, 1]} : vector<4x16x16xf32> to vector<4x1x16xf32>
    %4 = tpu.concatenate %2, %1, %3 in 1 : vector<4x1x16xf32>, vector<4x16x16xf32>, vector<4x1x16xf32> -> vector<4x18x16xf32>
    %5 = vector.extract_strided_slice %4 {offsets = [0, 0, 1], sizes = [4, 18, 1], strides = [1, 1, 1]} : vector<4x18x16xf32> to vector<4x18x1xf32>
    %6 = vector.extract_strided_slice %4 {offsets = [0, 0, 14], sizes = [4, 18, 1], strides = [1, 1, 1]} : vector<4x18x16xf32> to vector<4x18x1xf32>
    %7 = tpu.concatenate %5, %4, %6 in 2 : vector<4x18x1xf32>, vector<4x18x16xf32>, vector<4x18x1xf32> -> vector<4x18x18xf32>
    %8 = vector.extract_strided_slice %7 {offsets = [0, 0, 0], sizes = [4, 16, 16], strides = [1, 1, 1]} : vector<4x18x18xf32> to vector<4x16x16xf32>
    %9 = vector.shape_cast %8 : vector<4x16x16xf32> to vector<4x256xf32>
    %10 = vector.extract_strided_slice %7 {offsets = [0, 0, 1], sizes = [4, 16, 16], strides = [1, 1, 1]} : vector<4x18x18xf32> to vector<4x16x16xf32>
    %11 = vector.shape_cast %10 : vector<4x16x16xf32> to vector<4x256xf32>
    %12 = vector.extract_strided_slice %7 {offsets = [0, 0, 2], sizes = [4, 16, 16], strides = [1, 1, 1]} : vector<4x18x18xf32> to vector<4x16x16xf32>
    %13 = vector.shape_cast %12 : vector<4x16x16xf32> to vector<4x256xf32>
    %14 = vector.extract_strided_slice %7 {offsets = [0, 1, 0], sizes = [4, 16, 16], strides = [1, 1, 1]} : vector<4x18x18xf32> to vector<4x16x16xf32>
    %15 = vector.shape_cast %14 : vector<4x16x16xf32> to vector<4x256xf32>
    %16 = vector.extract_strided_slice %7 {offsets = [0, 1, 1], sizes = [4, 16, 16], strides = [1, 1, 1]} : vector<4x18x18xf32> to vector<4x16x16xf32>
    %17 = vector.shape_cast %16 : vector<4x16x16xf32> to vector<4x256xf32>
    %18 = vector.extract_strided_slice %7 {offsets = [0, 1, 2], sizes = [4, 16, 16], strides = [1, 1, 1]} : vector<4x18x18xf32> to vector<4x16x16xf32>
    %19 = vector.shape_cast %18 : vector<4x16x16xf32> to vector<4x256xf32>
    %20 = vector.extract_strided_slice %7 {offsets = [0, 2, 0], sizes = [4, 16, 16], strides = [1, 1, 1]} : vector<4x18x18xf32> to vector<4x16x16xf32>
    %21 = vector.shape_cast %20 : vector<4x16x16xf32> to vector<4x256xf32>
    %22 = vector.extract_strided_slice %7 {offsets = [0, 2, 1], sizes = [4, 16, 16], strides = [1, 1, 1]} : vector<4x18x18xf32> to vector<4x16x16xf32>
    %23 = vector.shape_cast %22 : vector<4x16x16xf32> to vector<4x256xf32>
    %24 = vector.extract_strided_slice %7 {offsets = [0, 2, 2], sizes = [4, 16, 16], strides = [1, 1, 1]} : vector<4x18x18xf32> to vector<4x16x16xf32>
    %25 = vector.shape_cast %24 : vector<4x16x16xf32> to vector<4x256xf32>
    %26 = tpu.concatenate %9, %11, %13, %15, %17, %19, %21, %23, %25 in 0 : vector<4x256xf32>, vector<4x256xf32>, vector<4x256xf32>, vector<4x256xf32>, vector<4x256xf32>, vector<4x256xf32>, vector<4x256xf32>, vector<4x256xf32>, vector<4x256xf32> -> vector<36x256xf32>
    %c0_3 = arith.constant 0 : index
    %c0_4 = arith.constant 0 : index
    %27 = vector.load %arg2[%c0_3, %c0_4] : memref<8x36xf32, #tpu.memory_space<vmem>>, vector<8x36xf32>
    %cst = arith.constant dense<0.000000e+00> : vector<8x256xf32>
    %28 = tpu.matmul %27, %26, %cst {dimension_numbers = #tpu.dot_dimension_numbers<[1], [0], [0], [1], [0, 0, 1, 1], [], []>} : vector<8x36xf32>, vector<36x256xf32>, vector<8x256xf32> -> vector<8x256xf32>
    %cst_5 = arith.constant dense<0.000000e+00> : vector<8xf32>
    %29 = vector.multi_reduction <add>, %28, %cst_5 [1] : vector<8x256xf32> to vector<8xf32>
    %30 = vector.shape_cast %29 : vector<8xf32> to vector<8x1xf32>
    %cst_6 = arith.constant 2.560000e+02 : f32
    %31 = vector.broadcast %cst_6 : f32 to vector<8x1xf32>
    %32 = arith.divf %30, %31 : vector<8x1xf32>
    %33 = vector.broadcast %32 : vector<8x1xf32> to vector<8x256xf32>
    %34 = arith.subf %28, %33 : vector<8x256xf32>
    %35 = arith.mulf %34, %34 : vector<8x256xf32>
    %cst_7 = arith.constant dense<0.000000e+00> : vector<8xf32>
    %36 = vector.multi_reduction <add>, %35, %cst_7 [1] : vector<8x256xf32> to vector<8xf32>
    %37 = vector.shape_cast %36 : vector<8xf32> to vector<8x1xf32>
    %cst_8 = arith.constant 2.560000e+02 : f32
    %38 = vector.broadcast %cst_8 : f32 to vector<8x1xf32>
    %39 = arith.divf %37, %38 : vector<8x1xf32>
    %40 = vector.broadcast %32 : vector<8x1xf32> to vector<8x256xf32>
    %41 = arith.subf %28, %40 : vector<8x256xf32>
    %cst_9 = arith.constant 9.99999974E-6 : f32
    %42 = vector.broadcast %cst_9 : f32 to vector<8x1xf32>
    %43 = arith.addf %39, %42 : vector<8x1xf32>
    %44 = math.rsqrt %43 : vector<8x1xf32>
    %45 = vector.broadcast %44 : vector<8x1xf32> to vector<8x256xf32>
    %46 = arith.mulf %41, %45 : vector<8x256xf32>
    %cst_10 = arith.constant 0.000000e+00 : f32
    %47 = vector.broadcast %cst_10 : f32 to vector<8x256xf32>
    %48 = arith.cmpf ogt, %46, %47 : vector<8x256xf32>
    %cst_11 = arith.constant 1.000000e-01 : f32
    %49 = vector.broadcast %cst_11 : f32 to vector<8x256xf32>
    %50 = arith.mulf %49, %46 : vector<8x256xf32>
    %51 = arith.select %48, %46, %50 : vector<8x256xi1>, vector<8x256xf32>
    %52 = vector.shape_cast %51 : vector<8x256xf32> to vector<8x16x16xf32>
    %53 = vector.extract_strided_slice %52 {offsets = [0, 1, 0], sizes = [8, 1, 16], strides = [1, 1, 1]} : vector<8x16x16xf32> to vector<8x1x16xf32>
    %54 = vector.extract_strided_slice %52 {offsets = [0, 14, 0], sizes = [8, 1, 16], strides = [1, 1, 1]} : vector<8x16x16xf32> to vector<8x1x16xf32>
    %55 = tpu.concatenate %53, %52, %54 in 1 : vector<8x1x16xf32>, vector<8x16x16xf32>, vector<8x1x16xf32> -> vector<8x18x16xf32>
    %56 = vector.extract_strided_slice %55 {offsets = [0, 0, 1], sizes = [8, 18, 1], strides = [1, 1, 1]} : vector<8x18x16xf32> to vector<8x18x1xf32>
    %57 = vector.extract_strided_slice %55 {offsets = [0, 0, 14], sizes = [8, 18, 1], strides = [1, 1, 1]} : vector<8x18x16xf32> to vector<8x18x1xf32>
    %58 = tpu.concatenate %56, %55, %57 in 2 : vector<8x18x1xf32>, vector<8x18x16xf32>, vector<8x18x1xf32> -> vector<8x18x18xf32>
    %59 = vector.extract_strided_slice %58 {offsets = [0, 0, 0], sizes = [8, 16, 16], strides = [1, 1, 1]} : vector<8x18x18xf32> to vector<8x16x16xf32>
    %60 = vector.shape_cast %59 : vector<8x16x16xf32> to vector<8x256xf32>
    %61 = vector.extract_strided_slice %58 {offsets = [0, 0, 1], sizes = [8, 16, 16], strides = [1, 1, 1]} : vector<8x18x18xf32> to vector<8x16x16xf32>
    %62 = vector.shape_cast %61 : vector<8x16x16xf32> to vector<8x256xf32>
    %63 = vector.extract_strided_slice %58 {offsets = [0, 0, 2], sizes = [8, 16, 16], strides = [1, 1, 1]} : vector<8x18x18xf32> to vector<8x16x16xf32>
    %64 = vector.shape_cast %63 : vector<8x16x16xf32> to vector<8x256xf32>
    %65 = vector.extract_strided_slice %58 {offsets = [0, 1, 0], sizes = [8, 16, 16], strides = [1, 1, 1]} : vector<8x18x18xf32> to vector<8x16x16xf32>
    %66 = vector.shape_cast %65 : vector<8x16x16xf32> to vector<8x256xf32>
    %67 = vector.extract_strided_slice %58 {offsets = [0, 1, 1], sizes = [8, 16, 16], strides = [1, 1, 1]} : vector<8x18x18xf32> to vector<8x16x16xf32>
    %68 = vector.shape_cast %67 : vector<8x16x16xf32> to vector<8x256xf32>
    %69 = vector.extract_strided_slice %58 {offsets = [0, 1, 2], sizes = [8, 16, 16], strides = [1, 1, 1]} : vector<8x18x18xf32> to vector<8x16x16xf32>
    %70 = vector.shape_cast %69 : vector<8x16x16xf32> to vector<8x256xf32>
    %71 = vector.extract_strided_slice %58 {offsets = [0, 2, 0], sizes = [8, 16, 16], strides = [1, 1, 1]} : vector<8x18x18xf32> to vector<8x16x16xf32>
    %72 = vector.shape_cast %71 : vector<8x16x16xf32> to vector<8x256xf32>
    %73 = vector.extract_strided_slice %58 {offsets = [0, 2, 1], sizes = [8, 16, 16], strides = [1, 1, 1]} : vector<8x18x18xf32> to vector<8x16x16xf32>
    %74 = vector.shape_cast %73 : vector<8x16x16xf32> to vector<8x256xf32>
    %75 = vector.extract_strided_slice %58 {offsets = [0, 2, 2], sizes = [8, 16, 16], strides = [1, 1, 1]} : vector<8x18x18xf32> to vector<8x16x16xf32>
    %76 = vector.shape_cast %75 : vector<8x16x16xf32> to vector<8x256xf32>
    %77 = tpu.concatenate %60, %62, %64, %66, %68, %70, %72, %74, %76 in 0 : vector<8x256xf32>, vector<8x256xf32>, vector<8x256xf32>, vector<8x256xf32>, vector<8x256xf32>, vector<8x256xf32>, vector<8x256xf32>, vector<8x256xf32>, vector<8x256xf32> -> vector<72x256xf32>
    %c0_12 = arith.constant 0 : index
    %c0_13 = arith.constant 0 : index
    %78 = vector.load %arg3[%c0_12, %c0_13] : memref<8x72xf32, #tpu.memory_space<vmem>>, vector<8x72xf32>
    %cst_14 = arith.constant dense<0.000000e+00> : vector<8x256xf32>
    %79 = tpu.matmul %78, %77, %cst_14 {dimension_numbers = #tpu.dot_dimension_numbers<[1], [0], [0], [1], [0, 0, 1, 1], [], []>} : vector<8x72xf32>, vector<72x256xf32>, vector<8x256xf32> -> vector<8x256xf32>
    %cst_15 = arith.constant dense<0.000000e+00> : vector<8xf32>
    %80 = vector.multi_reduction <add>, %79, %cst_15 [1] : vector<8x256xf32> to vector<8xf32>
    %81 = vector.shape_cast %80 : vector<8xf32> to vector<8x1xf32>
    %cst_16 = arith.constant 2.560000e+02 : f32
    %82 = vector.broadcast %cst_16 : f32 to vector<8x1xf32>
    %83 = arith.divf %81, %82 : vector<8x1xf32>
    %84 = vector.broadcast %83 : vector<8x1xf32> to vector<8x256xf32>
    %85 = arith.subf %79, %84 : vector<8x256xf32>
    %86 = arith.mulf %85, %85 : vector<8x256xf32>
    %cst_17 = arith.constant dense<0.000000e+00> : vector<8xf32>
    %87 = vector.multi_reduction <add>, %86, %cst_17 [1] : vector<8x256xf32> to vector<8xf32>
    %88 = vector.shape_cast %87 : vector<8xf32> to vector<8x1xf32>
    %cst_18 = arith.constant 2.560000e+02 : f32
    %89 = vector.broadcast %cst_18 : f32 to vector<8x1xf32>
    %90 = arith.divf %88, %89 : vector<8x1xf32>
    %91 = vector.broadcast %83 : vector<8x1xf32> to vector<8x256xf32>
    %92 = arith.subf %79, %91 : vector<8x256xf32>
    %cst_19 = arith.constant 9.99999974E-6 : f32
    %93 = vector.broadcast %cst_19 : f32 to vector<8x1xf32>
    %94 = arith.addf %90, %93 : vector<8x1xf32>
    %95 = math.rsqrt %94 : vector<8x1xf32>
    %96 = vector.broadcast %95 : vector<8x1xf32> to vector<8x256xf32>
    %97 = arith.mulf %92, %96 : vector<8x256xf32>
    %cst_20 = arith.constant 0.000000e+00 : f32
    %98 = vector.broadcast %cst_20 : f32 to vector<8x256xf32>
    %99 = arith.cmpf ogt, %97, %98 : vector<8x256xf32>
    %cst_21 = arith.constant 1.000000e-01 : f32
    %100 = vector.broadcast %cst_21 : f32 to vector<8x256xf32>
    %101 = arith.mulf %100, %97 : vector<8x256xf32>
    %102 = arith.select %99, %97, %101 : vector<8x256xi1>, vector<8x256xf32>
    %c0_22 = arith.constant 0 : index
    %c0_23 = arith.constant 0 : index
    %c0_24 = arith.constant 0 : index
    %103 = vector.load %arg4[%c0_22, %c0_23, %c0_24] : memref<1x8x256xf32, #tpu.memory_space<vmem>>, vector<1x8x256xf32>
    %104 = vector.shape_cast %103 : vector<1x8x256xf32> to vector<8x256xf32>
    %105 = vector.shape_cast %102 : vector<8x256xf32> to vector<1x8x256xf32>
    tpu.vector_store %arg4[%c0_22, %c0_23, %c0_24], %105 {strides = array<i32>} : memref<1x8x256xf32, #tpu.memory_space<vmem>>, vector<1x8x256xf32>,
    return
  }
  func.func @transform_0(%arg0: i32) -> (i32, i32, i32, i32) {
    %c0_i32 = arith.constant 0 : i32
    %c0_i32_0 = arith.constant 0 : i32
    %c0_i32_1 = arith.constant 0 : i32
    %c0_i32_2 = arith.constant 0 : i32
    return %arg0, %c0_i32, %c0_i32_0, %c0_i32_1 : i32, i32, i32, i32
  }
  func.func @transform_1(%arg0: i32) -> (i32, i32) {
    %c0_i32 = arith.constant 0 : i32
    %c0_i32_0 = arith.constant 0 : i32
    %c0_i32_1 = arith.constant 0 : i32
    return %c0_i32, %c0_i32_0 : i32, i32
  }
  func.func @transform_2(%arg0: i32) -> (i32, i32) {
    %c0_i32 = arith.constant 0 : i32
    %c0_i32_0 = arith.constant 0 : i32
    %c0_i32_1 = arith.constant 0 : i32
    return %c0_i32, %c0_i32_0 : i32, i32
  }
  func.func @transform_3(%arg0: i32) -> (i32, i32, i32) {
    %c0_i32 = arith.constant 0 : i32
    %c0_i32_0 = arith.constant 0 : i32
    %c0_i32_1 = arith.constant 0 : i32
    return %arg0, %c0_i32, %c0_i32_0 : i32, i32, i32
  }
}

</mosaic_0001>

<llo_original>
// kernel: tpu_custom_call.1
$region0: #{tpu_custom_call.1}
  #allocation0 [shape = 'u32[]', space=smem, size = 0x4, offset = 0x4, fixed_abs, tag = 'smem constant byte address 0x4 - core index']
  #allocation1 [shape = 'u32[144,128]{1,0:T(1,128)}', space=vmem, size = 0x12000, scoped, tag = 'internal scratch']
  %s0 = inlined_call_operand.hbm [shape: f32[2,4,16,16], index: 0, kind: input, shape index: {}]
  %s1 = inlined_call_operand.hbm [shape: f32[8,36], index: 1, kind: input, shape index: {}]
  %s2 = inlined_call_operand.hbm [shape: f32[8,72], index: 2, kind: input, shape index: {}]
  %s3 = inlined_call_operand.hbm [shape: f32[2,8,256], index: 3, kind: output, shape index: {}]
  %s4 = sld [smem:[#allocation0]]
  $region57: #{tpu_custom_call.1} parent=0
    _
  %s6 = ssub.s32 1, %s4
  %s7 = scalar_select 0, %s6, %s4
  $region1: #{tpu_custom_call.1} parent=0
    #allocation2 [shape = 'u8[65536]{0}', space=vmem, size = 0x10000, scoped, tag = 'input window, operand 0']
    #allocation3 [shape = 's32[2]{0}', space=sflag, size = 0x8, scoped, tag = 'scoped memory for tpu_custom_call.1']
    #allocation4 [shape = 's32[2]{0}', space=sflag, size = 0x8, scoped, tag = 'scoped memory for tpu_custom_call.1']
    #allocation5 [shape = 'u8[4096]{0}', space=vmem, size = 0x1000, scoped, tag = 'input window, operand 1, single buffered']
    #allocation6 [shape = 's32[1]{0}', space=sflag, size = 0x4, scoped, tag = 'scoped memory for tpu_custom_call.1']
    #allocation7 [shape = 'u8[4096]{0}', space=vmem, size = 0x1000, scoped, tag = 'input window, operand 2, single buffered']
    #allocation8 [shape = 'u8[16384]{0}', space=vmem, size = 0x4000, scoped, tag = 'output window, operand 0']
    %8 = vsyncpa [#allocation3], 0
    %s9 = scalar_lea.sflag [#allocation3], 1
    %10 = vsyncpa %s9, 0
    %11 = vsyncpa [#allocation6], 0
    %12 = vsyncpa [#allocation4], 0
    %s13 = scalar_lea.sflag [#allocation4], 1
    %14 = vsyncpa %s13, 0
    loop: start=0, step=1, limit=4
    $region2: #{tpu_custom_call.1} parent=1 // loop_pre_header
      _
    $region3: #{tpu_custom_call.1} parent=1 // loop_header
      %s16 = sphi 0, %s20
      %p17 = scmp.ge.s32.totalorder %s16, 4
      %s26 = sphi 0, %s28
      %s29 = sphi 0, %s26
      %s30 = sphi 0, %s29
      %s46 = sphi 0, %s30
      %s50 = sphi 0, %s50
      %s52 = sphi 0, %s50
      %s53 = sphi 0, %s52
      %s67 = sphi 0, %s53
      %s71 = sphi 0, %s71
      %s73 = sphi 0, %s71
      %s74 = sphi 0, %s73
      %s88 = sphi 0, %s74
      %s94 = sphi 0, %s96
      %s97 = sphi 0, %s94
      %s98 = sphi 0, %s97
      %s114 = sphi 0, %s98
    $region4: #{tpu_custom_call.1} parent=1 // loop_header_branch
      %19 = sbr.rel (%p17) target = $region8
    $region5: #{tpu_custom_call.1} parent=1 // loop_body
      %s21 = ssub.s32 %s16, 1
      %s22 = ssub.s32 %s16, 2
      %s23 = sadd.s32 %s16, 1
      %s24 = ssub.s32 %s16, %s23
      %p25 = scmp.eq.s32.totalorder %s24, 0
      %s27 = sadd.s32 %s26, 1
      %s28 = scalar_select %p25, %s26, %s27
      %p31 = pneg %p25
      %p32 = scmp.eq.s32.totalorder %s16, 1
      %p33 = por %p31, %p32
      %p34 = scmp.ne.s32.totalorder %s26, %s29
      %p35 = scmp.eq.s32.totalorder %s16, 0
      %p36 = por %p34, %p35
      %p37 = scmp.ne.s32.totalorder %s26, %s29
      %p38 = scmp.eq.s32.totalorder %s21, 1
      %p39 = por %p37, %p38
      %p40 = scmp.ne.s32.totalorder %s29, %s30
      %p41 = scmp.eq.s32.totalorder %s21, 0
      %p42 = por %p40, %p41
      %p43 = scmp.ne.s32.totalorder %s29, %s30
      %p44 = scmp.eq.s32.totalorder %s22, 1
      %p45 = por %p43, %p44
      %p47 = scmp.ne.s32.totalorder %s30, %s46
      %p48 = scmp.eq.s32.totalorder %s22, 0
      %p49 = por %p47, %p48
      %s51 = sadd.s32 %s50, 1
      %p54 = scmp.eq.s32.totalorder %s16, 1
      %p55 = scmp.ne.s32.totalorder %s50, %s52
      %p56 = scmp.eq.s32.totalorder %s16, 0
      %p57 = por %p55, %p56
      %p58 = scmp.ne.s32.totalorder %s50, %s52
      %p59 = scmp.eq.s32.totalorder %s21, 1
      %p60 = por %p58, %p59
      %p61 = scmp.ne.s32.totalorder %s52, %s53
      %p62 = scmp.eq.s32.totalorder %s21, 0
      %p63 = por %p61, %p62
      %p64 = scmp.ne.s32.totalorder %s52, %s53
      %p65 = scmp.eq.s32.totalorder %s22, 1
      %p66 = por %p64, %p65
      %p68 = scmp.ne.s32.totalorder %s53, %s67
      %p69 = scmp.eq.s32.totalorder %s22, 0
      %p70 = por %p68, %p69
      %s72 = sadd.s32 %s71, 1
      %p75 = scmp.eq.s32.totalorder %s16, 1
      %p76 = scmp.ne.s32.totalorder %s71, %s73
      %p77 = scmp.eq.s32.totalorder %s16, 0
      %p78 = por %p76, %p77
      %p79 = scmp.ne.s32.totalorder %s71, %s73
      %p80 = scmp.eq.s32.totalorder %s21, 1
      %p81 = por %p79, %p80
      %p82 = scmp.ne.s32.totalorder %s73, %s74
      %p83 = scmp.eq.s32.totalorder %s21, 0
      %p84 = por %p82, %p83
      %p85 = scmp.ne.s32.totalorder %s73, %s74
      %p86 = scmp.eq.s32.totalorder %s22, 1
      %p87 = por %p85, %p86
      %p89 = scmp.ne.s32.totalorder %s74, %s88
      %p90 = scmp.eq.s32.totalorder %s22, 0
      %p91 = por %p89, %p90
      %s92 = ssub.s32 %s16, %s23
      %p93 = scmp.eq.s32.totalorder %s92, 0
      %s95 = sadd.s32 %s94, 1
      %s96 = scalar_select %p93, %s94, %s95
      %p99 = pneg %p93
      %p100 = scmp.eq.s32.totalorder %s16, 1
      %p101 = por %p99, %p100
      %p102 = scmp.ne.s32.totalorder %s94, %s97
      %p103 = scmp.eq.s32.totalorder %s16, 0
      %p104 = por %p102, %p103
      %p105 = scmp.ne.s32.totalorder %s94, %s97
      %p106 = scmp.eq.s32.totalorder %s21, 1
      %p107 = por %p105, %p106
      %p108 = scmp.ne.s32.totalorder %s97, %s98
      %p109 = scmp.eq.s32.totalorder %s21, 0
      %p110 = por %p108, %p109
      %p111 = scmp.ne.s32.totalorder %s97, %s98
      %p112 = scmp.eq.s32.totalorder %s22, 1
      %p113 = por %p111, %p112
      %p115 = scmp.ne.s32.totalorder %s98, %s114
      %p116 = scmp.eq.s32.totalorder %s22, 0
      %p117 = por %p115, %p116
      %p118 = scmp.le.s32.totalorder 1, %s16
      %p119 = scmp.lt.s32.totalorder %s16, 3
      %p120 = pnand %p118, %p119
      %p121 = pneg %p120
      // Predicated region
      $region9: #{tpu_custom_call.1} parent=5 // pred_check
        _
      $region10: #{tpu_custom_call.1} parent=5 // pred_check_branch
        %123 = sbr.rel (%p120) target = $region12
      $region11: #{tpu_custom_call.1} parent=5 // pred_region
        %s124 = ssub.s32 %s16, 1
        // Predicated region
        $region13: #{tpu_custom_call.1} parent=11 // pred_check
          %p125 = pneg %p63
        $region14: #{tpu_custom_call.1} parent=11 // pred_check_branch
          %127 = sbr.rel (%p125) target = $region16
        $region15: #{tpu_custom_call.1} parent=11 // pred_region
          %s129 = ssub.s32 128, 128
          %130 = vsyncadd [#allocation6], %s129
          %s132 = sshll.u32 [#allocation5], 4
          %s133 = int_to_ptr.vmem [resolvable:$true] %s132
          %135 = dma.hbm_to_vmem [thread:$0]  %s1, 128, %s133, [#allocation6]
        $region16: #{tpu_custom_call.1} parent=11 // pred_fallthru
          _
        // Predicated region
        $region17: #{tpu_custom_call.1} parent=11 // pred_check
          %p136 = pneg %p84
        $region18: #{tpu_custom_call.1} parent=11 // pred_check_branch
          %138 = sbr.rel (%p136) target = $region20
        $region19: #{tpu_custom_call.1} parent=11 // pred_region
          %s140 = ssub.s32 128, 128
          %141 = vsyncadd [#allocation6], %s140
          %s143 = sshll.u32 [#allocation7], 4
          %s144 = int_to_ptr.vmem [resolvable:$true] %s143
          %146 = dma.hbm_to_vmem [thread:$0]  %s2, 128, %s144, [#allocation6]
        $region20: #{tpu_custom_call.1} parent=11 // pred_fallthru
          _
      $region12: #{tpu_custom_call.1} parent=5 // pred_fallthru
        _
      %p147 = scmp.lt.s32.totalorder %s16, 2
      // Predicated region
      $region21: #{tpu_custom_call.1} parent=5 // pred_check
        %p148 = pneg %p147
      $region22: #{tpu_custom_call.1} parent=5 // pred_check_branch
        %150 = sbr.rel (%p148) target = $region24
      $region23: #{tpu_custom_call.1} parent=5 // pred_region
        // Predicated region
        $region25: #{tpu_custom_call.1} parent=23 // pred_check
          %p151 = pneg %p36
        $region26: #{tpu_custom_call.1} parent=23 // pred_check_branch
          %153 = sbr.rel (%p151) target = $region28
        $region27: #{tpu_custom_call.1} parent=23 // pred_region
          %s154 = sand.u32 %s26, 1
          %s155 = scalar_lea.sflag [#allocation3], %s154
          %s156 = sand.u32 %s26, 1
          %s157 = smul.addr %s156, 64
          %s158 = scalar_lea.vmem [#allocation2], %s157
          %s160 = ssub.s32 1024, 1024
          %161 = vsyncadd %s155, %s160
          %s162 = smul.addr %s16, 8
          %s163 = smul.addr %s162, 128
          %s164 = scalar_lea.hbm %s0, %s163
          %s165 = sshll.u32 %s158, 4
          %s166 = int_to_ptr.vmem [resolvable:$true] %s165
          %171 = dma.hbm_to_vmem [thread:$0]  %s164, 1024, %s166, %s155, 128, 128, 8
        $region28: #{tpu_custom_call.1} parent=23 // pred_fallthru
          _
      $region24: #{tpu_custom_call.1} parent=5 // pred_fallthru
        _
      %p172 = scmp.le.s32.totalorder 1, %s16
      %p173 = scmp.lt.s32.totalorder %s16, 3
      %p174 = pnand %p172, %p173
      %p175 = pneg %p174
      // Predicated region
      $region29: #{tpu_custom_call.1} parent=5 // pred_check
        _
      $region30: #{tpu_custom_call.1} parent=5 // pred_check_branch
        %177 = sbr.rel (%p174) target = $region32
      $region31: #{tpu_custom_call.1} parent=5 // pred_region
        %s178 = ssub.s32 %s16, 1
        %s179 = sand.u32 %s29, 1
        %s180 = scalar_lea.sflag [#allocation3], %s179
        %s181 = sand.u32 %s29, 1
        %s182 = smul.addr %s181, 64
        %s183 = scalar_lea.vmem [#allocation2], %s182
        // Predicated region
        $region33: #{tpu_custom_call.1} parent=31 // pred_check
          %p184 = pneg %p42
        $region34: #{tpu_custom_call.1} parent=31 // pred_check_branch
          %186 = sbr.rel (%p184) target = $region36
        $region35: #{tpu_custom_call.1} parent=31 // pred_region
          %187 = dma.done %s180, 1024
        $region36: #{tpu_custom_call.1} parent=31 // pred_fallthru
          _
        // Predicated region
        $region37: #{tpu_custom_call.1} parent=31 // pred_check
          %p188 = pneg %p63
        $region38: #{tpu_custom_call.1} parent=31 // pred_check_branch
          %190 = sbr.rel (%p188) target = $region40
        $region39: #{tpu_custom_call.1} parent=31 // pred_region
          %191 = dma.done [#allocation6], 128
        $region40: #{tpu_custom_call.1} parent=31 // pred_fallthru
          _
        // Predicated region
        $region41: #{tpu_custom_call.1} parent=31 // pred_check
          %p192 = pneg %p84
        $region42: #{tpu_custom_call.1} parent=31 // pred_check_branch
          %194 = sbr.rel (%p192) target = $region44
        $region43: #{tpu_custom_call.1} parent=31 // pred_region
          %195 = dma.done [#allocation6], 128
        $region44: #{tpu_custom_call.1} parent=31 // pred_fallthru
          _
        %s196 = sand.u32 %s29, 1
        %s197 = scalar_lea.sflag [#allocation3], %s196
        %s198 = sand.u32 %s29, 1
        %s199 = smul.addr %s198, 64
        %s200 = scalar_lea.vmem [#allocation2], %s199
        %p201 = pneg %p42
        %p202 = pneg %p39
        %p203 = pneg %p63
        %p204 = pneg %p60
        %p205 = pneg %p84
        %p206 = pneg %p81
        %p207 = pneg %p110
        %p208 = pneg %p107
        %s209 = sand.u32 %s97, 1
        %s210 = scalar_lea.sflag [#allocation4], %s209
        %s211 = sand.u32 %s97, 1
        %s212 = smul.addr %s211, 16
        %s213 = scalar_lea.vmem [#allocation8], %s212
        %v214 = vld [vmem:[%s183] sm:$0xff]
        %v215 = vld [vmem:[%s183 + $0x8] sm:$0xff]
        %v216 = vld [vmem:[%s183 + $0x10] sm:$0xff]
        %v217 = vld [vmem:[%s183 + $0x18] sm:$0xff]
        %v218 = vld [vmem:[%s183 + $0x20] sm:$0xff]
        %v219 = vld [vmem:[%s183 + $0x28] sm:$0xff]
        %v220 = vld [vmem:[%s183 + $0x30] sm:$0xff]
        %v221 = vld [vmem:[%s183 + $0x38] sm:$0xff]
        %v226 = vrot.slane %v214, 1
        %v227 = vrot.slane %v216, 1
        %v228 = vrot.slane %v218, 1
        %v229 = vrot.slane %v220, 1
        %vm238 = vcmask 1040384
        %v239 = vrot.slane %v214, 7
        %v240 = vrot.slane %v215, 7
        %v241 = vsel %vm238, %v239, %v240
        %v242 = vrot.slane %v216, 7
        %v243 = vrot.slane %v217, 7
        %v244 = vsel %vm238, %v242, %v243
        %v245 = vrot.slane %v218, 7
        %v246 = vrot.slane %v219, 7
        %v247 = vsel %vm238, %v245, %v246
        %v248 = vrot.slane %v220, 7
        %v249 = vrot.slane %v221, 7
        %v250 = vsel %vm238, %v248, %v249
        %v259 = vrot.slane %v215, 5
        %v260 = vrot.slane %v217, 5
        %v261 = vrot.slane %v219, 5
        %v262 = vrot.slane %v221, 5
        %v267 = vsel %vm238, %v226, %v239
        %v268 = vsel %vm238, %v227, %v242
        %v269 = vsel %vm238, %v228, %v245
        %v270 = vsel %vm238, %v229, %v248
        %v271 = vsel %vm238, %v240, %v259
        %v272 = vsel %vm238, %v243, %v260
        %v273 = vsel %vm238, %v246, %v261
        %v274 = vsel %vm238, %v249, %v262
        %283 = vrot.lane.b32.xlu0 %v267, 127
        %v284 = vpop.permute.xlu0 %283
        %285 = vrot.lane.b32.xlu0 %v241, 127
        %v286 = vpop.permute.xlu0 %285
        %287 = vrot.lane.b32.xlu0 %v271, 127
        %v288 = vpop.permute.xlu0 %287
        %289 = vrot.lane.b32.xlu0 %v268, 127
        %v290 = vpop.permute.xlu0 %289
        %291 = vrot.lane.b32.xlu0 %v244, 127
        %v292 = vpop.permute.xlu0 %291
        %293 = vrot.lane.b32.xlu0 %v272, 127
        %v294 = vpop.permute.xlu0 %293
        %295 = vrot.lane.b32.xlu0 %v269, 127
        %v296 = vpop.permute.xlu0 %295
        %297 = vrot.lane.b32.xlu0 %v247, 127
        %v298 = vpop.permute.xlu0 %297
        %299 = vrot.lane.b32.xlu0 %v273, 127
        %v300 = vpop.permute.xlu0 %299
        %301 = vrot.lane.b32.xlu0 %v270, 127
        %v302 = vpop.permute.xlu0 %301
        %303 = vrot.lane.b32.xlu0 %v250, 127
        %v304 = vpop.permute.xlu0 %303
        %305 = vrot.lane.b32.xlu0 %v274, 127
        %v306 = vpop.permute.xlu0 %305
        %319 = vrot.lane.b32.xlu0 %v267, 1
        %v320 = vpop.permute.xlu0 %319
        %321 = vrot.lane.b32.xlu0 %v241, 1
        %v322 = vpop.permute.xlu0 %321
        %323 = vrot.lane.b32.xlu0 %v271, 1
        %v324 = vpop.permute.xlu0 %323
        %325 = vrot.lane.b32.xlu0 %v268, 1
        %v326 = vpop.permute.xlu0 %325
        %327 = vrot.lane.b32.xlu0 %v244, 1
        %v328 = vpop.permute.xlu0 %327
        %329 = vrot.lane.b32.xlu0 %v272, 1
        %v330 = vpop.permute.xlu0 %329
        %331 = vrot.lane.b32.xlu0 %v269, 1
        %v332 = vpop.permute.xlu0 %331
        %333 = vrot.lane.b32.xlu0 %v247, 1
        %v334 = vpop.permute.xlu0 %333
        %335 = vrot.lane.b32.xlu0 %v273, 1
        %v336 = vpop.permute.xlu0 %335
        %337 = vrot.lane.b32.xlu0 %v270, 1
        %v338 = vpop.permute.xlu0 %337
        %339 = vrot.lane.b32.xlu0 %v250, 1
        %v340 = vpop.permute.xlu0 %339
        %341 = vrot.lane.b32.xlu0 %v274, 1
        %v342 = vpop.permute.xlu0 %341
        %355 = vrot.lane.b32.xlu0 %v267, 3
        %v356 = vpop.permute.xlu0 %355
        %357 = vrot.lane.b32.xlu0 %v241, 3
        %v358 = vpop.permute.xlu0 %357
        %359 = vrot.lane.b32.xlu0 %v271, 3
        %v360 = vpop.permute.xlu0 %359
        %361 = vrot.lane.b32.xlu0 %v268, 3
        %v362 = vpop.permute.xlu0 %361
        %363 = vrot.lane.b32.xlu0 %v244, 3
        %v364 = vpop.permute.xlu0 %363
        %365 = vrot.lane.b32.xlu0 %v272, 3
        %v366 = vpop.permute.xlu0 %365
        %367 = vrot.lane.b32.xlu0 %v269, 3
        %v368 = vpop.permute.xlu0 %367
        %369 = vrot.lane.b32.xlu0 %v247, 3
        %v370 = vpop.permute.xlu0 %369
        %371 = vrot.lane.b32.xlu0 %v273, 3
        %v372 = vpop.permute.xlu0 %371
        %373 = vrot.lane.b32.xlu0 %v270, 3
        %v374 = vpop.permute.xlu0 %373
        %375 = vrot.lane.b32.xlu0 %v250, 3
        %v376 = vpop.permute.xlu0 %375
        %377 = vrot.lane.b32.xlu0 %v274, 3
        %v378 = vpop.permute.xlu0 %377
        %vm391 = vcmask 7168
        %v392 = vsel %vm391, %v284, %v320
        %v393 = vsel %vm391, %v286, %v322
        %v394 = vsel %vm391, %v288, %v324
        %v395 = vsel %vm391, %v290, %v326
        %v396 = vsel %vm391, %v292, %v328
        %v397 = vsel %vm391, %v294, %v330
        %v398 = vsel %vm391, %v296, %v332
        %v399 = vsel %vm391, %v298, %v334
        %v400 = vsel %vm391, %v300, %v336
        %v401 = vsel %vm391, %v302, %v338
        %v402 = vsel %vm391, %v304, %v340
        %v403 = vsel %vm391, %v306, %v342
        %vm404 = vcmask 138240
        %v405 = vsel %vm404, %v392, %v356
        %v406 = vsel %vm404, %v393, %v358
        %v407 = vsel %vm404, %v394, %v360
        %v408 = vsel %vm404, %v395, %v362
        %v409 = vsel %vm404, %v396, %v364
        %v410 = vsel %vm404, %v397, %v366
        %v411 = vsel %vm404, %v398, %v368
        %v412 = vsel %vm404, %v399, %v370
        %v413 = vsel %vm404, %v400, %v372
        %v414 = vsel %vm404, %v401, %v374
        %v415 = vsel %vm404, %v402, %v376
        %v416 = vsel %vm404, %v403, %v378
        %v417 = vcombine.low %v405, %v411
        %v418 = vcombine.high %v405, %v411
        %v420 = vunpack.c.l.s4 1983009808
        %v421 = vunpack.c.0.s8 %v420
        %v422 = vlaneseq
        %v423 = vshrl.u32 %v422, 7
        %v424 = vsub.s32 %v421, %v423
        %v425 = vrot.slane %v417, %v424
        %v427 = vunpack.c.l.s4 1983009808
        %v428 = vunpack.c.0.s8 %v427
        %v429 = vlaneseq
        %v430 = vshrl.u32 %v429, 7
        %v431 = vsub.s32 %v428, %v430
        %v432 = vrot.slane %v418, %v431
        %v433 = vcombine.low %v408, %v414
        %v434 = vcombine.high %v408, %v414
        %v436 = vunpack.c.l.s4 1983009808
        %v437 = vunpack.c.0.s8 %v436
        %v438 = vlaneseq
        %v439 = vshrl.u32 %v438, 7
        %v440 = vsub.s32 %v437, %v439
        %v441 = vrot.slane %v433, %v440
        %v443 = vunpack.c.l.s4 1983009808
        %v444 = vunpack.c.0.s8 %v443
        %v445 = vlaneseq
        %v446 = vshrl.u32 %v445, 7
        %v447 = vsub.s32 %v444, %v446
        %v448 = vrot.slane %v434, %v447
        %v449 = vcombine.low %v425, %v441
        %v450 = vcombine.high %v425, %v441
        %v452 = vunpack.c.l.s4 1934713408
        %v453 = vunpack.c.0.s8 %v452
        %v454 = vlaneseq
        %v455 = vshrl.u32 %v454, 7
        %v456 = vsub.s32 %v453, %v455
        %v457 = vrot.slane %v449, %v456
        %v459 = vunpack.c.l.s4 1934713408
        %v460 = vunpack.c.0.s8 %v459
        %v461 = vlaneseq
        %v462 = vshrl.u32 %v461, 7
        %v463 = vsub.s32 %v460, %v462
        %v464 = vrot.slane %v450, %v463
        %v465 = vcombine.low %v432, %v448
        %v466 = vcombine.high %v432, %v448
        %v468 = vunpack.c.l.s4 1934713408
        %v469 = vunpack.c.0.s8 %v468
        %v470 = vlaneseq
        %v471 = vshrl.u32 %v470, 7
        %v472 = vsub.s32 %v469, %v471
        %v473 = vrot.slane %v465, %v472
        %v475 = vunpack.c.l.s4 1934713408
        %v476 = vunpack.c.0.s8 %v475
        %v477 = vlaneseq
        %v478 = vshrl.u32 %v477, 7
        %v479 = vsub.s32 %v476, %v478
        %v480 = vrot.slane %v466, %v479
        %v481 = vcombine.high %v457, 0.0
        %v482 = vcombine.high %v464, 0.0
        %v483 = vcombine.high %v473, 0.0
        %v484 = vcombine.high %v480, 0.0
        %v485 = vcombine.low %v406, %v412
        %v486 = vcombine.high %v406, %v412
        %v488 = vunpack.c.l.s4 1983009808
        %v489 = vunpack.c.0.s8 %v488
        %v490 = vlaneseq
        %v491 = vshrl.u32 %v490, 7
        %v492 = vsub.s32 %v489, %v491
        %v493 = vrot.slane %v485, %v492
        %v495 = vunpack.c.l.s4 1983009808
        %v496 = vunpack.c.0.s8 %v495
        %v497 = vlaneseq
        %v498 = vshrl.u32 %v497, 7
        %v499 = vsub.s32 %v496, %v498
        %v500 = vrot.slane %v486, %v499
        %v501 = vcombine.low %v409, %v415
        %v502 = vcombine.high %v409, %v415
        %v504 = vunpack.c.l.s4 1983009808
        %v505 = vunpack.c.0.s8 %v504
        %v506 = vlaneseq
        %v507 = vshrl.u32 %v506, 7
        %v508 = vsub.s32 %v505, %v507
        %v509 = vrot.slane %v501, %v508
        %v511 = vunpack.c.l.s4 1983009808
        %v512 = vunpack.c.0.s8 %v511
        %v513 = vlaneseq
        %v514 = vshrl.u32 %v513, 7
        %v515 = vsub.s32 %v512, %v514
        %v516 = vrot.slane %v502, %v515
        %v517 = vcombine.low %v493, %v509
        %v518 = vcombine.high %v493, %v509
        %v520 = vunpack.c.l.s4 1934713408
        %v521 = vunpack.c.0.s8 %v520
        %v522 = vlaneseq
        %v523 = vshrl.u32 %v522, 7
        %v524 = vsub.s32 %v521, %v523
        %v525 = vrot.slane %v517, %v524
        %v527 = vunpack.c.l.s4 1934713408
        %v528 = vunpack.c.0.s8 %v527
        %v529 = vlaneseq
        %v530 = vshrl.u32 %v529, 7
        %v531 = vsub.s32 %v528, %v530
        %v532 = vrot.slane %v518, %v531
        %v533 = vcombine.low %v500, %v516
        %v534 = vcombine.high %v500, %v516
        %v536 = vunpack.c.l.s4 1934713408
        %v537 = vunpack.c.0.s8 %v536
        %v538 = vlaneseq
        %v539 = vshrl.u32 %v538, 7
        %v540 = vsub.s32 %v537, %v539
        %v541 = vrot.slane %v533, %v540
        %v543 = vunpack.c.l.s4 1934713408
        %v544 = vunpack.c.0.s8 %v543
        %v545 = vlaneseq
        %v546 = vshrl.u32 %v545, 7
        %v547 = vsub.s32 %v544, %v546
        %v548 = vrot.slane %v534, %v547
        %v549 = vcombine.high %v525, 0.0
        %v550 = vcombine.high %v532, 0.0
        %v551 = vcombine.high %v541, 0.0
        %v552 = vcombine.high %v548, 0.0
        %554 = vrot.lane.b32.xlu0 %v481, 16
        %v555 = vpop.permute.xlu0 %554
        %558 = vrot.lane.b32.xlu0 %v464, 32
        %v559 = vpop.permute.xlu0 %558
        %562 = vrot.lane.b32.xlu0 %v482, 48
        %v563 = vpop.permute.xlu0 %562
        %566 = vrot.lane.b32.xlu0 %v473, 64
        %v567 = vpop.permute.xlu0 %566
        %570 = vrot.lane.b32.xlu0 %v483, 80
        %v571 = vpop.permute.xlu0 %570
        %574 = vrot.lane.b32.xlu0 %v480, 96
        %v575 = vpop.permute.xlu0 %574
        %578 = vrot.lane.b32.xlu0 %v484, 112
        %v579 = vpop.permute.xlu0 %578
        %582 = vrot.lane.b32.xlu0 %v549, 16
        %v583 = vpop.permute.xlu0 %582
        %586 = vrot.lane.b32.xlu0 %v532, 32
        %v587 = vpop.permute.xlu0 %586
        %590 = vrot.lane.b32.xlu0 %v550, 48
        %v591 = vpop.permute.xlu0 %590
        %594 = vrot.lane.b32.xlu0 %v541, 64
        %v595 = vpop.permute.xlu0 %594
        %598 = vrot.lane.b32.xlu0 %v551, 80
        %v599 = vpop.permute.xlu0 %598
        %602 = vrot.lane.b32.xlu0 %v548, 96
        %v603 = vpop.permute.xlu0 %602
        %606 = vrot.lane.b32.xlu0 %v552, 112
        %v607 = vpop.permute.xlu0 %606
        %vm609 = vcmask 130048
        %v610 = vsel %vm609, %v457, %v555
        %vm611 = vcmask 261120
        %v612 = vsel %vm611, %v610, %v559
        %vm613 = vcmask 392192
        %v614 = vsel %vm613, %v612, %v563
        %vm615 = vcmask 523264
        %v616 = vsel %vm615, %v614, %v567
        %vm617 = vcmask 654336
        %v618 = vsel %vm617, %v616, %v571
        %vm619 = vcmask 785408
        %v620 = vsel %vm619, %v618, %v575
        %vm621 = vcmask 916480
        %v622 = vsel %vm621, %v620, %v579
        %v623 = vsel %vm609, %v525, %v583
        %v624 = vsel %vm611, %v623, %v587
        %v625 = vsel %vm613, %v624, %v591
        %v626 = vsel %vm615, %v625, %v595
        %v627 = vsel %vm617, %v626, %v599
        %v628 = vsel %vm619, %v627, %v603
        %v629 = vsel %vm621, %v628, %v607
        %638 = vrot.lane.b32.xlu0 %v405, 127
        %v639 = vpop.permute.xlu0 %638
        %640 = vrot.lane.b32.xlu0 %v406, 127
        %v641 = vpop.permute.xlu0 %640
        %642 = vrot.lane.b32.xlu0 %v408, 127
        %v643 = vpop.permute.xlu0 %642
        %644 = vrot.lane.b32.xlu0 %v409, 127
        %v645 = vpop.permute.xlu0 %644
        %646 = vrot.lane.b32.xlu0 %v411, 127
        %v647 = vpop.permute.xlu0 %646
        %648 = vrot.lane.b32.xlu0 %v412, 127
        %v649 = vpop.permute.xlu0 %648
        %650 = vrot.lane.b32.xlu0 %v414, 127
        %v651 = vpop.permute.xlu0 %650
        %652 = vrot.lane.b32.xlu0 %v415, 127
        %v653 = vpop.permute.xlu0 %652
        %v662 = vcombine.low %v639, %v647
        %v663 = vcombine.high %v639, %v647
        %v665 = vunpack.c.l.s4 1983009808
        %v666 = vunpack.c.0.s8 %v665
        %v667 = vlaneseq
        %v668 = vshrl.u32 %v667, 7
        %v669 = vsub.s32 %v666, %v668
        %v670 = vrot.slane %v662, %v669
        %v672 = vunpack.c.l.s4 1983009808
        %v673 = vunpack.c.0.s8 %v672
        %v674 = vlaneseq
        %v675 = vshrl.u32 %v674, 7
        %v676 = vsub.s32 %v673, %v675
        %v677 = vrot.slane %v663, %v676
        %v678 = vcombine.low %v643, %v651
        %v679 = vcombine.high %v643, %v651
        %v681 = vunpack.c.l.s4 1983009808
        %v682 = vunpack.c.0.s8 %v681
        %v683 = vlaneseq
        %v684 = vshrl.u32 %v683, 7
        %v685 = vsub.s32 %v682, %v684
        %v686 = vrot.slane %v678, %v685
        %v688 = vunpack.c.l.s4 1983009808
        %v689 = vunpack.c.0.s8 %v688
        %v690 = vlaneseq
        %v691 = vshrl.u32 %v690, 7
        %v692 = vsub.s32 %v689, %v691
        %v693 = vrot.slane %v679, %v692
        %v694 = vcombine.low %v670, %v686
        %v695 = vcombine.high %v670, %v686
        %v697 = vunpack.c.l.s4 1934713408
        %v698 = vunpack.c.0.s8 %v697
        %v699 = vlaneseq
        %v700 = vshrl.u32 %v699, 7
        %v701 = vsub.s32 %v698, %v700
        %v702 = vrot.slane %v694, %v701
        %v704 = vunpack.c.l.s4 1934713408
        %v705 = vunpack.c.0.s8 %v704
        %v706 = vlaneseq
        %v707 = vshrl.u32 %v706, 7
        %v708 = vsub.s32 %v705, %v707
        %v709 = vrot.slane %v695, %v708
        %v710 = vcombine.low %v677, %v693
        %v711 = vcombine.high %v677, %v693
        %v713 = vunpack.c.l.s4 1934713408
        %v714 = vunpack.c.0.s8 %v713
        %v715 = vlaneseq
        %v716 = vshrl.u32 %v715, 7
        %v717 = vsub.s32 %v714, %v716
        %v718 = vrot.slane %v710, %v717
        %v720 = vunpack.c.l.s4 1934713408
        %v721 = vunpack.c.0.s8 %v720
        %v722 = vlaneseq
        %v723 = vshrl.u32 %v722, 7
        %v724 = vsub.s32 %v721, %v723
        %v725 = vrot.slane %v711, %v724
        %v726 = vcombine.high %v702, 0.0
        %v727 = vcombine.high %v709, 0.0
        %v728 = vcombine.high %v718, 0.0
        %v729 = vcombine.high %v725, 0.0
        %v730 = vcombine.low %v641, %v649
        %v731 = vcombine.high %v641, %v649
        %v733 = vunpack.c.l.s4 1983009808
        %v734 = vunpack.c.0.s8 %v733
        %v735 = vlaneseq
        %v736 = vshrl.u32 %v735, 7
        %v737 = vsub.s32 %v734, %v736
        %v738 = vrot.slane %v730, %v737
        %v740 = vunpack.c.l.s4 1983009808
        %v741 = vunpack.c.0.s8 %v740
        %v742 = vlaneseq
        %v743 = vshrl.u32 %v742, 7
        %v744 = vsub.s32 %v741, %v743
        %v745 = vrot.slane %v731, %v744
        %v746 = vcombine.low %v645, %v653
        %v747 = vcombine.high %v645, %v653
        %v749 = vunpack.c.l.s4 1983009808
        %v750 = vunpack.c.0.s8 %v749
        %v751 = vlaneseq
        %v752 = vshrl.u32 %v751, 7
        %v753 = vsub.s32 %v750, %v752
        %v754 = vrot.slane %v746, %v753
        %v756 = vunpack.c.l.s4 1983009808
        %v757 = vunpack.c.0.s8 %v756
        %v758 = vlaneseq
        %v759 = vshrl.u32 %v758, 7
        %v760 = vsub.s32 %v757, %v759
        %v761 = vrot.slane %v747, %v760
        %v762 = vcombine.low %v738, %v754
        %v763 = vcombine.high %v738, %v754
        %v765 = vunpack.c.l.s4 1934713408
        %v766 = vunpack.c.0.s8 %v765
        %v767 = vlaneseq
        %v768 = vshrl.u32 %v767, 7
        %v769 = vsub.s32 %v766, %v768
        %v770 = vrot.slane %v762, %v769
        %v772 = vunpack.c.l.s4 1934713408
        %v773 = vunpack.c.0.s8 %v772
        %v774 = vlaneseq
        %v775 = vshrl.u32 %v774, 7
        %v776 = vsub.s32 %v773, %v775
        %v777 = vrot.slane %v763, %v776
        %v778 = vcombine.low %v745, %v761
        %v779 = vcombine.high %v745, %v761
        %v781 = vunpack.c.l.s4 1934713408
        %v782 = vunpack.c.0.s8 %v781
        %v783 = vlaneseq
        %v784 = vshrl.u32 %v783, 7
        %v785 = vsub.s32 %v782, %v784
        %v786 = vrot.slane %v778, %v785
        %v788 = vunpack.c.l.s4 1934713408
        %v789 = vunpack.c.0.s8 %v788
        %v790 = vlaneseq
        %v791 = vshrl.u32 %v790, 7
        %v792 = vsub.s32 %v789, %v791
        %v793 = vrot.slane %v779, %v792
        %v794 = vcombine.high %v770, 0.0
        %v795 = vcombine.high %v777, 0.0
        %v796 = vcombine.high %v786, 0.0
        %v797 = vcombine.high %v793, 0.0
        %799 = vrot.lane.b32.xlu0 %v726, 16
        %v800 = vpop.permute.xlu0 %799
        %803 = vrot.lane.b32.xlu0 %v709, 32
        %v804 = vpop.permute.xlu0 %803
        %807 = vrot.lane.b32.xlu0 %v727, 48
        %v808 = vpop.permute.xlu0 %807
        %811 = vrot.lane.b32.xlu0 %v718, 64
        %v812 = vpop.permute.xlu0 %811
        %815 = vrot.lane.b32.xlu0 %v728, 80
        %v816 = vpop.permute.xlu0 %815
        %819 = vrot.lane.b32.xlu0 %v725, 96
        %v820 = vpop.permute.xlu0 %819
        %823 = vrot.lane.b32.xlu0 %v729, 112
        %v824 = vpop.permute.xlu0 %823
        %827 = vrot.lane.b32.xlu0 %v794, 16
        %v828 = vpop.permute.xlu0 %827
        %831 = vrot.lane.b32.xlu0 %v777, 32
        %v832 = vpop.permute.xlu0 %831
        %835 = vrot.lane.b32.xlu0 %v795, 48
        %v836 = vpop.permute.xlu0 %835
        %839 = vrot.lane.b32.xlu0 %v786, 64
        %v840 = vpop.permute.xlu0 %839
        %843 = vrot.lane.b32.xlu0 %v796, 80
        %v844 = vpop.permute.xlu0 %843
        %847 = vrot.lane.b32.xlu0 %v793, 96
        %v848 = vpop.permute.xlu0 %847
        %851 = vrot.lane.b32.xlu0 %v797, 112
        %v852 = vpop.permute.xlu0 %851
        %v854 = vsel %vm609, %v702, %v800
        %v855 = vsel %vm611, %v854, %v804
        %v856 = vsel %vm613, %v855, %v808
        %v857 = vsel %vm615, %v856, %v812
        %v858 = vsel %vm617, %v857, %v816
        %v859 = vsel %vm619, %v858, %v820
        %v860 = vsel %vm621, %v859, %v824
        %v861 = vsel %vm609, %v770, %v828
        %v862 = vsel %vm611, %v861, %v832
        %v863 = vsel %vm613, %v862, %v836
        %v864 = vsel %vm615, %v863, %v840
        %v865 = vsel %vm617, %v864, %v844
        %v866 = vsel %vm619, %v865, %v848
        %v867 = vsel %vm621, %v866, %v852
        %868 = vrot.lane.b32.xlu0 %v405, 126
        %v869 = vpop.permute.xlu0 %868
        %870 = vrot.lane.b32.xlu0 %v406, 126
        %v871 = vpop.permute.xlu0 %870
        %872 = vrot.lane.b32.xlu0 %v408, 126
        %v873 = vpop.permute.xlu0 %872
        %874 = vrot.lane.b32.xlu0 %v409, 126
        %v875 = vpop.permute.xlu0 %874
        %876 = vrot.lane.b32.xlu0 %v411, 126
        %v877 = vpop.permute.xlu0 %876
        %878 = vrot.lane.b32.xlu0 %v412, 126
        %v879 = vpop.permute.xlu0 %878
        %880 = vrot.lane.b32.xlu0 %v414, 126
        %v881 = vpop.permute.xlu0 %880
        %882 = vrot.lane.b32.xlu0 %v415, 126
        %v883 = vpop.permute.xlu0 %882
        %v892 = vcombine.low %v869, %v877
        %v893 = vcombine.high %v869, %v877
        %v895 = vunpack.c.l.s4 1983009808
        %v896 = vunpack.c.0.s8 %v895
        %v897 = vlaneseq
        %v898 = vshrl.u32 %v897, 7
        %v899 = vsub.s32 %v896, %v898
        %v900 = vrot.slane %v892, %v899
        %v902 = vunpack.c.l.s4 1983009808
        %v903 = vunpack.c.0.s8 %v902
        %v904 = vlaneseq
        %v905 = vshrl.u32 %v904, 7
        %v906 = vsub.s32 %v903, %v905
        %v907 = vrot.slane %v893, %v906
        %v908 = vcombine.low %v873, %v881
        %v909 = vcombine.high %v873, %v881
        %v911 = vunpack.c.l.s4 1983009808
        %v912 = vunpack.c.0.s8 %v911
        %v913 = vlaneseq
        %v914 = vshrl.u32 %v913, 7
        %v915 = vsub.s32 %v912, %v914
        %v916 = vrot.slane %v908, %v915
        %v918 = vunpack.c.l.s4 1983009808
        %v919 = vunpack.c.0.s8 %v918
        %v920 = vlaneseq
        %v921 = vshrl.u32 %v920, 7
        %v922 = vsub.s32 %v919, %v921
        %v923 = vrot.slane %v909, %v922
        %v924 = vcombine.low %v900, %v916
        %v925 = vcombine.high %v900, %v916
        %v927 = vunpack.c.l.s4 1934713408
        %v928 = vunpack.c.0.s8 %v927
        %v929 = vlaneseq
        %v930 = vshrl.u32 %v929, 7
        %v931 = vsub.s32 %v928, %v930
        %v932 = vrot.slane %v924, %v931
        %v934 = vunpack.c.l.s4 1934713408
        %v935 = vunpack.c.0.s8 %v934
        %v936 = vlaneseq
        %v937 = vshrl.u32 %v936, 7
        %v938 = vsub.s32 %v935, %v937
        %v939 = vrot.slane %v925, %v938
        %v940 = vcombine.low %v907, %v923
        %v941 = vcombine.high %v907, %v923
        %v943 = vunpack.c.l.s4 1934713408
        %v944 = vunpack.c.0.s8 %v943
        %v945 = vlaneseq
        %v946 = vshrl.u32 %v945, 7
        %v947 = vsub.s32 %v944, %v946
        %v948 = vrot.slane %v940, %v947
        %v950 = vunpack.c.l.s4 1934713408
        %v951 = vunpack.c.0.s8 %v950
        %v952 = vlaneseq
        %v953 = vshrl.u32 %v952, 7
        %v954 = vsub.s32 %v951, %v953
        %v955 = vrot.slane %v941, %v954
        %v956 = vcombine.high %v932, 0.0
        %v957 = vcombine.high %v939, 0.0
        %v958 = vcombine.high %v948, 0.0
        %v959 = vcombine.high %v955, 0.0
        %v960 = vcombine.low %v871, %v879
        %v961 = vcombine.high %v871, %v879
        %v963 = vunpack.c.l.s4 1983009808
        %v964 = vunpack.c.0.s8 %v963
        %v965 = vlaneseq
        %v966 = vshrl.u32 %v965, 7
        %v967 = vsub.s32 %v964, %v966
        %v968 = vrot.slane %v960, %v967
        %v970 = vunpack.c.l.s4 1983009808
        %v971 = vunpack.c.0.s8 %v970
        %v972 = vlaneseq
        %v973 = vshrl.u32 %v972, 7
        %v974 = vsub.s32 %v971, %v973
        %v975 = vrot.slane %v961, %v974
        %v976 = vcombine.low %v875, %v883
        %v977 = vcombine.high %v875, %v883
        %v979 = vunpack.c.l.s4 1983009808
        %v980 = vunpack.c.0.s8 %v979
        %v981 = vlaneseq
        %v982 = vshrl.u32 %v981, 7
        %v983 = vsub.s32 %v980, %v982
        %v984 = vrot.slane %v976, %v983
        %v986 = vunpack.c.l.s4 1983009808
        %v987 = vunpack.c.0.s8 %v986
        %v988 = vlaneseq
        %v989 = vshrl.u32 %v988, 7
        %v990 = vsub.s32 %v987, %v989
        %v991 = vrot.slane %v977, %v990
        %v992 = vcombine.low %v968, %v984
        %v993 = vcombine.high %v968, %v984
        %v995 = vunpack.c.l.s4 1934713408
        %v996 = vunpack.c.0.s8 %v995
        %v997 = vlaneseq
        %v998 = vshrl.u32 %v997, 7
        %v999 = vsub.s32 %v996, %v998
        %v1000 = vrot.slane %v992, %v999
        %v1002 = vunpack.c.l.s4 1934713408
        %v1003 = vunpack.c.0.s8 %v1002
        %v1004 = vlaneseq
        %v1005 = vshrl.u32 %v1004, 7
        %v1006 = vsub.s32 %v1003, %v1005
        %v1007 = vrot.slane %v993, %v1006
        %v1008 = vcombine.low %v975, %v991
        %v1009 = vcombine.high %v975, %v991
        %v1011 = vunpack.c.l.s4 1934713408
        %v1012 = vunpack.c.0.s8 %v1011
        %v1013 = vlaneseq
        %v1014 = vshrl.u32 %v1013, 7
        %v1015 = vsub.s32 %v1012, %v1014
        %v1016 = vrot.slane %v1008, %v1015
        %v1018 = vunpack.c.l.s4 1934713408
        %v1019 = vunpack.c.0.s8 %v1018
        %v1020 = vlaneseq
        %v1021 = vshrl.u32 %v1020, 7
        %v1022 = vsub.s32 %v1019, %v1021
        %v1023 = vrot.slane %v1009, %v1022
        %v1024 = vcombine.high %v1000, 0.0
        %v1025 = vcombine.high %v1007, 0.0
        %v1026 = vcombine.high %v1016, 0.0
        %v1027 = vcombine.high %v1023, 0.0
        %1029 = vrot.lane.b32.xlu0 %v956, 16
        %v1030 = vpop.permute.xlu0 %1029
        %1033 = vrot.lane.b32.xlu0 %v939, 32
        %v1034 = vpop.permute.xlu0 %1033
        %1037 = vrot.lane.b32.xlu0 %v957, 48
        %v1038 = vpop.permute.xlu0 %1037
        %1041 = vrot.lane.b32.xlu0 %v948, 64
        %v1042 = vpop.permute.xlu0 %1041
        %1045 = vrot.lane.b32.xlu0 %v958, 80
        %v1046 = vpop.permute.xlu0 %1045
        %1049 = vrot.lane.b32.xlu0 %v955, 96
        %v1050 = vpop.permute.xlu0 %1049
        %1053 = vrot.lane.b32.xlu0 %v959, 112
        %v1054 = vpop.permute.xlu0 %1053
        %1057 = vrot.lane.b32.xlu0 %v1024, 16
        %v1058 = vpop.permute.xlu0 %1057
        %1061 = vrot.lane.b32.xlu0 %v1007, 32
        %v1062 = vpop.permute.xlu0 %1061
        %1065 = vrot.lane.b32.xlu0 %v1025, 48
        %v1066 = vpop.permute.xlu0 %1065
        %1069 = vrot.lane.b32.xlu0 %v1016, 64
        %v1070 = vpop.permute.xlu0 %1069
        %1073 = vrot.lane.b32.xlu0 %v1026, 80
        %v1074 = vpop.permute.xlu0 %1073
        %1077 = vrot.lane.b32.xlu0 %v1023, 96
        %v1078 = vpop.permute.xlu0 %1077
        %1081 = vrot.lane.b32.xlu0 %v1027, 112
        %v1082 = vpop.permute.xlu0 %1081
        %v1084 = vsel %vm609, %v932, %v1030
        %v1085 = vsel %vm611, %v1084, %v1034
        %v1086 = vsel %vm613, %v1085, %v1038
        %v1087 = vsel %vm615, %v1086, %v1042
        %v1088 = vsel %vm617, %v1087, %v1046
        %v1089 = vsel %vm619, %v1088, %v1050
        %v1090 = vsel %vm621, %v1089, %v1054
        %v1091 = vsel %vm609, %v1000, %v1058
        %v1092 = vsel %vm611, %v1091, %v1062
        %v1093 = vsel %vm613, %v1092, %v1066
        %v1094 = vsel %vm615, %v1093, %v1070
        %v1095 = vsel %vm617, %v1094, %v1074
        %v1096 = vsel %vm619, %v1095, %v1078
        %v1097 = vsel %vm621, %v1096, %v1082
        %vm1102 = vcmask 1046528
        %v1103 = vrot.slane %v405, 1
        %v1104 = vrot.slane %v406, 1
        %v1105 = vsel %vm1102, %v1103, %v1104
        %v1106 = vrot.slane %v407, 1
        %v1107 = vsel %vm1102, %v1104, %v1106
        %v1108 = vrot.slane %v408, 1
        %v1109 = vrot.slane %v409, 1
        %v1110 = vsel %vm1102, %v1108, %v1109
        %v1111 = vrot.slane %v410, 1
        %v1112 = vsel %vm1102, %v1109, %v1111
        %v1113 = vrot.slane %v411, 1
        %v1114 = vrot.slane %v412, 1
        %v1115 = vsel %vm1102, %v1113, %v1114
        %v1116 = vrot.slane %v413, 1
        %v1117 = vsel %vm1102, %v1114, %v1116
        %v1118 = vrot.slane %v414, 1
        %v1119 = vrot.slane %v415, 1
        %v1120 = vsel %vm1102, %v1118, %v1119
        %v1121 = vrot.slane %v416, 1
        %v1122 = vsel %vm1102, %v1119, %v1121
        %v1131 = vcombine.low %v1105, %v1115
        %v1132 = vcombine.high %v1105, %v1115
        %v1134 = vunpack.c.l.s4 1983009808
        %v1135 = vunpack.c.0.s8 %v1134
        %v1136 = vlaneseq
        %v1137 = vshrl.u32 %v1136, 7
        %v1138 = vsub.s32 %v1135, %v1137
        %v1139 = vrot.slane %v1131, %v1138
        %v1141 = vunpack.c.l.s4 1983009808
        %v1142 = vunpack.c.0.s8 %v1141
        %v1143 = vlaneseq
        %v1144 = vshrl.u32 %v1143, 7
        %v1145 = vsub.s32 %v1142, %v1144
        %v1146 = vrot.slane %v1132, %v1145
        %v1147 = vcombine.low %v1110, %v1120
        %v1148 = vcombine.high %v1110, %v1120
        %v1150 = vunpack.c.l.s4 1983009808
        %v1151 = vunpack.c.0.s8 %v1150
        %v1152 = vlaneseq
        %v1153 = vshrl.u32 %v1152, 7
        %v1154 = vsub.s32 %v1151, %v1153
        %v1155 = vrot.slane %v1147, %v1154
        %v1157 = vunpack.c.l.s4 1983009808
        %v1158 = vunpack.c.0.s8 %v1157
        %v1159 = vlaneseq
        %v1160 = vshrl.u32 %v1159, 7
        %v1161 = vsub.s32 %v1158, %v1160
        %v1162 = vrot.slane %v1148, %v1161
        %v1163 = vcombine.low %v1139, %v1155
        %v1164 = vcombine.high %v1139, %v1155
        %v1166 = vunpack.c.l.s4 1934713408
        %v1167 = vunpack.c.0.s8 %v1166
        %v1168 = vlaneseq
        %v1169 = vshrl.u32 %v1168, 7
        %v1170 = vsub.s32 %v1167, %v1169
        %v1171 = vrot.slane %v1163, %v1170
        %v1173 = vunpack.c.l.s4 1934713408
        %v1174 = vunpack.c.0.s8 %v1173
        %v1175 = vlaneseq
        %v1176 = vshrl.u32 %v1175, 7
        %v1177 = vsub.s32 %v1174, %v1176
        %v1178 = vrot.slane %v1164, %v1177
        %v1179 = vcombine.low %v1146, %v1162
        %v1180 = vcombine.high %v1146, %v1162
        %v1182 = vunpack.c.l.s4 1934713408
        %v1183 = vunpack.c.0.s8 %v1182
        %v1184 = vlaneseq
        %v1185 = vshrl.u32 %v1184, 7
        %v1186 = vsub.s32 %v1183, %v1185
        %v1187 = vrot.slane %v1179, %v1186
        %v1189 = vunpack.c.l.s4 1934713408
        %v1190 = vunpack.c.0.s8 %v1189
        %v1191 = vlaneseq
        %v1192 = vshrl.u32 %v1191, 7
        %v1193 = vsub.s32 %v1190, %v1192
        %v1194 = vrot.slane %v1180, %v1193
        %v1195 = vcombine.high %v1171, 0.0
        %v1196 = vcombine.high %v1178, 0.0
        %v1197 = vcombine.high %v1187, 0.0
        %v1198 = vcombine.high %v1194, 0.0
        %v1199 = vcombine.low %v1107, %v1117
        %v1200 = vcombine.high %v1107, %v1117
        %v1202 = vunpack.c.l.s4 1983009808
        %v1203 = vunpack.c.0.s8 %v1202
        %v1204 = vlaneseq
        %v1205 = vshrl.u32 %v1204, 7
        %v1206 = vsub.s32 %v1203, %v1205
        %v1207 = vrot.slane %v1199, %v1206
        %v1209 = vunpack.c.l.s4 1983009808
        %v1210 = vunpack.c.0.s8 %v1209
        %v1211 = vlaneseq
        %v1212 = vshrl.u32 %v1211, 7
        %v1213 = vsub.s32 %v1210, %v1212
        %v1214 = vrot.slane %v1200, %v1213
        %v1215 = vcombine.low %v1112, %v1122
        %v1216 = vcombine.high %v1112, %v1122
        %v1218 = vunpack.c.l.s4 1983009808
        %v1219 = vunpack.c.0.s8 %v1218
        %v1220 = vlaneseq
        %v1221 = vshrl.u32 %v1220, 7
        %v1222 = vsub.s32 %v1219, %v1221
        %v1223 = vrot.slane %v1215, %v1222
        %v1225 = vunpack.c.l.s4 1983009808
        %v1226 = vunpack.c.0.s8 %v1225
        %v1227 = vlaneseq
        %v1228 = vshrl.u32 %v1227, 7
        %v1229 = vsub.s32 %v1226, %v1228
        %v1230 = vrot.slane %v1216, %v1229
        %v1231 = vcombine.low %v1207, %v1223
        %v1232 = vcombine.high %v1207, %v1223
        %v1234 = vunpack.c.l.s4 1934713408
        %v1235 = vunpack.c.0.s8 %v1234
        %v1236 = vlaneseq
        %v1237 = vshrl.u32 %v1236, 7
        %v1238 = vsub.s32 %v1235, %v1237
        %v1239 = vrot.slane %v1231, %v1238
        %v1241 = vunpack.c.l.s4 1934713408
        %v1242 = vunpack.c.0.s8 %v1241
        %v1243 = vlaneseq
        %v1244 = vshrl.u32 %v1243, 7
        %v1245 = vsub.s32 %v1242, %v1244
        %v1246 = vrot.slane %v1232, %v1245
        %v1247 = vcombine.low %v1214, %v1230
        %v1248 = vcombine.high %v1214, %v1230
        %v1250 = vunpack.c.l.s4 1934713408
        %v1251 = vunpack.c.0.s8 %v1250
        %v1252 = vlaneseq
        %v1253 = vshrl.u32 %v1252, 7
        %v1254 = vsub.s32 %v1251, %v1253
        %v1255 = vrot.slane %v1247, %v1254
        %v1257 = vunpack.c.l.s4 1934713408
        %v1258 = vunpack.c.0.s8 %v1257
        %v1259 = vlaneseq
        %v1260 = vshrl.u32 %v1259, 7
        %v1261 = vsub.s32 %v1258, %v1260
        %v1262 = vrot.slane %v1248, %v1261
        %v1263 = vcombine.high %v1239, 0.0
        %v1264 = vcombine.high %v1246, 0.0
        %v1265 = vcombine.high %v1255, 0.0
        %v1266 = vcombine.high %v1262, 0.0
        %1268 = vrot.lane.b32.xlu0 %v1195, 16
        %v1269 = vpop.permute.xlu0 %1268
        %1272 = vrot.lane.b32.xlu0 %v1178, 32
        %v1273 = vpop.permute.xlu0 %1272
        %1276 = vrot.lane.b32.xlu0 %v1196, 48
        %v1277 = vpop.permute.xlu0 %1276
        %1280 = vrot.lane.b32.xlu0 %v1187, 64
        %v1281 = vpop.permute.xlu0 %1280
        %1284 = vrot.lane.b32.xlu0 %v1197, 80
        %v1285 = vpop.permute.xlu0 %1284
        %1288 = vrot.lane.b32.xlu0 %v1194, 96
        %v1289 = vpop.permute.xlu0 %1288
        %1292 = vrot.lane.b32.xlu0 %v1198, 112
        %v1293 = vpop.permute.xlu0 %1292
        %1296 = vrot.lane.b32.xlu0 %v1263, 16
        %v1297 = vpop.permute.xlu0 %1296
        %1300 = vrot.lane.b32.xlu0 %v1246, 32
        %v1301 = vpop.permute.xlu0 %1300
        %1304 = vrot.lane.b32.xlu0 %v1264, 48
        %v1305 = vpop.permute.xlu0 %1304
        %1308 = vrot.lane.b32.xlu0 %v1255, 64
        %v1309 = vpop.permute.xlu0 %1308
        %1312 = vrot.lane.b32.xlu0 %v1265, 80
        %v1313 = vpop.permute.xlu0 %1312
        %1316 = vrot.lane.b32.xlu0 %v1262, 96
        %v1317 = vpop.permute.xlu0 %1316
        %1320 = vrot.lane.b32.xlu0 %v1266, 112
        %v1321 = vpop.permute.xlu0 %1320
        %v1323 = vsel %vm609, %v1171, %v1269
        %v1324 = vsel %vm611, %v1323, %v1273
        %v1325 = vsel %vm613, %v1324, %v1277
        %v1326 = vsel %vm615, %v1325, %v1281
        %v1327 = vsel %vm617, %v1326, %v1285
        %v1328 = vsel %vm619, %v1327, %v1289
        %v1329 = vsel %vm621, %v1328, %v1293
        %v1330 = vsel %vm609, %v1239, %v1297
        %v1331 = vsel %vm611, %v1330, %v1301
        %v1332 = vsel %vm613, %v1331, %v1305
        %v1333 = vsel %vm615, %v1332, %v1309
        %v1334 = vsel %vm617, %v1333, %v1313
        %v1335 = vsel %vm619, %v1334, %v1317
        %v1336 = vsel %vm621, %v1335, %v1321
        %1337 = vrot.lane.b32.xlu0 %v1105, 127
        %v1338 = vpop.permute.xlu0 %1337
        %1339 = vrot.lane.b32.xlu0 %v1107, 127
        %v1340 = vpop.permute.xlu0 %1339
        %1341 = vrot.lane.b32.xlu0 %v1110, 127
        %v1342 = vpop.permute.xlu0 %1341
        %1343 = vrot.lane.b32.xlu0 %v1112, 127
        %v1344 = vpop.permute.xlu0 %1343
        %1345 = vrot.lane.b32.xlu0 %v1115, 127
        %v1346 = vpop.permute.xlu0 %1345
        %1347 = vrot.lane.b32.xlu0 %v1117, 127
        %v1348 = vpop.permute.xlu0 %1347
        %1349 = vrot.lane.b32.xlu0 %v1120, 127
        %v1350 = vpop.permute.xlu0 %1349
        %1351 = vrot.lane.b32.xlu0 %v1122, 127
        %v1352 = vpop.permute.xlu0 %1351
        %v1361 = vcombine.low %v1338, %v1346
        %v1362 = vcombine.high %v1338, %v1346
        %v1364 = vunpack.c.l.s4 1983009808
        %v1365 = vunpack.c.0.s8 %v1364
        %v1366 = vlaneseq
        %v1367 = vshrl.u32 %v1366, 7
        %v1368 = vsub.s32 %v1365, %v1367
        %v1369 = vrot.slane %v1361, %v1368
        %v1371 = vunpack.c.l.s4 1983009808
        %v1372 = vunpack.c.0.s8 %v1371
        %v1373 = vlaneseq
        %v1374 = vshrl.u32 %v1373, 7
        %v1375 = vsub.s32 %v1372, %v1374
        %v1376 = vrot.slane %v1362, %v1375
        %v1377 = vcombine.low %v1342, %v1350
        %v1378 = vcombine.high %v1342, %v1350
        %v1380 = vunpack.c.l.s4 1983009808
        %v1381 = vunpack.c.0.s8 %v1380
        %v1382 = vlaneseq
        %v1383 = vshrl.u32 %v1382, 7
        %v1384 = vsub.s32 %v1381, %v1383
        %v1385 = vrot.slane %v1377, %v1384
        %v1387 = vunpack.c.l.s4 1983009808
        %v1388 = vunpack.c.0.s8 %v1387
        %v1389 = vlaneseq
        %v1390 = vshrl.u32 %v1389, 7
        %v1391 = vsub.s32 %v1388, %v1390
        %v1392 = vrot.slane %v1378, %v1391
        %v1393 = vcombine.low %v1369, %v1385
        %v1394 = vcombine.high %v1369, %v1385
        %v1396 = vunpack.c.l.s4 1934713408
        %v1397 = vunpack.c.0.s8 %v1396
        %v1398 = vlaneseq
        %v1399 = vshrl.u32 %v1398, 7
        %v1400 = vsub.s32 %v1397, %v1399
        %v1401 = vrot.slane %v1393, %v1400
        %v1403 = vunpack.c.l.s4 1934713408
        %v1404 = vunpack.c.0.s8 %v1403
        %v1405 = vlaneseq
        %v1406 = vshrl.u32 %v1405, 7
        %v1407 = vsub.s32 %v1404, %v1406
        %v1408 = vrot.slane %v1394, %v1407
        %v1409 = vcombine.low %v1376, %v1392
        %v1410 = vcombine.high %v1376, %v1392
        %v1412 = vunpack.c.l.s4 1934713408
        %v1413 = vunpack.c.0.s8 %v1412
        %v1414 = vlaneseq
        %v1415 = vshrl.u32 %v1414, 7
        %v1416 = vsub.s32 %v1413, %v1415
        %v1417 = vrot.slane %v1409, %v1416
        %v1419 = vunpack.c.l.s4 1934713408
        %v1420 = vunpack.c.0.s8 %v1419
        %v1421 = vlaneseq
        %v1422 = vshrl.u32 %v1421, 7
        %v1423 = vsub.s32 %v1420, %v1422
        %v1424 = vrot.slane %v1410, %v1423
        %v1425 = vcombine.high %v1401, 0.0
        %v1426 = vcombine.high %v1408, 0.0
        %v1427 = vcombine.high %v1417, 0.0
        %v1428 = vcombine.high %v1424, 0.0
        %v1429 = vcombine.low %v1340, %v1348
        %v1430 = vcombine.high %v1340, %v1348
        %v1432 = vunpack.c.l.s4 1983009808
        %v1433 = vunpack.c.0.s8 %v1432
        %v1434 = vlaneseq
        %v1435 = vshrl.u32 %v1434, 7
        %v1436 = vsub.s32 %v1433, %v1435
        %v1437 = vrot.slane %v1429, %v1436
        %v1439 = vunpack.c.l.s4 1983009808
        %v1440 = vunpack.c.0.s8 %v1439
        %v1441 = vlaneseq
        %v1442 = vshrl.u32 %v1441, 7
        %v1443 = vsub.s32 %v1440, %v1442
        %v1444 = vrot.slane %v1430, %v1443
        %v1445 = vcombine.low %v1344, %v1352
        %v1446 = vcombine.high %v1344, %v1352
        %v1448 = vunpack.c.l.s4 1983009808
        %v1449 = vunpack.c.0.s8 %v1448
        %v1450 = vlaneseq
        %v1451 = vshrl.u32 %v1450, 7
        %v1452 = vsub.s32 %v1449, %v1451
        %v1453 = vrot.slane %v1445, %v1452
        %v1455 = vunpack.c.l.s4 1983009808
        %v1456 = vunpack.c.0.s8 %v1455
        %v1457 = vlaneseq
        %v1458 = vshrl.u32 %v1457, 7
        %v1459 = vsub.s32 %v1456, %v1458
        %v1460 = vrot.slane %v1446, %v1459
        %v1461 = vcombine.low %v1437, %v1453
        %v1462 = vcombine.high %v1437, %v1453
        %v1464 = vunpack.c.l.s4 1934713408
        %v1465 = vunpack.c.0.s8 %v1464
        %v1466 = vlaneseq
        %v1467 = vshrl.u32 %v1466, 7
        %v1468 = vsub.s32 %v1465, %v1467
        %v1469 = vrot.slane %v1461, %v1468
        %v1471 = vunpack.c.l.s4 1934713408
        %v1472 = vunpack.c.0.s8 %v1471
        %v1473 = vlaneseq
        %v1474 = vshrl.u32 %v1473, 7
        %v1475 = vsub.s32 %v1472, %v1474
        %v1476 = vrot.slane %v1462, %v1475
        %v1477 = vcombine.low %v1444, %v1460
        %v1478 = vcombine.high %v1444, %v1460
        %v1480 = vunpack.c.l.s4 1934713408
        %v1481 = vunpack.c.0.s8 %v1480
        %v1482 = vlaneseq
        %v1483 = vshrl.u32 %v1482, 7
        %v1484 = vsub.s32 %v1481, %v1483
        %v1485 = vrot.slane %v1477, %v1484
        %v1487 = vunpack.c.l.s4 1934713408
        %v1488 = vunpack.c.0.s8 %v1487
        %v1489 = vlaneseq
        %v1490 = vshrl.u32 %v1489, 7
        %v1491 = vsub.s32 %v1488, %v1490
        %v1492 = vrot.slane %v1478, %v1491
        %v1493 = vcombine.high %v1469, 0.0
        %v1494 = vcombine.high %v1476, 0.0
        %v1495 = vcombine.high %v1485, 0.0
        %v1496 = vcombine.high %v1492, 0.0
        %1498 = vrot.lane.b32.xlu0 %v1425, 16
        %v1499 = vpop.permute.xlu0 %1498
        %1502 = vrot.lane.b32.xlu0 %v1408, 32
        %v1503 = vpop.permute.xlu0 %1502
        %1506 = vrot.lane.b32.xlu0 %v1426, 48
        %v1507 = vpop.permute.xlu0 %1506
        %1510 = vrot.lane.b32.xlu0 %v1417, 64
        %v1511 = vpop.permute.xlu0 %1510
        %1514 = vrot.lane.b32.xlu0 %v1427, 80
        %v1515 = vpop.permute.xlu0 %1514
        %1518 = vrot.lane.b32.xlu0 %v1424, 96
        %v1519 = vpop.permute.xlu0 %1518
        %1522 = vrot.lane.b32.xlu0 %v1428, 112
        %v1523 = vpop.permute.xlu0 %1522
        %1526 = vrot.lane.b32.xlu0 %v1493, 16
        %v1527 = vpop.permute.xlu0 %1526
        %1530 = vrot.lane.b32.xlu0 %v1476, 32
        %v1531 = vpop.permute.xlu0 %1530
        %1534 = vrot.lane.b32.xlu0 %v1494, 48
        %v1535 = vpop.permute.xlu0 %1534
        %1538 = vrot.lane.b32.xlu0 %v1485, 64
        %v1539 = vpop.permute.xlu0 %1538
        %1542 = vrot.lane.b32.xlu0 %v1495, 80
        %v1543 = vpop.permute.xlu0 %1542
        %1546 = vrot.lane.b32.xlu0 %v1492, 96
        %v1547 = vpop.permute.xlu0 %1546
        %1550 = vrot.lane.b32.xlu0 %v1496, 112
        %v1551 = vpop.permute.xlu0 %1550
        %v1553 = vsel %vm609, %v1401, %v1499
        %v1554 = vsel %vm611, %v1553, %v1503
        %v1555 = vsel %vm613, %v1554, %v1507
        %v1556 = vsel %vm615, %v1555, %v1511
        %v1557 = vsel %vm617, %v1556, %v1515
        %v1558 = vsel %vm619, %v1557, %v1519
        %v1559 = vsel %vm621, %v1558, %v1523
        %v1560 = vsel %vm609, %v1469, %v1527
        %v1561 = vsel %vm611, %v1560, %v1531
        %v1562 = vsel %vm613, %v1561, %v1535
        %v1563 = vsel %vm615, %v1562, %v1539
        %v1564 = vsel %vm617, %v1563, %v1543
        %v1565 = vsel %vm619, %v1564, %v1547
        %v1566 = vsel %vm621, %v1565, %v1551
        %1567 = vrot.lane.b32.xlu0 %v1105, 126
        %v1568 = vpop.permute.xlu0 %1567
        %1569 = vrot.lane.b32.xlu0 %v1107, 126
        %v1570 = vpop.permute.xlu0 %1569
        %1571 = vrot.lane.b32.xlu0 %v1110, 126
        %v1572 = vpop.permute.xlu0 %1571
        %1573 = vrot.lane.b32.xlu0 %v1112, 126
        %v1574 = vpop.permute.xlu0 %1573
        %1575 = vrot.lane.b32.xlu0 %v1115, 126
        %v1576 = vpop.permute.xlu0 %1575
        %1577 = vrot.lane.b32.xlu0 %v1117, 126
        %v1578 = vpop.permute.xlu0 %1577
        %1579 = vrot.lane.b32.xlu0 %v1120, 126
        %v1580 = vpop.permute.xlu0 %1579
        %1581 = vrot.lane.b32.xlu0 %v1122, 126
        %v1582 = vpop.permute.xlu0 %1581
        %v1591 = vcombine.low %v1568, %v1576
        %v1592 = vcombine.high %v1568, %v1576
        %v1594 = vunpack.c.l.s4 1983009808
        %v1595 = vunpack.c.0.s8 %v1594
        %v1596 = vlaneseq
        %v1597 = vshrl.u32 %v1596, 7
        %v1598 = vsub.s32 %v1595, %v1597
        %v1599 = vrot.slane %v1591, %v1598
        %v1601 = vunpack.c.l.s4 1983009808
        %v1602 = vunpack.c.0.s8 %v1601
        %v1603 = vlaneseq
        %v1604 = vshrl.u32 %v1603, 7
        %v1605 = vsub.s32 %v1602, %v1604
        %v1606 = vrot.slane %v1592, %v1605
        %v1607 = vcombine.low %v1572, %v1580
        %v1608 = vcombine.high %v1572, %v1580
        %v1610 = vunpack.c.l.s4 1983009808
        %v1611 = vunpack.c.0.s8 %v1610
        %v1612 = vlaneseq
        %v1613 = vshrl.u32 %v1612, 7
        %v1614 = vsub.s32 %v1611, %v1613
        %v1615 = vrot.slane %v1607, %v1614
        %v1617 = vunpack.c.l.s4 1983009808
        %v1618 = vunpack.c.0.s8 %v1617
        %v1619 = vlaneseq
        %v1620 = vshrl.u32 %v1619, 7
        %v1621 = vsub.s32 %v1618, %v1620
        %v1622 = vrot.slane %v1608, %v1621
        %v1623 = vcombine.low %v1599, %v1615
        %v1624 = vcombine.high %v1599, %v1615
        %v1626 = vunpack.c.l.s4 1934713408
        %v1627 = vunpack.c.0.s8 %v1626
        %v1628 = vlaneseq
        %v1629 = vshrl.u32 %v1628, 7
        %v1630 = vsub.s32 %v1627, %v1629
        %v1631 = vrot.slane %v1623, %v1630
        %v1633 = vunpack.c.l.s4 1934713408
        %v1634 = vunpack.c.0.s8 %v1633
        %v1635 = vlaneseq
        %v1636 = vshrl.u32 %v1635, 7
        %v1637 = vsub.s32 %v1634, %v1636
        %v1638 = vrot.slane %v1624, %v1637
        %v1639 = vcombine.low %v1606, %v1622
        %v1640 = vcombine.high %v1606, %v1622
        %v1642 = vunpack.c.l.s4 1934713408
        %v1643 = vunpack.c.0.s8 %v1642
        %v1644 = vlaneseq
        %v1645 = vshrl.u32 %v1644, 7
        %v1646 = vsub.s32 %v1643, %v1645
        %v1647 = vrot.slane %v1639, %v1646
        %v1649 = vunpack.c.l.s4 1934713408
        %v1650 = vunpack.c.0.s8 %v1649
        %v1651 = vlaneseq
        %v1652 = vshrl.u32 %v1651, 7
        %v1653 = vsub.s32 %v1650, %v1652
        %v1654 = vrot.slane %v1640, %v1653
        %v1655 = vcombine.high %v1631, 0.0
        %v1656 = vcombine.high %v1638, 0.0
        %v1657 = vcombine.high %v1647, 0.0
        %v1658 = vcombine.high %v1654, 0.0
        %v1659 = vcombine.low %v1570, %v1578
        %v1660 = vcombine.high %v1570, %v1578
        %v1662 = vunpack.c.l.s4 1983009808
        %v1663 = vunpack.c.0.s8 %v1662
        %v1664 = vlaneseq
        %v1665 = vshrl.u32 %v1664, 7
        %v1666 = vsub.s32 %v1663, %v1665
        %v1667 = vrot.slane %v1659, %v1666
        %v1669 = vunpack.c.l.s4 1983009808
        %v1670 = vunpack.c.0.s8 %v1669
        %v1671 = vlaneseq
        %v1672 = vshrl.u32 %v1671, 7
        %v1673 = vsub.s32 %v1670, %v1672
        %v1674 = vrot.slane %v1660, %v1673
        %v1675 = vcombine.low %v1574, %v1582
        %v1676 = vcombine.high %v1574, %v1582
        %v1678 = vunpack.c.l.s4 1983009808
        %v1679 = vunpack.c.0.s8 %v1678
        %v1680 = vlaneseq
        %v1681 = vshrl.u32 %v1680, 7
        %v1682 = vsub.s32 %v1679, %v1681
        %v1683 = vrot.slane %v1675, %v1682
        %v1685 = vunpack.c.l.s4 1983009808
        %v1686 = vunpack.c.0.s8 %v1685
        %v1687 = vlaneseq
        %v1688 = vshrl.u32 %v1687, 7
        %v1689 = vsub.s32 %v1686, %v1688
        %v1690 = vrot.slane %v1676, %v1689
        %v1691 = vcombine.low %v1667, %v1683
        %v1692 = vcombine.high %v1667, %v1683
        %v1694 = vunpack.c.l.s4 1934713408
        %v1695 = vunpack.c.0.s8 %v1694
        %v1696 = vlaneseq
        %v1697 = vshrl.u32 %v1696, 7
        %v1698 = vsub.s32 %v1695, %v1697
        %v1699 = vrot.slane %v1691, %v1698
        %v1701 = vunpack.c.l.s4 1934713408
        %v1702 = vunpack.c.0.s8 %v1701
        %v1703 = vlaneseq
        %v1704 = vshrl.u32 %v1703, 7
        %v1705 = vsub.s32 %v1702, %v1704
        %v1706 = vrot.slane %v1692, %v1705
        %v1707 = vcombine.low %v1674, %v1690
        %v1708 = vcombine.high %v1674, %v1690
        %v1710 = vunpack.c.l.s4 1934713408
        %v1711 = vunpack.c.0.s8 %v1710
        %v1712 = vlaneseq
        %v1713 = vshrl.u32 %v1712, 7
        %v1714 = vsub.s32 %v1711, %v1713
        %v1715 = vrot.slane %v1707, %v1714
        %v1717 = vunpack.c.l.s4 1934713408
        %v1718 = vunpack.c.0.s8 %v1717
        %v1719 = vlaneseq
        %v1720 = vshrl.u32 %v1719, 7
        %v1721 = vsub.s32 %v1718, %v1720
        %v1722 = vrot.slane %v1708, %v1721
        %v1723 = vcombine.high %v1699, 0.0
        %v1724 = vcombine.high %v1706, 0.0
        %v1725 = vcombine.high %v1715, 0.0
        %v1726 = vcombine.high %v1722, 0.0
        %1728 = vrot.lane.b32.xlu0 %v1655, 16
        %v1729 = vpop.permute.xlu0 %1728
        %1732 = vrot.lane.b32.xlu0 %v1638, 32
        %v1733 = vpop.permute.xlu0 %1732
        %1736 = vrot.lane.b32.xlu0 %v1656, 48
        %v1737 = vpop.permute.xlu0 %1736
        %1740 = vrot.lane.b32.xlu0 %v1647, 64
        %v1741 = vpop.permute.xlu0 %1740
        %1744 = vrot.lane.b32.xlu0 %v1657, 80
        %v1745 = vpop.permute.xlu0 %1744
        %1748 = vrot.lane.b32.xlu0 %v1654, 96
        %v1749 = vpop.permute.xlu0 %1748
        %1752 = vrot.lane.b32.xlu0 %v1658, 112
        %v1753 = vpop.permute.xlu0 %1752
        %1756 = vrot.lane.b32.xlu0 %v1723, 16
        %v1757 = vpop.permute.xlu0 %1756
        %1760 = vrot.lane.b32.xlu0 %v1706, 32
        %v1761 = vpop.permute.xlu0 %1760
        %1764 = vrot.lane.b32.xlu0 %v1724, 48
        %v1765 = vpop.permute.xlu0 %1764
        %1768 = vrot.lane.b32.xlu0 %v1715, 64
        %v1769 = vpop.permute.xlu0 %1768
        %1772 = vrot.lane.b32.xlu0 %v1725, 80
        %v1773 = vpop.permute.xlu0 %1772
        %1776 = vrot.lane.b32.xlu0 %v1722, 96
        %v1777 = vpop.permute.xlu0 %1776
        %1780 = vrot.lane.b32.xlu0 %v1726, 112
        %v1781 = vpop.permute.xlu0 %1780
        %v1783 = vsel %vm609, %v1631, %v1729
        %v1784 = vsel %vm611, %v1783, %v1733
        %v1785 = vsel %vm613, %v1784, %v1737
        %v1786 = vsel %vm615, %v1785, %v1741
        %v1787 = vsel %vm617, %v1786, %v1745
        %v1788 = vsel %vm619, %v1787, %v1749
        %v1789 = vsel %vm621, %v1788, %v1753
        %v1790 = vsel %vm609, %v1699, %v1757
        %v1791 = vsel %vm611, %v1790, %v1761
        %v1792 = vsel %vm613, %v1791, %v1765
        %v1793 = vsel %vm615, %v1792, %v1769
        %v1794 = vsel %vm617, %v1793, %v1773
        %v1795 = vsel %vm619, %v1794, %v1777
        %v1796 = vsel %vm621, %v1795, %v1781
        %vm1797 = vcmask 1045504
        %v1798 = vrot.slane %v405, 2
        %v1799 = vrot.slane %v406, 2
        %v1800 = vsel %vm1797, %v1798, %v1799
        %v1801 = vrot.slane %v407, 2
        %v1802 = vsel %vm1797, %v1799, %v1801
        %v1803 = vrot.slane %v408, 2
        %v1804 = vrot.slane %v409, 2
        %v1805 = vsel %vm1797, %v1803, %v1804
        %v1806 = vrot.slane %v410, 2
        %v1807 = vsel %vm1797, %v1804, %v1806
        %v1808 = vrot.slane %v411, 2
        %v1809 = vrot.slane %v412, 2
        %v1810 = vsel %vm1797, %v1808, %v1809
        %v1811 = vrot.slane %v413, 2
        %v1812 = vsel %vm1797, %v1809, %v1811
        %v1813 = vrot.slane %v414, 2
        %v1814 = vrot.slane %v415, 2
        %v1815 = vsel %vm1797, %v1813, %v1814
        %v1816 = vrot.slane %v416, 2
        %v1817 = vsel %vm1797, %v1814, %v1816
        %v1826 = vcombine.low %v1800, %v1810
        %v1827 = vcombine.high %v1800, %v1810
        %v1829 = vunpack.c.l.s4 1983009808
        %v1830 = vunpack.c.0.s8 %v1829
        %v1831 = vlaneseq
        %v1832 = vshrl.u32 %v1831, 7
        %v1833 = vsub.s32 %v1830, %v1832
        %v1834 = vrot.slane %v1826, %v1833
        %v1836 = vunpack.c.l.s4 1983009808
        %v1837 = vunpack.c.0.s8 %v1836
        %v1838 = vlaneseq
        %v1839 = vshrl.u32 %v1838, 7
        %v1840 = vsub.s32 %v1837, %v1839
        %v1841 = vrot.slane %v1827, %v1840
        %v1842 = vcombine.low %v1805, %v1815
        %v1843 = vcombine.high %v1805, %v1815
        %v1845 = vunpack.c.l.s4 1983009808
        %v1846 = vunpack.c.0.s8 %v1845
        %v1847 = vlaneseq
        %v1848 = vshrl.u32 %v1847, 7
        %v1849 = vsub.s32 %v1846, %v1848
        %v1850 = vrot.slane %v1842, %v1849
        %v1852 = vunpack.c.l.s4 1983009808
        %v1853 = vunpack.c.0.s8 %v1852
        %v1854 = vlaneseq
        %v1855 = vshrl.u32 %v1854, 7
        %v1856 = vsub.s32 %v1853, %v1855
        %v1857 = vrot.slane %v1843, %v1856
        %v1858 = vcombine.low %v1834, %v1850
        %v1859 = vcombine.high %v1834, %v1850
        %v1861 = vunpack.c.l.s4 1934713408
        %v1862 = vunpack.c.0.s8 %v1861
        %v1863 = vlaneseq
        %v1864 = vshrl.u32 %v1863, 7
        %v1865 = vsub.s32 %v1862, %v1864
        %v1866 = vrot.slane %v1858, %v1865
        %v1868 = vunpack.c.l.s4 1934713408
        %v1869 = vunpack.c.0.s8 %v1868
        %v1870 = vlaneseq
        %v1871 = vshrl.u32 %v1870, 7
        %v1872 = vsub.s32 %v1869, %v1871
        %v1873 = vrot.slane %v1859, %v1872
        %v1874 = vcombine.low %v1841, %v1857
        %v1875 = vcombine.high %v1841, %v1857
        %v1877 = vunpack.c.l.s4 1934713408
        %v1878 = vunpack.c.0.s8 %v1877
        %v1879 = vlaneseq
        %v1880 = vshrl.u32 %v1879, 7
        %v1881 = vsub.s32 %v1878, %v1880
        %v1882 = vrot.slane %v1874, %v1881
        %v1884 = vunpack.c.l.s4 1934713408
        %v1885 = vunpack.c.0.s8 %v1884
        %v1886 = vlaneseq
        %v1887 = vshrl.u32 %v1886, 7
        %v1888 = vsub.s32 %v1885, %v1887
        %v1889 = vrot.slane %v1875, %v1888
        %v1890 = vcombine.high %v1866, 0.0
        %v1891 = vcombine.high %v1873, 0.0
        %v1892 = vcombine.high %v1882, 0.0
        %v1893 = vcombine.high %v1889, 0.0
        %v1894 = vcombine.low %v1802, %v1812
        %v1895 = vcombine.high %v1802, %v1812
        %v1897 = vunpack.c.l.s4 1983009808
        %v1898 = vunpack.c.0.s8 %v1897
        %v1899 = vlaneseq
        %v1900 = vshrl.u32 %v1899, 7
        %v1901 = vsub.s32 %v1898, %v1900
        %v1902 = vrot.slane %v1894, %v1901
        %v1904 = vunpack.c.l.s4 1983009808
        %v1905 = vunpack.c.0.s8 %v1904
        %v1906 = vlaneseq
        %v1907 = vshrl.u32 %v1906, 7
        %v1908 = vsub.s32 %v1905, %v1907
        %v1909 = vrot.slane %v1895, %v1908
        %v1910 = vcombine.low %v1807, %v1817
        %v1911 = vcombine.high %v1807, %v1817
        %v1913 = vunpack.c.l.s4 1983009808
        %v1914 = vunpack.c.0.s8 %v1913
        %v1915 = vlaneseq
        %v1916 = vshrl.u32 %v1915, 7
        %v1917 = vsub.s32 %v1914, %v1916
        %v1918 = vrot.slane %v1910, %v1917
        %v1920 = vunpack.c.l.s4 1983009808
        %v1921 = vunpack.c.0.s8 %v1920
        %v1922 = vlaneseq
        %v1923 = vshrl.u32 %v1922, 7
        %v1924 = vsub.s32 %v1921, %v1923
        %v1925 = vrot.slane %v1911, %v1924
        %v1926 = vcombine.low %v1902, %v1918
        %v1927 = vcombine.high %v1902, %v1918
        %v1929 = vunpack.c.l.s4 1934713408
        %v1930 = vunpack.c.0.s8 %v1929
        %v1931 = vlaneseq
        %v1932 = vshrl.u32 %v1931, 7
        %v1933 = vsub.s32 %v1930, %v1932
        %v1934 = vrot.slane %v1926, %v1933
        %v1936 = vunpack.c.l.s4 1934713408
        %v1937 = vunpack.c.0.s8 %v1936
        %v1938 = vlaneseq
        %v1939 = vshrl.u32 %v1938, 7
        %v1940 = vsub.s32 %v1937, %v1939
        %v1941 = vrot.slane %v1927, %v1940
        %v1942 = vcombine.low %v1909, %v1925
        %v1943 = vcombine.high %v1909, %v1925
        %v1945 = vunpack.c.l.s4 1934713408
        %v1946 = vunpack.c.0.s8 %v1945
        %v1947 = vlaneseq
        %v1948 = vshrl.u32 %v1947, 7
        %v1949 = vsub.s32 %v1946, %v1948
        %v1950 = vrot.slane %v1942, %v1949
        %v1952 = vunpack.c.l.s4 1934713408
        %v1953 = vunpack.c.0.s8 %v1952
        %v1954 = vlaneseq
        %v1955 = vshrl.u32 %v1954, 7
        %v1956 = vsub.s32 %v1953, %v1955
        %v1957 = vrot.slane %v1943, %v1956
        %v1958 = vcombine.high %v1934, 0.0
        %v1959 = vcombine.high %v1941, 0.0
        %v1960 = vcombine.high %v1950, 0.0
        %v1961 = vcombine.high %v1957, 0.0
        %1963 = vrot.lane.b32.xlu0 %v1890, 16
        %v1964 = vpop.permute.xlu0 %1963
        %1967 = vrot.lane.b32.xlu0 %v1873, 32
        %v1968 = vpop.permute.xlu0 %1967
        %1971 = vrot.lane.b32.xlu0 %v1891, 48
        %v1972 = vpop.permute.xlu0 %1971
        %1975 = vrot.lane.b32.xlu0 %v1882, 64
        %v1976 = vpop.permute.xlu0 %1975
        %1979 = vrot.lane.b32.xlu0 %v1892, 80
        %v1980 = vpop.permute.xlu0 %1979
        %1983 = vrot.lane.b32.xlu0 %v1889, 96
        %v1984 = vpop.permute.xlu0 %1983
        %1987 = vrot.lane.b32.xlu0 %v1893, 112
        %v1988 = vpop.permute.xlu0 %1987
        %1991 = vrot.lane.b32.xlu0 %v1958, 16
        %v1992 = vpop.permute.xlu0 %1991
        %1995 = vrot.lane.b32.xlu0 %v1941, 32
        %v1996 = vpop.permute.xlu0 %1995
        %1999 = vrot.lane.b32.xlu0 %v1959, 48
        %v2000 = vpop.permute.xlu0 %1999
        %2003 = vrot.lane.b32.xlu0 %v1950, 64
        %v2004 = vpop.permute.xlu0 %2003
        %2007 = vrot.lane.b32.xlu0 %v1960, 80
        %v2008 = vpop.permute.xlu0 %2007
        %2011 = vrot.lane.b32.xlu0 %v1957, 96
        %v2012 = vpop.permute.xlu0 %2011
        %2015 = vrot.lane.b32.xlu0 %v1961, 112
        %v2016 = vpop.permute.xlu0 %2015
        %v2018 = vsel %vm609, %v1866, %v1964
        %v2019 = vsel %vm611, %v2018, %v1968
        %v2020 = vsel %vm613, %v2019, %v1972
        %v2021 = vsel %vm615, %v2020, %v1976
        %v2022 = vsel %vm617, %v2021, %v1980
        %v2023 = vsel %vm619, %v2022, %v1984
        %v2024 = vsel %vm621, %v2023, %v1988
        %v2025 = vsel %vm609, %v1934, %v1992
        %v2026 = vsel %vm611, %v2025, %v1996
        %v2027 = vsel %vm613, %v2026, %v2000
        %v2028 = vsel %vm615, %v2027, %v2004
        %v2029 = vsel %vm617, %v2028, %v2008
        %v2030 = vsel %vm619, %v2029, %v2012
        %v2031 = vsel %vm621, %v2030, %v2016
        %2032 = vrot.lane.b32.xlu0 %v1800, 127
        %v2033 = vpop.permute.xlu0 %2032
        %2034 = vrot.lane.b32.xlu0 %v1802, 127
        %v2035 = vpop.permute.xlu0 %2034
        %2036 = vrot.lane.b32.xlu0 %v1805, 127
        %v2037 = vpop.permute.xlu0 %2036
        %2038 = vrot.lane.b32.xlu0 %v1807, 127
        %v2039 = vpop.permute.xlu0 %2038
        %2040 = vrot.lane.b32.xlu0 %v1810, 127
        %v2041 = vpop.permute.xlu0 %2040
        %2042 = vrot.lane.b32.xlu0 %v1812, 127
        %v2043 = vpop.permute.xlu0 %2042
        %2044 = vrot.lane.b32.xlu0 %v1815, 127
        %v2045 = vpop.permute.xlu0 %2044
        %2046 = vrot.lane.b32.xlu0 %v1817, 127
        %v2047 = vpop.permute.xlu0 %2046
        %v2056 = vcombine.low %v2033, %v2041
        %v2057 = vcombine.high %v2033, %v2041
        %v2059 = vunpack.c.l.s4 1983009808
        %v2060 = vunpack.c.0.s8 %v2059
        %v2061 = vlaneseq
        %v2062 = vshrl.u32 %v2061, 7
        %v2063 = vsub.s32 %v2060, %v2062
        %v2064 = vrot.slane %v2056, %v2063
        %v2066 = vunpack.c.l.s4 1983009808
        %v2067 = vunpack.c.0.s8 %v2066
        %v2068 = vlaneseq
        %v2069 = vshrl.u32 %v2068, 7
        %v2070 = vsub.s32 %v2067, %v2069
        %v2071 = vrot.slane %v2057, %v2070
        %v2072 = vcombine.low %v2037, %v2045
        %v2073 = vcombine.high %v2037, %v2045
        %v2075 = vunpack.c.l.s4 1983009808
        %v2076 = vunpack.c.0.s8 %v2075
        %v2077 = vlaneseq
        %v2078 = vshrl.u32 %v2077, 7
        %v2079 = vsub.s32 %v2076, %v2078
        %v2080 = vrot.slane %v2072, %v2079
        %v2082 = vunpack.c.l.s4 1983009808
        %v2083 = vunpack.c.0.s8 %v2082
        %v2084 = vlaneseq
        %v2085 = vshrl.u32 %v2084, 7
        %v2086 = vsub.s32 %v2083, %v2085
        %v2087 = vrot.slane %v2073, %v2086
        %v2088 = vcombine.low %v2064, %v2080
        %v2089 = vcombine.high %v2064, %v2080
        %v2091 = vunpack.c.l.s4 1934713408
        %v2092 = vunpack.c.0.s8 %v2091
        %v2093 = vlaneseq
        %v2094 = vshrl.u32 %v2093, 7
        %v2095 = vsub.s32 %v2092, %v2094
        %v2096 = vrot.slane %v2088, %v2095
        %v2098 = vunpack.c.l.s4 1934713408
        %v2099 = vunpack.c.0.s8 %v2098
        %v2100 = vlaneseq
        %v2101 = vshrl.u32 %v2100, 7
        %v2102 = vsub.s32 %v2099, %v2101
        %v2103 = vrot.slane %v2089, %v2102
        %v2104 = vcombine.low %v2071, %v2087
        %v2105 = vcombine.high %v2071, %v2087
        %v2107 = vunpack.c.l.s4 1934713408
        %v2108 = vunpack.c.0.s8 %v2107
        %v2109 = vlaneseq
        %v2110 = vshrl.u32 %v2109, 7
        %v2111 = vsub.s32 %v2108, %v2110
        %v2112 = vrot.slane %v2104, %v2111
        %v2114 = vunpack.c.l.s4 1934713408
        %v2115 = vunpack.c.0.s8 %v2114
        %v2116 = vlaneseq
        %v2117 = vshrl.u32 %v2116, 7
        %v2118 = vsub.s32 %v2115, %v2117
        %v2119 = vrot.slane %v2105, %v2118
        %v2120 = vcombine.high %v2096, 0.0
        %v2121 = vcombine.high %v2103, 0.0
        %v2122 = vcombine.high %v2112, 0.0
        %v2123 = vcombine.high %v2119, 0.0
        %v2124 = vcombine.low %v2035, %v2043
        %v2125 = vcombine.high %v2035, %v2043
        %v2127 = vunpack.c.l.s4 1983009808
        %v2128 = vunpack.c.0.s8 %v2127
        %v2129 = vlaneseq
        %v2130 = vshrl.u32 %v2129, 7
        %v2131 = vsub.s32 %v2128, %v2130
        %v2132 = vrot.slane %v2124, %v2131
        %v2134 = vunpack.c.l.s4 1983009808
        %v2135 = vunpack.c.0.s8 %v2134
        %v2136 = vlaneseq
        %v2137 = vshrl.u32 %v2136, 7
        %v2138 = vsub.s32 %v2135, %v2137
        %v2139 = vrot.slane %v2125, %v2138
        %v2140 = vcombine.low %v2039, %v2047
        %v2141 = vcombine.high %v2039, %v2047
        %v2143 = vunpack.c.l.s4 1983009808
        %v2144 = vunpack.c.0.s8 %v2143
        %v2145 = vlaneseq
        %v2146 = vshrl.u32 %v2145, 7
        %v2147 = vsub.s32 %v2144, %v2146
        %v2148 = vrot.slane %v2140, %v2147
        %v2150 = vunpack.c.l.s4 1983009808
        %v2151 = vunpack.c.0.s8 %v2150
        %v2152 = vlaneseq
        %v2153 = vshrl.u32 %v2152, 7
        %v2154 = vsub.s32 %v2151, %v2153
        %v2155 = vrot.slane %v2141, %v2154
        %v2156 = vcombine.low %v2132, %v2148
        %v2157 = vcombine.high %v2132, %v2148
        %v2159 = vunpack.c.l.s4 1934713408
        %v2160 = vunpack.c.0.s8 %v2159
        %v2161 = vlaneseq
        %v2162 = vshrl.u32 %v2161, 7
        %v2163 = vsub.s32 %v2160, %v2162
        %v2164 = vrot.slane %v2156, %v2163
        %v2166 = vunpack.c.l.s4 1934713408
        %v2167 = vunpack.c.0.s8 %v2166
        %v2168 = vlaneseq
        %v2169 = vshrl.u32 %v2168, 7
        %v2170 = vsub.s32 %v2167, %v2169
        %v2171 = vrot.slane %v2157, %v2170
        %v2172 = vcombine.low %v2139, %v2155
        %v2173 = vcombine.high %v2139, %v2155
        %v2175 = vunpack.c.l.s4 1934713408
        %v2176 = vunpack.c.0.s8 %v2175
        %v2177 = vlaneseq
        %v2178 = vshrl.u32 %v2177, 7
        %v2179 = vsub.s32 %v2176, %v2178
        %v2180 = vrot.slane %v2172, %v2179
        %v2182 = vunpack.c.l.s4 1934713408
        %v2183 = vunpack.c.0.s8 %v2182
        %v2184 = vlaneseq
        %v2185 = vshrl.u32 %v2184, 7
        %v2186 = vsub.s32 %v2183, %v2185
        %v2187 = vrot.slane %v2173, %v2186
        %v2188 = vcombine.high %v2164, 0.0
        %v2189 = vcombine.high %v2171, 0.0
        %v2190 = vcombine.high %v2180, 0.0
        %v2191 = vcombine.high %v2187, 0.0
        %2193 = vrot.lane.b32.xlu0 %v2120, 16
        %v2194 = vpop.permute.xlu0 %2193
        %2197 = vrot.lane.b32.xlu0 %v2103, 32
        %v2198 = vpop.permute.xlu0 %2197
        %2201 = vrot.lane.b32.xlu0 %v2121, 48
        %v2202 = vpop.permute.xlu0 %2201
        %2205 = vrot.lane.b32.xlu0 %v2112, 64
        %v2206 = vpop.permute.xlu0 %2205
        %2209 = vrot.lane.b32.xlu0 %v2122, 80
        %v2210 = vpop.permute.xlu0 %2209
        %2213 = vrot.lane.b32.xlu0 %v2119, 96
        %v2214 = vpop.permute.xlu0 %2213
        %2217 = vrot.lane.b32.xlu0 %v2123, 112
        %v2218 = vpop.permute.xlu0 %2217
        %2221 = vrot.lane.b32.xlu0 %v2188, 16
        %v2222 = vpop.permute.xlu0 %2221
        %2225 = vrot.lane.b32.xlu0 %v2171, 32
        %v2226 = vpop.permute.xlu0 %2225
        %2229 = vrot.lane.b32.xlu0 %v2189, 48
        %v2230 = vpop.permute.xlu0 %2229
        %2233 = vrot.lane.b32.xlu0 %v2180, 64
        %v2234 = vpop.permute.xlu0 %2233
        %2237 = vrot.lane.b32.xlu0 %v2190, 80
        %v2238 = vpop.permute.xlu0 %2237
        %2241 = vrot.lane.b32.xlu0 %v2187, 96
        %v2242 = vpop.permute.xlu0 %2241
        %2245 = vrot.lane.b32.xlu0 %v2191, 112
        %v2246 = vpop.permute.xlu0 %2245
        %v2248 = vsel %vm609, %v2096, %v2194
        %v2249 = vsel %vm611, %v2248, %v2198
        %v2250 = vsel %vm613, %v2249, %v2202
        %v2251 = vsel %vm615, %v2250, %v2206
        %v2252 = vsel %vm617, %v2251, %v2210
        %v2253 = vsel %vm619, %v2252, %v2214
        %v2254 = vsel %vm621, %v2253, %v2218
        %v2255 = vsel %vm609, %v2164, %v2222
        %v2256 = vsel %vm611, %v2255, %v2226
        %v2257 = vsel %vm613, %v2256, %v2230
        %v2258 = vsel %vm615, %v2257, %v2234
        %v2259 = vsel %vm617, %v2258, %v2238
        %v2260 = vsel %vm619, %v2259, %v2242
        %v2261 = vsel %vm621, %v2260, %v2246
        %2262 = vrot.lane.b32.xlu0 %v1800, 126
        %v2263 = vpop.permute.xlu0 %2262
        %2264 = vrot.lane.b32.xlu0 %v1802, 126
        %v2265 = vpop.permute.xlu0 %2264
        %2266 = vrot.lane.b32.xlu0 %v1805, 126
        %v2267 = vpop.permute.xlu0 %2266
        %2268 = vrot.lane.b32.xlu0 %v1807, 126
        %v2269 = vpop.permute.xlu0 %2268
        %2270 = vrot.lane.b32.xlu0 %v1810, 126
        %v2271 = vpop.permute.xlu0 %2270
        %2272 = vrot.lane.b32.xlu0 %v1812, 126
        %v2273 = vpop.permute.xlu0 %2272
        %2274 = vrot.lane.b32.xlu0 %v1815, 126
        %v2275 = vpop.permute.xlu0 %2274
        %2276 = vrot.lane.b32.xlu0 %v1817, 126
        %v2277 = vpop.permute.xlu0 %2276
        %v2286 = vcombine.low %v2263, %v2271
        %v2287 = vcombine.high %v2263, %v2271
        %v2289 = vunpack.c.l.s4 1983009808
        %v2290 = vunpack.c.0.s8 %v2289
        %v2291 = vlaneseq
        %v2292 = vshrl.u32 %v2291, 7
        %v2293 = vsub.s32 %v2290, %v2292
        %v2294 = vrot.slane %v2286, %v2293
        %v2296 = vunpack.c.l.s4 1983009808
        %v2297 = vunpack.c.0.s8 %v2296
        %v2298 = vlaneseq
        %v2299 = vshrl.u32 %v2298, 7
        %v2300 = vsub.s32 %v2297, %v2299
        %v2301 = vrot.slane %v2287, %v2300
        %v2302 = vcombine.low %v2267, %v2275
        %v2303 = vcombine.high %v2267, %v2275
        %v2305 = vunpack.c.l.s4 1983009808
        %v2306 = vunpack.c.0.s8 %v2305
        %v2307 = vlaneseq
        %v2308 = vshrl.u32 %v2307, 7
        %v2309 = vsub.s32 %v2306, %v2308
        %v2310 = vrot.slane %v2302, %v2309
        %v2312 = vunpack.c.l.s4 1983009808
        %v2313 = vunpack.c.0.s8 %v2312
        %v2314 = vlaneseq
        %v2315 = vshrl.u32 %v2314, 7
        %v2316 = vsub.s32 %v2313, %v2315
        %v2317 = vrot.slane %v2303, %v2316
        %v2318 = vcombine.low %v2294, %v2310
        %v2319 = vcombine.high %v2294, %v2310
        %v2321 = vunpack.c.l.s4 1934713408
        %v2322 = vunpack.c.0.s8 %v2321
        %v2323 = vlaneseq
        %v2324 = vshrl.u32 %v2323, 7
        %v2325 = vsub.s32 %v2322, %v2324
        %v2326 = vrot.slane %v2318, %v2325
        %v2328 = vunpack.c.l.s4 1934713408
        %v2329 = vunpack.c.0.s8 %v2328
        %v2330 = vlaneseq
        %v2331 = vshrl.u32 %v2330, 7
        %v2332 = vsub.s32 %v2329, %v2331
        %v2333 = vrot.slane %v2319, %v2332
        %v2334 = vcombine.low %v2301, %v2317
        %v2335 = vcombine.high %v2301, %v2317
        %v2337 = vunpack.c.l.s4 1934713408
        %v2338 = vunpack.c.0.s8 %v2337
        %v2339 = vlaneseq
        %v2340 = vshrl.u32 %v2339, 7
        %v2341 = vsub.s32 %v2338, %v2340
        %v2342 = vrot.slane %v2334, %v2341
        %v2344 = vunpack.c.l.s4 1934713408
        %v2345 = vunpack.c.0.s8 %v2344
        %v2346 = vlaneseq
        %v2347 = vshrl.u32 %v2346, 7
        %v2348 = vsub.s32 %v2345, %v2347
        %v2349 = vrot.slane %v2335, %v2348
        %v2350 = vcombine.high %v2326, 0.0
        %v2351 = vcombine.high %v2333, 0.0
        %v2352 = vcombine.high %v2342, 0.0
        %v2353 = vcombine.high %v2349, 0.0
        %v2354 = vcombine.low %v2265, %v2273
        %v2355 = vcombine.high %v2265, %v2273
        %v2357 = vunpack.c.l.s4 1983009808
        %v2358 = vunpack.c.0.s8 %v2357
        %v2359 = vlaneseq
        %v2360 = vshrl.u32 %v2359, 7
        %v2361 = vsub.s32 %v2358, %v2360
        %v2362 = vrot.slane %v2354, %v2361
        %v2364 = vunpack.c.l.s4 1983009808
        %v2365 = vunpack.c.0.s8 %v2364
        %v2366 = vlaneseq
        %v2367 = vshrl.u32 %v2366, 7
        %v2368 = vsub.s32 %v2365, %v2367
        %v2369 = vrot.slane %v2355, %v2368
        %v2370 = vcombine.low %v2269, %v2277
        %v2371 = vcombine.high %v2269, %v2277
        %v2373 = vunpack.c.l.s4 1983009808
        %v2374 = vunpack.c.0.s8 %v2373
        %v2375 = vlaneseq
        %v2376 = vshrl.u32 %v2375, 7
        %v2377 = vsub.s32 %v2374, %v2376
        %v2378 = vrot.slane %v2370, %v2377
        %v2380 = vunpack.c.l.s4 1983009808
        %v2381 = vunpack.c.0.s8 %v2380
        %v2382 = vlaneseq
        %v2383 = vshrl.u32 %v2382, 7
        %v2384 = vsub.s32 %v2381, %v2383
        %v2385 = vrot.slane %v2371, %v2384
        %v2386 = vcombine.low %v2362, %v2378
        %v2387 = vcombine.high %v2362, %v2378
        %v2389 = vunpack.c.l.s4 1934713408
        %v2390 = vunpack.c.0.s8 %v2389
        %v2391 = vlaneseq
        %v2392 = vshrl.u32 %v2391, 7
        %v2393 = vsub.s32 %v2390, %v2392
        %v2394 = vrot.slane %v2386, %v2393
        %v2396 = vunpack.c.l.s4 1934713408
        %v2397 = vunpack.c.0.s8 %v2396
        %v2398 = vlaneseq
        %v2399 = vshrl.u32 %v2398, 7
        %v2400 = vsub.s32 %v2397, %v2399
        %v2401 = vrot.slane %v2387, %v2400
        %v2402 = vcombine.low %v2369, %v2385
        %v2403 = vcombine.high %v2369, %v2385
        %v2405 = vunpack.c.l.s4 1934713408
        %v2406 = vunpack.c.0.s8 %v2405
        %v2407 = vlaneseq
        %v2408 = vshrl.u32 %v2407, 7
        %v2409 = vsub.s32 %v2406, %v2408
        %v2410 = vrot.slane %v2402, %v2409
        %v2412 = vunpack.c.l.s4 1934713408
        %v2413 = vunpack.c.0.s8 %v2412
        %v2414 = vlaneseq
        %v2415 = vshrl.u32 %v2414, 7
        %v2416 = vsub.s32 %v2413, %v2415
        %v2417 = vrot.slane %v2403, %v2416
        %v2418 = vcombine.high %v2394, 0.0
        %v2419 = vcombine.high %v2401, 0.0
        %v2420 = vcombine.high %v2410, 0.0
        %v2421 = vcombine.high %v2417, 0.0
        %2423 = vrot.lane.b32.xlu0 %v2350, 16
        %v2424 = vpop.permute.xlu0 %2423
        %2427 = vrot.lane.b32.xlu0 %v2333, 32
        %v2428 = vpop.permute.xlu0 %2427
        %2431 = vrot.lane.b32.xlu0 %v2351, 48
        %v2432 = vpop.permute.xlu0 %2431
        %2435 = vrot.lane.b32.xlu0 %v2342, 64
        %v2436 = vpop.permute.xlu0 %2435
        %2439 = vrot.lane.b32.xlu0 %v2352, 80
        %v2440 = vpop.permute.xlu0 %2439
        %2443 = vrot.lane.b32.xlu0 %v2349, 96
        %v2444 = vpop.permute.xlu0 %2443
        %2447 = vrot.lane.b32.xlu0 %v2353, 112
        %v2448 = vpop.permute.xlu0 %2447
        %2451 = vrot.lane.b32.xlu0 %v2418, 16
        %v2452 = vpop.permute.xlu0 %2451
        %2455 = vrot.lane.b32.xlu0 %v2401, 32
        %v2456 = vpop.permute.xlu0 %2455
        %2459 = vrot.lane.b32.xlu0 %v2419, 48
        %v2460 = vpop.permute.xlu0 %2459
        %2463 = vrot.lane.b32.xlu0 %v2410, 64
        %v2464 = vpop.permute.xlu0 %2463
        %2467 = vrot.lane.b32.xlu0 %v2420, 80
        %v2468 = vpop.permute.xlu0 %2467
        %2471 = vrot.lane.b32.xlu0 %v2417, 96
        %v2472 = vpop.permute.xlu0 %2471
        %2475 = vrot.lane.b32.xlu0 %v2421, 112
        %v2476 = vpop.permute.xlu0 %2475
        %v2478 = vsel %vm609, %v2326, %v2424
        %v2479 = vsel %vm611, %v2478, %v2428
        %v2480 = vsel %vm613, %v2479, %v2432
        %v2481 = vsel %vm615, %v2480, %v2436
        %v2482 = vsel %vm617, %v2481, %v2440
        %v2483 = vsel %vm619, %v2482, %v2444
        %v2484 = vsel %vm621, %v2483, %v2448
        %v2485 = vsel %vm609, %v2394, %v2452
        %v2486 = vsel %vm611, %v2485, %v2456
        %v2487 = vsel %vm613, %v2486, %v2460
        %v2488 = vsel %vm615, %v2487, %v2464
        %v2489 = vsel %vm617, %v2488, %v2468
        %v2490 = vsel %vm619, %v2489, %v2472
        %v2491 = vsel %vm621, %v2490, %v2476
        %v2494 = vrot.slane %v860, 4
        %v2495 = vrot.slane %v867, 4
        %v2500 = vrot.slane %v1329, 4
        %v2501 = vrot.slane %v1336, 4
        %v2506 = vrot.slane %v1789, 4
        %v2507 = vrot.slane %v1796, 4
        %v2512 = vrot.slane %v2254, 4
        %v2513 = vrot.slane %v2261, 4
        %vm2516 = vcmask 1043456
        %v2517 = vsel %vm2516, %v622, %v2494
        %v2518 = vsel %vm2516, %v629, %v2495
        %v2519 = vsel %vm2516, %v1090, %v2500
        %v2520 = vsel %vm2516, %v1097, %v2501
        %v2521 = vsel %vm2516, %v1559, %v2506
        %v2522 = vsel %vm2516, %v1566, %v2507
        %v2523 = vsel %vm2516, %v2024, %v2512
        %v2524 = vsel %vm2516, %v2031, %v2513
        %v2525 = vld [vmem:[#allocation5] sm:$0xff]
        %vm2526 = vcmask 293888
        %v2528 = vsel %vm2526, %v2525, 0
        %v2531 = vsel %vm2516, %v2484, 0
        %v2534 = vsel %vm2516, %v2491, 0
        %2536 = vmatprep.subr.mxu0 %v2518
        %2537 = vmatpush1.msra.mxu0 %v2517
        %2538 = vmatprep.subr.mxu0 %v2520
        %2539 = vmatpush1.msra.mxu0 %v2519
        %2540 = vmatprep.subr.mxu0 %v2522
        %2541 = vmatpush1.msra.mxu0 %v2521
        %2542 = vmatprep.subr.mxu0 %v2524
        %2543 = vmatpush1.msra.mxu0 %v2523
        %2544 = vmatprep.subr.mxu0 %v2534
        %2545 = vmatpush1.msra.mxu0 %v2531
        %2546 = vmatprep.subr.mxu0 0.0
        %2547 = vmatpush1.msra.mxu0 0.0
        %2548 = vmatprep.subr.mxu0 0.0
        %2549 = vmatpush1.msra.mxu0 0.0
        %2550 = vmatprep.subr.mxu0 0.0
        %2551 = vmatpush1.msra.mxu0 0.0
        %2552 = vmatprep.subr.mxu0 0.0
        %2553 = vmatpush1.msra.mxu0 0.0
        %2554 = vmatprep.subr.mxu0 0.0
        %2555 = vmatpush1.msra.mxu0 0.0
        %2556 = vmatprep.subr.mxu0 0.0
        %2557 = vmatpush1.msra.mxu0 0.0
        %2558 = vmatprep.subr.mxu0 0.0
        %2559 = vmatpush1.msra.mxu0 0.0
        %2560 = vmatprep.subr.mxu0 0.0
        %2561 = vmatpush1.msra.mxu0 0.0
        %2562 = vmatprep.subr.mxu0 0.0
        %2563 = vmatpush1.msra.mxu0 0.0
        %2564 = vmatprep.subr.mxu0 0.0
        %2565 = vmatpush1.msra.mxu0 0.0
        %2566 = vmatprep.subr.mxu0 0.0
        %2567 = vmatpush1.msra.mxu0 0.0
        %2568 = vmatprep.subr.mxu0 0.0
        %2569 = vmatpush1.msra.mxu0 0.0
        %2570 = vmatprep.subr.mxu0 0.0
        %2571 = vmatpush1.msra.mxu0 0.0
        %2572 = vmatprep.subr.mxu0 0.0
        %2573 = vmatpush1.msra.mxu0 0.0
        %2574 = vmatprep.subr.mxu0 0.0
        %2575 = vmatpush1.msra.mxu0 0.0
        %2576 = vmatprep.subr.mxu0 0.0
        %2577 = vmatpush1.msra.mxu0 0.0
        %2578 = vmatprep.subr.mxu0 0.0
        %2579 = vmatpush1.msra.mxu0 0.0
        %2580 = vmatprep.subr.mxu0 0.0
        %2581 = vmatpush1.msra.mxu0 0.0
        %2582 = vmatprep.subr.mxu0 0.0
        %2583 = vmatpush1.msra.mxu0 0.0
        %2584 = vmatprep.subr.mxu0 0.0
        %2585 = vmatpush1.msra.mxu0 0.0
        %2586 = vmatprep.subr.mxu0 0.0
        %2587 = vmatpush1.msra.mxu0 0.0
        %2588 = vmatprep.subr.mxu0 0.0
        %2589 = vmatpush1.msra.mxu0 0.0
        %2590 = vmatprep.subr.mxu0 0.0
        %2591 = vmatpush1.msra.mxu0 0.0
        %2592 = vmatprep.subr.mxu0 0.0
        %2593 = vmatpush1.msra.mxu0 0.0
        %2594 = vmatprep.subr.mxu0 0.0
        %2595 = vmatpush1.msra.mxu0 0.0
        %2596 = vmatprep.subr.mxu0 0.0
        %2597 = vmatpush1.msra.mxu0 0.0
        %2598 = vmatprep.subr.mxu0 0.0
        %2599 = vmatpush1.msra.mxu0 0.0
        %2600 = vmatprep.mubr.f32.mxu0 0.0
        %2601 = vmatmul.mubr.f32.gmra.mrb[0].mxu0 %v2528
        %v2602 = vpop.f32.mrb[0].mxu0
        %v2603 = vadd.f32 0.0, %v2602
        %v2604 = vpop.f32.mrb[0].mxu0
        %v2605 = vadd.f32 0.0, %v2604
        %2606 = vdwg.mxu0
        %v2607 = vadd.f32 %v2603, %v2605
        %2608 = vadd.xlane.f32.xlu0 %v2607
        %v2609 = vpop.xlane.xlu0 %2608
        %v2610 = vrcp.pop 256.0
        %v2611 = vmul.f32 %v2609, %v2610
        %v2612 = vsub.f32 %v2603, %v2611
        %v2613 = vsub.f32 %v2605, %v2611
        %v2614 = vmul.f32 %v2612, %v2612
        %v2615 = vmul.f32 %v2613, %v2613
        %v2616 = vadd.f32 %v2614, %v2615
        %2617 = vadd.xlane.f32.xlu0 %v2616
        %v2618 = vpop.xlane.xlu0 %2617
        %v2619 = vmul.f32 %v2618, %v2610
        %v2620 = vadd.f32 %v2619, 1e-05
        %v2621 = vrsqrt.pop %v2620
        %v2622 = vmul.f32 %v2612, %v2621
        %v2623 = vmul.f32 %v2613, %v2621
        %vm2624 = vcmp.gt.f32.partialorder %v2622, 0.0
        %vm2625 = vcmp.gt.f32.partialorder %v2623, 0.0
        %v2626 = vmul.f32 %v2622, 0.1
        %v2627 = vmul.f32 %v2623, 0.1
        %v2628 = vsel %vm2624, %v2622, %v2626
        %v2629 = vsel %vm2625, %v2623, %v2627
        %2631 = vrot.lane.b32.xlu0 %v2628, 112
        %v2632 = vpop.permute.xlu0 %2631
        %2634 = vrot.lane.b32.xlu0 %v2628, 96
        %v2635 = vpop.permute.xlu0 %2634
        %2637 = vrot.lane.b32.xlu0 %v2628, 80
        %v2638 = vpop.permute.xlu0 %2637
        %2640 = vrot.lane.b32.xlu0 %v2628, 64
        %v2641 = vpop.permute.xlu0 %2640
        %2643 = vrot.lane.b32.xlu0 %v2628, 48
        %v2644 = vpop.permute.xlu0 %2643
        %2646 = vrot.lane.b32.xlu0 %v2628, 32
        %v2647 = vpop.permute.xlu0 %2646
        %2649 = vrot.lane.b32.xlu0 %v2628, 16
        %v2650 = vpop.permute.xlu0 %2649
        %2653 = vrot.lane.b32.xlu0 %v2629, 112
        %v2654 = vpop.permute.xlu0 %2653
        %2656 = vrot.lane.b32.xlu0 %v2629, 96
        %v2657 = vpop.permute.xlu0 %2656
        %2659 = vrot.lane.b32.xlu0 %v2629, 80
        %v2660 = vpop.permute.xlu0 %2659
        %2662 = vrot.lane.b32.xlu0 %v2629, 64
        %v2663 = vpop.permute.xlu0 %2662
        %2665 = vrot.lane.b32.xlu0 %v2629, 48
        %v2666 = vpop.permute.xlu0 %2665
        %2668 = vrot.lane.b32.xlu0 %v2629, 32
        %v2669 = vpop.permute.xlu0 %2668
        %2671 = vrot.lane.b32.xlu0 %v2629, 16
        %v2672 = vpop.permute.xlu0 %2671
        %v2674 = vcombine.low %v2628, %v2635
        %v2675 = vcombine.high %v2628, %v2635
        %v2677 = vunpack.c.l.s4 1983009808
        %v2678 = vunpack.c.0.s8 %v2677
        %v2679 = vlaneseq
        %v2680 = vshrl.u32 %v2679, 7
        %v2681 = vsub.s32 %v2678, %v2680
        %v2682 = vrot.slane %v2674, %v2681
        %v2684 = vunpack.c.l.s4 1983009808
        %v2685 = vunpack.c.0.s8 %v2684
        %v2686 = vlaneseq
        %v2687 = vshrl.u32 %v2686, 7
        %v2688 = vsub.s32 %v2685, %v2687
        %v2689 = vrot.slane %v2675, %v2688
        %v2690 = vcombine.low %v2632, %v2638
        %v2691 = vcombine.high %v2632, %v2638
        %v2693 = vunpack.c.l.s4 1983009808
        %v2694 = vunpack.c.0.s8 %v2693
        %v2695 = vlaneseq
        %v2696 = vshrl.u32 %v2695, 7
        %v2697 = vsub.s32 %v2694, %v2696
        %v2698 = vrot.slane %v2690, %v2697
        %v2700 = vunpack.c.l.s4 1983009808
        %v2701 = vunpack.c.0.s8 %v2700
        %v2702 = vlaneseq
        %v2703 = vshrl.u32 %v2702, 7
        %v2704 = vsub.s32 %v2701, %v2703
        %v2705 = vrot.slane %v2691, %v2704
        %v2706 = vcombine.low %v2641, %v2647
        %v2707 = vcombine.high %v2641, %v2647
        %v2709 = vunpack.c.l.s4 1983009808
        %v2710 = vunpack.c.0.s8 %v2709
        %v2711 = vlaneseq
        %v2712 = vshrl.u32 %v2711, 7
        %v2713 = vsub.s32 %v2710, %v2712
        %v2714 = vrot.slane %v2706, %v2713
        %v2716 = vunpack.c.l.s4 1983009808
        %v2717 = vunpack.c.0.s8 %v2716
        %v2718 = vlaneseq
        %v2719 = vshrl.u32 %v2718, 7
        %v2720 = vsub.s32 %v2717, %v2719
        %v2721 = vrot.slane %v2707, %v2720
        %v2722 = vcombine.low %v2644, %v2650
        %v2723 = vcombine.high %v2644, %v2650
        %v2725 = vunpack.c.l.s4 1983009808
        %v2726 = vunpack.c.0.s8 %v2725
        %v2727 = vlaneseq
        %v2728 = vshrl.u32 %v2727, 7
        %v2729 = vsub.s32 %v2726, %v2728
        %v2730 = vrot.slane %v2722, %v2729
        %v2732 = vunpack.c.l.s4 1983009808
        %v2733 = vunpack.c.0.s8 %v2732
        %v2734 = vlaneseq
        %v2735 = vshrl.u32 %v2734, 7
        %v2736 = vsub.s32 %v2733, %v2735
        %v2737 = vrot.slane %v2723, %v2736
        %v2738 = vcombine.low %v2682, %v2698
        %v2739 = vcombine.high %v2682, %v2698
        %v2741 = vunpack.c.l.s4 1934713408
        %v2742 = vunpack.c.0.s8 %v2741
        %v2743 = vlaneseq
        %v2744 = vshrl.u32 %v2743, 7
        %v2745 = vsub.s32 %v2742, %v2744
        %v2746 = vrot.slane %v2738, %v2745
        %v2748 = vunpack.c.l.s4 1934713408
        %v2749 = vunpack.c.0.s8 %v2748
        %v2750 = vlaneseq
        %v2751 = vshrl.u32 %v2750, 7
        %v2752 = vsub.s32 %v2749, %v2751
        %v2753 = vrot.slane %v2739, %v2752
        %v2754 = vcombine.low %v2689, %v2705
        %v2755 = vcombine.high %v2689, %v2705
        %v2757 = vunpack.c.l.s4 1934713408
        %v2758 = vunpack.c.0.s8 %v2757
        %v2759 = vlaneseq
        %v2760 = vshrl.u32 %v2759, 7
        %v2761 = vsub.s32 %v2758, %v2760
        %v2762 = vrot.slane %v2754, %v2761
        %v2764 = vunpack.c.l.s4 1934713408
        %v2765 = vunpack.c.0.s8 %v2764
        %v2766 = vlaneseq
        %v2767 = vshrl.u32 %v2766, 7
        %v2768 = vsub.s32 %v2765, %v2767
        %v2769 = vrot.slane %v2755, %v2768
        %v2770 = vcombine.low %v2714, %v2730
        %v2771 = vcombine.high %v2714, %v2730
        %v2773 = vunpack.c.l.s4 1934713408
        %v2774 = vunpack.c.0.s8 %v2773
        %v2775 = vlaneseq
        %v2776 = vshrl.u32 %v2775, 7
        %v2777 = vsub.s32 %v2774, %v2776
        %v2778 = vrot.slane %v2770, %v2777
        %v2780 = vunpack.c.l.s4 1934713408
        %v2781 = vunpack.c.0.s8 %v2780
        %v2782 = vlaneseq
        %v2783 = vshrl.u32 %v2782, 7
        %v2784 = vsub.s32 %v2781, %v2783
        %v2785 = vrot.slane %v2771, %v2784
        %v2786 = vcombine.low %v2721, %v2737
        %v2787 = vcombine.high %v2721, %v2737
        %v2789 = vunpack.c.l.s4 1934713408
        %v2790 = vunpack.c.0.s8 %v2789
        %v2791 = vlaneseq
        %v2792 = vshrl.u32 %v2791, 7
        %v2793 = vsub.s32 %v2790, %v2792
        %v2794 = vrot.slane %v2786, %v2793
        %v2796 = vunpack.c.l.s4 1934713408
        %v2797 = vunpack.c.0.s8 %v2796
        %v2798 = vlaneseq
        %v2799 = vshrl.u32 %v2798, 7
        %v2800 = vsub.s32 %v2797, %v2799
        %v2801 = vrot.slane %v2787, %v2800
        %v2802 = vcombine.low %v2746, %v2778
        %v2803 = vcombine.high %v2746, %v2778
        %v2804 = vcombine.low %v2753, %v2785
        %v2805 = vcombine.high %v2753, %v2785
        %v2806 = vcombine.low %v2762, %v2794
        %v2807 = vcombine.high %v2762, %v2794
        %v2808 = vcombine.low %v2769, %v2801
        %v2809 = vcombine.high %v2769, %v2801
        %v2810 = vcombine.low %v2629, %v2657
        %v2811 = vcombine.high %v2629, %v2657
        %v2813 = vunpack.c.l.s4 1983009808
        %v2814 = vunpack.c.0.s8 %v2813
        %v2815 = vlaneseq
        %v2816 = vshrl.u32 %v2815, 7
        %v2817 = vsub.s32 %v2814, %v2816
        %v2818 = vrot.slane %v2810, %v2817
        %v2820 = vunpack.c.l.s4 1983009808
        %v2821 = vunpack.c.0.s8 %v2820
        %v2822 = vlaneseq
        %v2823 = vshrl.u32 %v2822, 7
        %v2824 = vsub.s32 %v2821, %v2823
        %v2825 = vrot.slane %v2811, %v2824
        %v2826 = vcombine.low %v2654, %v2660
        %v2827 = vcombine.high %v2654, %v2660
        %v2829 = vunpack.c.l.s4 1983009808
        %v2830 = vunpack.c.0.s8 %v2829
        %v2831 = vlaneseq
        %v2832 = vshrl.u32 %v2831, 7
        %v2833 = vsub.s32 %v2830, %v2832
        %v2834 = vrot.slane %v2826, %v2833
        %v2836 = vunpack.c.l.s4 1983009808
        %v2837 = vunpack.c.0.s8 %v2836
        %v2838 = vlaneseq
        %v2839 = vshrl.u32 %v2838, 7
        %v2840 = vsub.s32 %v2837, %v2839
        %v2841 = vrot.slane %v2827, %v2840
        %v2842 = vcombine.low %v2663, %v2669
        %v2843 = vcombine.high %v2663, %v2669
        %v2845 = vunpack.c.l.s4 1983009808
        %v2846 = vunpack.c.0.s8 %v2845
        %v2847 = vlaneseq
        %v2848 = vshrl.u32 %v2847, 7
        %v2849 = vsub.s32 %v2846, %v2848
        %v2850 = vrot.slane %v2842, %v2849
        %v2852 = vunpack.c.l.s4 1983009808
        %v2853 = vunpack.c.0.s8 %v2852
        %v2854 = vlaneseq
        %v2855 = vshrl.u32 %v2854, 7
        %v2856 = vsub.s32 %v2853, %v2855
        %v2857 = vrot.slane %v2843, %v2856
        %v2858 = vcombine.low %v2666, %v2672
        %v2859 = vcombine.high %v2666, %v2672
        %v2861 = vunpack.c.l.s4 1983009808
        %v2862 = vunpack.c.0.s8 %v2861
        %v2863 = vlaneseq
        %v2864 = vshrl.u32 %v2863, 7
        %v2865 = vsub.s32 %v2862, %v2864
        %v2866 = vrot.slane %v2858, %v2865
        %v2868 = vunpack.c.l.s4 1983009808
        %v2869 = vunpack.c.0.s8 %v2868
        %v2870 = vlaneseq
        %v2871 = vshrl.u32 %v2870, 7
        %v2872 = vsub.s32 %v2869, %v2871
        %v2873 = vrot.slane %v2859, %v2872
        %v2874 = vcombine.low %v2818, %v2834
        %v2875 = vcombine.high %v2818, %v2834
        %v2877 = vunpack.c.l.s4 1934713408
        %v2878 = vunpack.c.0.s8 %v2877
        %v2879 = vlaneseq
        %v2880 = vshrl.u32 %v2879, 7
        %v2881 = vsub.s32 %v2878, %v2880
        %v2882 = vrot.slane %v2874, %v2881
        %v2884 = vunpack.c.l.s4 1934713408
        %v2885 = vunpack.c.0.s8 %v2884
        %v2886 = vlaneseq
        %v2887 = vshrl.u32 %v2886, 7
        %v2888 = vsub.s32 %v2885, %v2887
        %v2889 = vrot.slane %v2875, %v2888
        %v2890 = vcombine.low %v2825, %v2841
        %v2891 = vcombine.high %v2825, %v2841
        %v2893 = vunpack.c.l.s4 1934713408
        %v2894 = vunpack.c.0.s8 %v2893
        %v2895 = vlaneseq
        %v2896 = vshrl.u32 %v2895, 7
        %v2897 = vsub.s32 %v2894, %v2896
        %v2898 = vrot.slane %v2890, %v2897
        %v2900 = vunpack.c.l.s4 1934713408
        %v2901 = vunpack.c.0.s8 %v2900
        %v2902 = vlaneseq
        %v2903 = vshrl.u32 %v2902, 7
        %v2904 = vsub.s32 %v2901, %v2903
        %v2905 = vrot.slane %v2891, %v2904
        %v2906 = vcombine.low %v2850, %v2866
        %v2907 = vcombine.high %v2850, %v2866
        %v2909 = vunpack.c.l.s4 1934713408
        %v2910 = vunpack.c.0.s8 %v2909
        %v2911 = vlaneseq
        %v2912 = vshrl.u32 %v2911, 7
        %v2913 = vsub.s32 %v2910, %v2912
        %v2914 = vrot.slane %v2906, %v2913
        %v2916 = vunpack.c.l.s4 1934713408
        %v2917 = vunpack.c.0.s8 %v2916
        %v2918 = vlaneseq
        %v2919 = vshrl.u32 %v2918, 7
        %v2920 = vsub.s32 %v2917, %v2919
        %v2921 = vrot.slane %v2907, %v2920
        %v2922 = vcombine.low %v2857, %v2873
        %v2923 = vcombine.high %v2857, %v2873
        %v2925 = vunpack.c.l.s4 1934713408
        %v2926 = vunpack.c.0.s8 %v2925
        %v2927 = vlaneseq
        %v2928 = vshrl.u32 %v2927, 7
        %v2929 = vsub.s32 %v2926, %v2928
        %v2930 = vrot.slane %v2922, %v2929
        %v2932 = vunpack.c.l.s4 1934713408
        %v2933 = vunpack.c.0.s8 %v2932
        %v2934 = vlaneseq
        %v2935 = vshrl.u32 %v2934, 7
        %v2936 = vsub.s32 %v2933, %v2935
        %v2937 = vrot.slane %v2923, %v2936
        %v2938 = vcombine.low %v2882, %v2914
        %v2939 = vcombine.high %v2882, %v2914
        %v2940 = vcombine.low %v2889, %v2921
        %v2941 = vcombine.high %v2889, %v2921
        %v2942 = vcombine.low %v2898, %v2930
        %v2943 = vcombine.high %v2898, %v2930
        %v2944 = vcombine.low %v2905, %v2937
        %v2945 = vcombine.high %v2905, %v2937
        %v2954 = vrot.slane %v2802, 1
        %v2955 = vrot.slane %v2803, 1
        %v2956 = vrot.slane %v2804, 1
        %v2957 = vrot.slane %v2805, 1
        %v2958 = vrot.slane %v2806, 1
        %v2959 = vrot.slane %v2807, 1
        %v2960 = vrot.slane %v2808, 1
        %v2961 = vrot.slane %v2809, 1
        %v2978 = vrot.slane %v2802, 7
        %v2979 = vrot.slane %v2938, 7
        %v2980 = vsel %vm238, %v2978, %v2979
        %v2981 = vrot.slane %v2803, 7
        %v2982 = vrot.slane %v2939, 7
        %v2983 = vsel %vm238, %v2981, %v2982
        %v2984 = vrot.slane %v2804, 7
        %v2985 = vrot.slane %v2940, 7
        %v2986 = vsel %vm238, %v2984, %v2985
        %v2987 = vrot.slane %v2805, 7
        %v2988 = vrot.slane %v2941, 7
        %v2989 = vsel %vm238, %v2987, %v2988
        %v2990 = vrot.slane %v2806, 7
        %v2991 = vrot.slane %v2942, 7
        %v2992 = vsel %vm238, %v2990, %v2991
        %v2993 = vrot.slane %v2807, 7
        %v2994 = vrot.slane %v2943, 7
        %v2995 = vsel %vm238, %v2993, %v2994
        %v2996 = vrot.slane %v2808, 7
        %v2997 = vrot.slane %v2944, 7
        %v2998 = vsel %vm238, %v2996, %v2997
        %v2999 = vrot.slane %v2809, 7
        %v3000 = vrot.slane %v2945, 7
        %v3001 = vsel %vm238, %v2999, %v3000
        %v3018 = vrot.slane %v2938, 5
        %v3019 = vrot.slane %v2939, 5
        %v3020 = vrot.slane %v2940, 5
        %v3021 = vrot.slane %v2941, 5
        %v3022 = vrot.slane %v2942, 5
        %v3023 = vrot.slane %v2943, 5
        %v3024 = vrot.slane %v2944, 5
        %v3025 = vrot.slane %v2945, 5
        %v3034 = vsel %vm238, %v2954, %v2978
        %v3035 = vsel %vm238, %v2955, %v2981
        %v3036 = vsel %vm238, %v2956, %v2984
        %v3037 = vsel %vm238, %v2957, %v2987
        %v3038 = vsel %vm238, %v2958, %v2990
        %v3039 = vsel %vm238, %v2959, %v2993
        %v3040 = vsel %vm238, %v2960, %v2996
        %v3041 = vsel %vm238, %v2961, %v2999
        %v3042 = vsel %vm238, %v2979, %v3018
        %v3043 = vsel %vm238, %v2982, %v3019
        %v3044 = vsel %vm238, %v2985, %v3020
        %v3045 = vsel %vm238, %v2988, %v3021
        %v3046 = vsel %vm238, %v2991, %v3022
        %v3047 = vsel %vm238, %v2994, %v3023
        %v3048 = vsel %vm238, %v2997, %v3024
        %v3049 = vsel %vm238, %v3000, %v3025
        %3066 = vrot.lane.b32.xlu0 %v3034, 127
        %v3067 = vpop.permute.xlu0 %3066
        %3068 = vrot.lane.b32.xlu0 %v2980, 127
        %v3069 = vpop.permute.xlu0 %3068
        %3070 = vrot.lane.b32.xlu0 %v3042, 127
        %v3071 = vpop.permute.xlu0 %3070
        %3072 = vrot.lane.b32.xlu0 %v3035, 127
        %v3073 = vpop.permute.xlu0 %3072
        %3074 = vrot.lane.b32.xlu0 %v2983, 127
        %v3075 = vpop.permute.xlu0 %3074
        %3076 = vrot.lane.b32.xlu0 %v3043, 127
        %v3077 = vpop.permute.xlu0 %3076
        %3078 = vrot.lane.b32.xlu0 %v3036, 127
        %v3079 = vpop.permute.xlu0 %3078
        %3080 = vrot.lane.b32.xlu0 %v2986, 127
        %v3081 = vpop.permute.xlu0 %3080
        %3082 = vrot.lane.b32.xlu0 %v3044, 127
        %v3083 = vpop.permute.xlu0 %3082
        %3084 = vrot.lane.b32.xlu0 %v3037, 127
        %v3085 = vpop.permute.xlu0 %3084
        %3086 = vrot.lane.b32.xlu0 %v2989, 127
        %v3087 = vpop.permute.xlu0 %3086
        %3088 = vrot.lane.b32.xlu0 %v3045, 127
        %v3089 = vpop.permute.xlu0 %3088
        %3090 = vrot.lane.b32.xlu0 %v3038, 127
        %v3091 = vpop.permute.xlu0 %3090
        %3092 = vrot.lane.b32.xlu0 %v2992, 127
        %v3093 = vpop.permute.xlu0 %3092
        %3094 = vrot.lane.b32.xlu0 %v3046, 127
        %v3095 = vpop.permute.xlu0 %3094
        %3096 = vrot.lane.b32.xlu0 %v3039, 127
        %v3097 = vpop.permute.xlu0 %3096
        %3098 = vrot.lane.b32.xlu0 %v2995, 127
        %v3099 = vpop.permute.xlu0 %3098
        %3100 = vrot.lane.b32.xlu0 %v3047, 127
        %v3101 = vpop.permute.xlu0 %3100
        %3102 = vrot.lane.b32.xlu0 %v3040, 127
        %v3103 = vpop.permute.xlu0 %3102
        %3104 = vrot.lane.b32.xlu0 %v2998, 127
        %v3105 = vpop.permute.xlu0 %3104
        %3106 = vrot.lane.b32.xlu0 %v3048, 127
        %v3107 = vpop.permute.xlu0 %3106
        %3108 = vrot.lane.b32.xlu0 %v3041, 127
        %v3109 = vpop.permute.xlu0 %3108
        %3110 = vrot.lane.b32.xlu0 %v3001, 127
        %v3111 = vpop.permute.xlu0 %3110
        %3112 = vrot.lane.b32.xlu0 %v3049, 127
        %v3113 = vpop.permute.xlu0 %3112
        %3138 = vrot.lane.b32.xlu0 %v3034, 1
        %v3139 = vpop.permute.xlu0 %3138
        %3140 = vrot.lane.b32.xlu0 %v2980, 1
        %v3141 = vpop.permute.xlu0 %3140
        %3142 = vrot.lane.b32.xlu0 %v3042, 1
        %v3143 = vpop.permute.xlu0 %3142
        %3144 = vrot.lane.b32.xlu0 %v3035, 1
        %v3145 = vpop.permute.xlu0 %3144
        %3146 = vrot.lane.b32.xlu0 %v2983, 1
        %v3147 = vpop.permute.xlu0 %3146
        %3148 = vrot.lane.b32.xlu0 %v3043, 1
        %v3149 = vpop.permute.xlu0 %3148
        %3150 = vrot.lane.b32.xlu0 %v3036, 1
        %v3151 = vpop.permute.xlu0 %3150
        %3152 = vrot.lane.b32.xlu0 %v2986, 1
        %v3153 = vpop.permute.xlu0 %3152
        %3154 = vrot.lane.b32.xlu0 %v3044, 1
        %v3155 = vpop.permute.xlu0 %3154
        %3156 = vrot.lane.b32.xlu0 %v3037, 1
        %v3157 = vpop.permute.xlu0 %3156
        %3158 = vrot.lane.b32.xlu0 %v2989, 1
        %v3159 = vpop.permute.xlu0 %3158
        %3160 = vrot.lane.b32.xlu0 %v3045, 1
        %v3161 = vpop.permute.xlu0 %3160
        %3162 = vrot.lane.b32.xlu0 %v3038, 1
        %v3163 = vpop.permute.xlu0 %3162
        %3164 = vrot.lane.b32.xlu0 %v2992, 1
        %v3165 = vpop.permute.xlu0 %3164
        %3166 = vrot.lane.b32.xlu0 %v3046, 1
        %v3167 = vpop.permute.xlu0 %3166
        %3168 = vrot.lane.b32.xlu0 %v3039, 1
        %v3169 = vpop.permute.xlu0 %3168
        %3170 = vrot.lane.b32.xlu0 %v2995, 1
        %v3171 = vpop.permute.xlu0 %3170
        %3172 = vrot.lane.b32.xlu0 %v3047, 1
        %v3173 = vpop.permute.xlu0 %3172
        %3174 = vrot.lane.b32.xlu0 %v3040, 1
        %v3175 = vpop.permute.xlu0 %3174
        %3176 = vrot.lane.b32.xlu0 %v2998, 1
        %v3177 = vpop.permute.xlu0 %3176
        %3178 = vrot.lane.b32.xlu0 %v3048, 1
        %v3179 = vpop.permute.xlu0 %3178
        %3180 = vrot.lane.b32.xlu0 %v3041, 1
        %v3181 = vpop.permute.xlu0 %3180
        %3182 = vrot.lane.b32.xlu0 %v3001, 1
        %v3183 = vpop.permute.xlu0 %3182
        %3184 = vrot.lane.b32.xlu0 %v3049, 1
        %v3185 = vpop.permute.xlu0 %3184
        %3210 = vrot.lane.b32.xlu0 %v3034, 3
        %v3211 = vpop.permute.xlu0 %3210
        %3212 = vrot.lane.b32.xlu0 %v2980, 3
        %v3213 = vpop.permute.xlu0 %3212
        %3214 = vrot.lane.b32.xlu0 %v3042, 3
        %v3215 = vpop.permute.xlu0 %3214
        %3216 = vrot.lane.b32.xlu0 %v3035, 3
        %v3217 = vpop.permute.xlu0 %3216
        %3218 = vrot.lane.b32.xlu0 %v2983, 3
        %v3219 = vpop.permute.xlu0 %3218
        %3220 = vrot.lane.b32.xlu0 %v3043, 3
        %v3221 = vpop.permute.xlu0 %3220
        %3222 = vrot.lane.b32.xlu0 %v3036, 3
        %v3223 = vpop.permute.xlu0 %3222
        %3224 = vrot.lane.b32.xlu0 %v2986, 3
        %v3225 = vpop.permute.xlu0 %3224
        %3226 = vrot.lane.b32.xlu0 %v3044, 3
        %v3227 = vpop.permute.xlu0 %3226
        %3228 = vrot.lane.b32.xlu0 %v3037, 3
        %v3229 = vpop.permute.xlu0 %3228
        %3230 = vrot.lane.b32.xlu0 %v2989, 3
        %v3231 = vpop.permute.xlu0 %3230
        %3232 = vrot.lane.b32.xlu0 %v3045, 3
        %v3233 = vpop.permute.xlu0 %3232
        %3234 = vrot.lane.b32.xlu0 %v3038, 3
        %v3235 = vpop.permute.xlu0 %3234
        %3236 = vrot.lane.b32.xlu0 %v2992, 3
        %v3237 = vpop.permute.xlu0 %3236
        %3238 = vrot.lane.b32.xlu0 %v3046, 3
        %v3239 = vpop.permute.xlu0 %3238
        %3240 = vrot.lane.b32.xlu0 %v3039, 3
        %v3241 = vpop.permute.xlu0 %3240
        %3242 = vrot.lane.b32.xlu0 %v2995, 3
        %v3243 = vpop.permute.xlu0 %3242
        %3244 = vrot.lane.b32.xlu0 %v3047, 3
        %v3245 = vpop.permute.xlu0 %3244
        %3246 = vrot.lane.b32.xlu0 %v3040, 3
        %v3247 = vpop.permute.xlu0 %3246
        %3248 = vrot.lane.b32.xlu0 %v2998, 3
        %v3249 = vpop.permute.xlu0 %3248
        %3250 = vrot.lane.b32.xlu0 %v3048, 3
        %v3251 = vpop.permute.xlu0 %3250
        %3252 = vrot.lane.b32.xlu0 %v3041, 3
        %v3253 = vpop.permute.xlu0 %3252
        %3254 = vrot.lane.b32.xlu0 %v3001, 3
        %v3255 = vpop.permute.xlu0 %3254
        %3256 = vrot.lane.b32.xlu0 %v3049, 3
        %v3257 = vpop.permute.xlu0 %3256
        %v3282 = vsel %vm391, %v3067, %v3139
        %v3283 = vsel %vm391, %v3069, %v3141
        %v3284 = vsel %vm391, %v3071, %v3143
        %v3285 = vsel %vm391, %v3073, %v3145
        %v3286 = vsel %vm391, %v3075, %v3147
        %v3287 = vsel %vm391, %v3077, %v3149
        %v3288 = vsel %vm391, %v3079, %v3151
        %v3289 = vsel %vm391, %v3081, %v3153
        %v3290 = vsel %vm391, %v3083, %v3155
        %v3291 = vsel %vm391, %v3085, %v3157
        %v3292 = vsel %vm391, %v3087, %v3159
        %v3293 = vsel %vm391, %v3089, %v3161
        %v3294 = vsel %vm391, %v3091, %v3163
        %v3295 = vsel %vm391, %v3093, %v3165
        %v3296 = vsel %vm391, %v3095, %v3167
        %v3297 = vsel %vm391, %v3097, %v3169
        %v3298 = vsel %vm391, %v3099, %v3171
        %v3299 = vsel %vm391, %v3101, %v3173
        %v3300 = vsel %vm391, %v3103, %v3175
        %v3301 = vsel %vm391, %v3105, %v3177
        %v3302 = vsel %vm391, %v3107, %v3179
        %v3303 = vsel %vm391, %v3109, %v3181
        %v3304 = vsel %vm391, %v3111, %v3183
        %v3305 = vsel %vm391, %v3113, %v3185
        %v3306 = vsel %vm404, %v3282, %v3211
        %v3307 = vsel %vm404, %v3283, %v3213
        %v3308 = vsel %vm404, %v3284, %v3215
        %v3309 = vsel %vm404, %v3285, %v3217
        %v3310 = vsel %vm404, %v3286, %v3219
        %v3311 = vsel %vm404, %v3287, %v3221
        %v3312 = vsel %vm404, %v3288, %v3223
        %v3313 = vsel %vm404, %v3289, %v3225
        %v3314 = vsel %vm404, %v3290, %v3227
        %v3315 = vsel %vm404, %v3291, %v3229
        %v3316 = vsel %vm404, %v3292, %v3231
        %v3317 = vsel %vm404, %v3293, %v3233
        %v3318 = vsel %vm404, %v3294, %v3235
        %v3319 = vsel %vm404, %v3295, %v3237
        %v3320 = vsel %vm404, %v3296, %v3239
        %v3321 = vsel %vm404, %v3297, %v3241
        %v3322 = vsel %vm404, %v3298, %v3243
        %v3323 = vsel %vm404, %v3299, %v3245
        %v3324 = vsel %vm404, %v3300, %v3247
        %v3325 = vsel %vm404, %v3301, %v3249
        %v3326 = vsel %vm404, %v3302, %v3251
        %v3327 = vsel %vm404, %v3303, %v3253
        %v3328 = vsel %vm404, %v3304, %v3255
        %v3329 = vsel %vm404, %v3305, %v3257
        %v3330 = vcombine.low %v3306, %v3312
        %v3331 = vcombine.high %v3306, %v3312
        %v3333 = vunpack.c.l.s4 1983009808
        %v3334 = vunpack.c.0.s8 %v3333
        %v3335 = vlaneseq
        %v3336 = vshrl.u32 %v3335, 7
        %v3337 = vsub.s32 %v3334, %v3336
        %v3338 = vrot.slane %v3330, %v3337
        %v3340 = vunpack.c.l.s4 1983009808
        %v3341 = vunpack.c.0.s8 %v3340
        %v3342 = vlaneseq
        %v3343 = vshrl.u32 %v3342, 7
        %v3344 = vsub.s32 %v3341, %v3343
        %v3345 = vrot.slane %v3331, %v3344
        %v3346 = vcombine.low %v3309, %v3315
        %v3347 = vcombine.high %v3309, %v3315
        %v3349 = vunpack.c.l.s4 1983009808
        %v3350 = vunpack.c.0.s8 %v3349
        %v3351 = vlaneseq
        %v3352 = vshrl.u32 %v3351, 7
        %v3353 = vsub.s32 %v3350, %v3352
        %v3354 = vrot.slane %v3346, %v3353
        %v3356 = vunpack.c.l.s4 1983009808
        %v3357 = vunpack.c.0.s8 %v3356
        %v3358 = vlaneseq
        %v3359 = vshrl.u32 %v3358, 7
        %v3360 = vsub.s32 %v3357, %v3359
        %v3361 = vrot.slane %v3347, %v3360
        %v3362 = vcombine.low %v3318, %v3324
        %v3363 = vcombine.high %v3318, %v3324
        %v3365 = vunpack.c.l.s4 1983009808
        %v3366 = vunpack.c.0.s8 %v3365
        %v3367 = vlaneseq
        %v3368 = vshrl.u32 %v3367, 7
        %v3369 = vsub.s32 %v3366, %v3368
        %v3370 = vrot.slane %v3362, %v3369
        %v3372 = vunpack.c.l.s4 1983009808
        %v3373 = vunpack.c.0.s8 %v3372
        %v3374 = vlaneseq
        %v3375 = vshrl.u32 %v3374, 7
        %v3376 = vsub.s32 %v3373, %v3375
        %v3377 = vrot.slane %v3363, %v3376
        %v3378 = vcombine.low %v3321, %v3327
        %v3379 = vcombine.high %v3321, %v3327
        %v3381 = vunpack.c.l.s4 1983009808
        %v3382 = vunpack.c.0.s8 %v3381
        %v3383 = vlaneseq
        %v3384 = vshrl.u32 %v3383, 7
        %v3385 = vsub.s32 %v3382, %v3384
        %v3386 = vrot.slane %v3378, %v3385
        %v3388 = vunpack.c.l.s4 1983009808
        %v3389 = vunpack.c.0.s8 %v3388
        %v3390 = vlaneseq
        %v3391 = vshrl.u32 %v3390, 7
        %v3392 = vsub.s32 %v3389, %v3391
        %v3393 = vrot.slane %v3379, %v3392
        %v3394 = vcombine.low %v3338, %v3354
        %v3395 = vcombine.high %v3338, %v3354
        %v3397 = vunpack.c.l.s4 1934713408
        %v3398 = vunpack.c.0.s8 %v3397
        %v3399 = vlaneseq
        %v3400 = vshrl.u32 %v3399, 7
        %v3401 = vsub.s32 %v3398, %v3400
        %v3402 = vrot.slane %v3394, %v3401
        %v3404 = vunpack.c.l.s4 1934713408
        %v3405 = vunpack.c.0.s8 %v3404
        %v3406 = vlaneseq
        %v3407 = vshrl.u32 %v3406, 7
        %v3408 = vsub.s32 %v3405, %v3407
        %v3409 = vrot.slane %v3395, %v3408
        %v3410 = vcombine.low %v3345, %v3361
        %v3411 = vcombine.high %v3345, %v3361
        %v3413 = vunpack.c.l.s4 1934713408
        %v3414 = vunpack.c.0.s8 %v3413
        %v3415 = vlaneseq
        %v3416 = vshrl.u32 %v3415, 7
        %v3417 = vsub.s32 %v3414, %v3416
        %v3418 = vrot.slane %v3410, %v3417
        %v3420 = vunpack.c.l.s4 1934713408
        %v3421 = vunpack.c.0.s8 %v3420
        %v3422 = vlaneseq
        %v3423 = vshrl.u32 %v3422, 7
        %v3424 = vsub.s32 %v3421, %v3423
        %v3425 = vrot.slane %v3411, %v3424
        %v3426 = vcombine.low %v3370, %v3386
        %v3427 = vcombine.high %v3370, %v3386
        %v3429 = vunpack.c.l.s4 1934713408
        %v3430 = vunpack.c.0.s8 %v3429
        %v3431 = vlaneseq
        %v3432 = vshrl.u32 %v3431, 7
        %v3433 = vsub.s32 %v3430, %v3432
        %v3434 = vrot.slane %v3426, %v3433
        %v3436 = vunpack.c.l.s4 1934713408
        %v3437 = vunpack.c.0.s8 %v3436
        %v3438 = vlaneseq
        %v3439 = vshrl.u32 %v3438, 7
        %v3440 = vsub.s32 %v3437, %v3439
        %v3441 = vrot.slane %v3427, %v3440
        %v3442 = vcombine.low %v3377, %v3393
        %v3443 = vcombine.high %v3377, %v3393
        %v3445 = vunpack.c.l.s4 1934713408
        %v3446 = vunpack.c.0.s8 %v3445
        %v3447 = vlaneseq
        %v3448 = vshrl.u32 %v3447, 7
        %v3449 = vsub.s32 %v3446, %v3448
        %v3450 = vrot.slane %v3442, %v3449
        %v3452 = vunpack.c.l.s4 1934713408
        %v3453 = vunpack.c.0.s8 %v3452
        %v3454 = vlaneseq
        %v3455 = vshrl.u32 %v3454, 7
        %v3456 = vsub.s32 %v3453, %v3455
        %v3457 = vrot.slane %v3443, %v3456
        %v3458 = vcombine.low %v3402, %v3434
        %v3459 = vcombine.high %v3402, %v3434
        %v3460 = vcombine.low %v3409, %v3441
        %v3461 = vcombine.high %v3409, %v3441
        %v3462 = vcombine.low %v3418, %v3450
        %v3463 = vcombine.high %v3418, %v3450
        %v3464 = vcombine.low %v3425, %v3457
        %v3465 = vcombine.high %v3425, %v3457
        %v3466 = vcombine.low %v3307, %v3313
        %v3467 = vcombine.high %v3307, %v3313
        %v3469 = vunpack.c.l.s4 1983009808
        %v3470 = vunpack.c.0.s8 %v3469
        %v3471 = vlaneseq
        %v3472 = vshrl.u32 %v3471, 7
        %v3473 = vsub.s32 %v3470, %v3472
        %v3474 = vrot.slane %v3466, %v3473
        %v3476 = vunpack.c.l.s4 1983009808
        %v3477 = vunpack.c.0.s8 %v3476
        %v3478 = vlaneseq
        %v3479 = vshrl.u32 %v3478, 7
        %v3480 = vsub.s32 %v3477, %v3479
        %v3481 = vrot.slane %v3467, %v3480
        %v3482 = vcombine.low %v3310, %v3316
        %v3483 = vcombine.high %v3310, %v3316
        %v3485 = vunpack.c.l.s4 1983009808
        %v3486 = vunpack.c.0.s8 %v3485
        %v3487 = vlaneseq
        %v3488 = vshrl.u32 %v3487, 7
        %v3489 = vsub.s32 %v3486, %v3488
        %v3490 = vrot.slane %v3482, %v3489
        %v3492 = vunpack.c.l.s4 1983009808
        %v3493 = vunpack.c.0.s8 %v3492
        %v3494 = vlaneseq
        %v3495 = vshrl.u32 %v3494, 7
        %v3496 = vsub.s32 %v3493, %v3495
        %v3497 = vrot.slane %v3483, %v3496
        %v3498 = vcombine.low %v3319, %v3325
        %v3499 = vcombine.high %v3319, %v3325
        %v3501 = vunpack.c.l.s4 1983009808
        %v3502 = vunpack.c.0.s8 %v3501
        %v3503 = vlaneseq
        %v3504 = vshrl.u32 %v3503, 7
        %v3505 = vsub.s32 %v3502, %v3504
        %v3506 = vrot.slane %v3498, %v3505
        %v3508 = vunpack.c.l.s4 1983009808
        %v3509 = vunpack.c.0.s8 %v3508
        %v3510 = vlaneseq
        %v3511 = vshrl.u32 %v3510, 7
        %v3512 = vsub.s32 %v3509, %v3511
        %v3513 = vrot.slane %v3499, %v3512
        %v3514 = vcombine.low %v3322, %v3328
        %v3515 = vcombine.high %v3322, %v3328
        %v3517 = vunpack.c.l.s4 1983009808
        %v3518 = vunpack.c.0.s8 %v3517
        %v3519 = vlaneseq
        %v3520 = vshrl.u32 %v3519, 7
        %v3521 = vsub.s32 %v3518, %v3520
        %v3522 = vrot.slane %v3514, %v3521
        %v3524 = vunpack.c.l.s4 1983009808
        %v3525 = vunpack.c.0.s8 %v3524
        %v3526 = vlaneseq
        %v3527 = vshrl.u32 %v3526, 7
        %v3528 = vsub.s32 %v3525, %v3527
        %v3529 = vrot.slane %v3515, %v3528
        %v3530 = vcombine.low %v3474, %v3490
        %v3531 = vcombine.high %v3474, %v3490
        %v3533 = vunpack.c.l.s4 1934713408
        %v3534 = vunpack.c.0.s8 %v3533
        %v3535 = vlaneseq
        %v3536 = vshrl.u32 %v3535, 7
        %v3537 = vsub.s32 %v3534, %v3536
        %v3538 = vrot.slane %v3530, %v3537
        %v3540 = vunpack.c.l.s4 1934713408
        %v3541 = vunpack.c.0.s8 %v3540
        %v3542 = vlaneseq
        %v3543 = vshrl.u32 %v3542, 7
        %v3544 = vsub.s32 %v3541, %v3543
        %v3545 = vrot.slane %v3531, %v3544
        %v3546 = vcombine.low %v3481, %v3497
        %v3547 = vcombine.high %v3481, %v3497
        %v3549 = vunpack.c.l.s4 1934713408
        %v3550 = vunpack.c.0.s8 %v3549
        %v3551 = vlaneseq
        %v3552 = vshrl.u32 %v3551, 7
        %v3553 = vsub.s32 %v3550, %v3552
        %v3554 = vrot.slane %v3546, %v3553
        %v3556 = vunpack.c.l.s4 1934713408
        %v3557 = vunpack.c.0.s8 %v3556
        %v3558 = vlaneseq
        %v3559 = vshrl.u32 %v3558, 7
        %v3560 = vsub.s32 %v3557, %v3559
        %v3561 = vrot.slane %v3547, %v3560
        %v3562 = vcombine.low %v3506, %v3522
        %v3563 = vcombine.high %v3506, %v3522
        %v3565 = vunpack.c.l.s4 1934713408
        %v3566 = vunpack.c.0.s8 %v3565
        %v3567 = vlaneseq
        %v3568 = vshrl.u32 %v3567, 7
        %v3569 = vsub.s32 %v3566, %v3568
        %v3570 = vrot.slane %v3562, %v3569
        %v3572 = vunpack.c.l.s4 1934713408
        %v3573 = vunpack.c.0.s8 %v3572
        %v3574 = vlaneseq
        %v3575 = vshrl.u32 %v3574, 7
        %v3576 = vsub.s32 %v3573, %v3575
        %v3577 = vrot.slane %v3563, %v3576
        %v3578 = vcombine.low %v3513, %v3529
        %v3579 = vcombine.high %v3513, %v3529
        %v3581 = vunpack.c.l.s4 1934713408
        %v3582 = vunpack.c.0.s8 %v3581
        %v3583 = vlaneseq
        %v3584 = vshrl.u32 %v3583, 7
        %v3585 = vsub.s32 %v3582, %v3584
        %v3586 = vrot.slane %v3578, %v3585
        %v3588 = vunpack.c.l.s4 1934713408
        %v3589 = vunpack.c.0.s8 %v3588
        %v3590 = vlaneseq
        %v3591 = vshrl.u32 %v3590, 7
        %v3592 = vsub.s32 %v3589, %v3591
        %v3593 = vrot.slane %v3579, %v3592
        %v3594 = vcombine.low %v3538, %v3570
        %v3595 = vcombine.high %v3538, %v3570
        %v3596 = vcombine.low %v3545, %v3577
        %v3597 = vcombine.high %v3545, %v3577
        %v3598 = vcombine.low %v3554, %v3586
        %v3599 = vcombine.high %v3554, %v3586
        %v3600 = vcombine.low %v3561, %v3593
        %v3601 = vcombine.high %v3561, %v3593
        %3603 = vrot.lane.b32.xlu0 %v3459, 16
        %v3604 = vpop.permute.xlu0 %3603
        %3607 = vrot.lane.b32.xlu0 %v3460, 32
        %v3608 = vpop.permute.xlu0 %3607
        %3611 = vrot.lane.b32.xlu0 %v3461, 48
        %v3612 = vpop.permute.xlu0 %3611
        %3615 = vrot.lane.b32.xlu0 %v3462, 64
        %v3616 = vpop.permute.xlu0 %3615
        %3619 = vrot.lane.b32.xlu0 %v3463, 80
        %v3620 = vpop.permute.xlu0 %3619
        %3623 = vrot.lane.b32.xlu0 %v3464, 96
        %v3624 = vpop.permute.xlu0 %3623
        %3627 = vrot.lane.b32.xlu0 %v3465, 112
        %v3628 = vpop.permute.xlu0 %3627
        %3631 = vrot.lane.b32.xlu0 %v3595, 16
        %v3632 = vpop.permute.xlu0 %3631
        %3635 = vrot.lane.b32.xlu0 %v3596, 32
        %v3636 = vpop.permute.xlu0 %3635
        %3639 = vrot.lane.b32.xlu0 %v3597, 48
        %v3640 = vpop.permute.xlu0 %3639
        %3643 = vrot.lane.b32.xlu0 %v3598, 64
        %v3644 = vpop.permute.xlu0 %3643
        %3647 = vrot.lane.b32.xlu0 %v3599, 80
        %v3648 = vpop.permute.xlu0 %3647
        %3651 = vrot.lane.b32.xlu0 %v3600, 96
        %v3652 = vpop.permute.xlu0 %3651
        %3655 = vrot.lane.b32.xlu0 %v3601, 112
        %v3656 = vpop.permute.xlu0 %3655
        %v3658 = vsel %vm609, %v3458, %v3604
        %v3659 = vsel %vm611, %v3658, %v3608
        %v3660 = vsel %vm613, %v3659, %v3612
        %v3661 = vsel %vm615, %v3660, %v3616
        %v3662 = vsel %vm617, %v3661, %v3620
        %v3663 = vsel %vm619, %v3662, %v3624
        %v3664 = vsel %vm621, %v3663, %v3628
        %v3665 = vsel %vm609, %v3594, %v3632
        %v3666 = vsel %vm611, %v3665, %v3636
        %v3667 = vsel %vm613, %v3666, %v3640
        %v3668 = vsel %vm615, %v3667, %v3644
        %v3669 = vsel %vm617, %v3668, %v3648
        %v3670 = vsel %vm619, %v3669, %v3652
        %v3671 = vsel %vm621, %v3670, %v3656
        %3688 = vrot.lane.b32.xlu0 %v3306, 127
        %v3689 = vpop.permute.xlu0 %3688
        %3690 = vrot.lane.b32.xlu0 %v3307, 127
        %v3691 = vpop.permute.xlu0 %3690
        %3692 = vrot.lane.b32.xlu0 %v3309, 127
        %v3693 = vpop.permute.xlu0 %3692
        %3694 = vrot.lane.b32.xlu0 %v3310, 127
        %v3695 = vpop.permute.xlu0 %3694
        %3696 = vrot.lane.b32.xlu0 %v3312, 127
        %v3697 = vpop.permute.xlu0 %3696
        %3698 = vrot.lane.b32.xlu0 %v3313, 127
        %v3699 = vpop.permute.xlu0 %3698
        %3700 = vrot.lane.b32.xlu0 %v3315, 127
        %v3701 = vpop.permute.xlu0 %3700
        %3702 = vrot.lane.b32.xlu0 %v3316, 127
        %v3703 = vpop.permute.xlu0 %3702
        %3704 = vrot.lane.b32.xlu0 %v3318, 127
        %v3705 = vpop.permute.xlu0 %3704
        %3706 = vrot.lane.b32.xlu0 %v3319, 127
        %v3707 = vpop.permute.xlu0 %3706
        %3708 = vrot.lane.b32.xlu0 %v3321, 127
        %v3709 = vpop.permute.xlu0 %3708
        %3710 = vrot.lane.b32.xlu0 %v3322, 127
        %v3711 = vpop.permute.xlu0 %3710
        %3712 = vrot.lane.b32.xlu0 %v3324, 127
        %v3713 = vpop.permute.xlu0 %3712
        %3714 = vrot.lane.b32.xlu0 %v3325, 127
        %v3715 = vpop.permute.xlu0 %3714
        %3716 = vrot.lane.b32.xlu0 %v3327, 127
        %v3717 = vpop.permute.xlu0 %3716
        %3718 = vrot.lane.b32.xlu0 %v3328, 127
        %v3719 = vpop.permute.xlu0 %3718
        %v3736 = vcombine.low %v3689, %v3697
        %v3737 = vcombine.high %v3689, %v3697
        %v3739 = vunpack.c.l.s4 1983009808
        %v3740 = vunpack.c.0.s8 %v3739
        %v3741 = vlaneseq
        %v3742 = vshrl.u32 %v3741, 7
        %v3743 = vsub.s32 %v3740, %v3742
        %v3744 = vrot.slane %v3736, %v3743
        %v3746 = vunpack.c.l.s4 1983009808
        %v3747 = vunpack.c.0.s8 %v3746
        %v3748 = vlaneseq
        %v3749 = vshrl.u32 %v3748, 7
        %v3750 = vsub.s32 %v3747, %v3749
        %v3751 = vrot.slane %v3737, %v3750
        %v3752 = vcombine.low %v3693, %v3701
        %v3753 = vcombine.high %v3693, %v3701
        %v3755 = vunpack.c.l.s4 1983009808
        %v3756 = vunpack.c.0.s8 %v3755
        %v3757 = vlaneseq
        %v3758 = vshrl.u32 %v3757, 7
        %v3759 = vsub.s32 %v3756, %v3758
        %v3760 = vrot.slane %v3752, %v3759
        %v3762 = vunpack.c.l.s4 1983009808
        %v3763 = vunpack.c.0.s8 %v3762
        %v3764 = vlaneseq
        %v3765 = vshrl.u32 %v3764, 7
        %v3766 = vsub.s32 %v3763, %v3765
        %v3767 = vrot.slane %v3753, %v3766
        %v3768 = vcombine.low %v3705, %v3713
        %v3769 = vcombine.high %v3705, %v3713
        %v3771 = vunpack.c.l.s4 1983009808
        %v3772 = vunpack.c.0.s8 %v3771
        %v3773 = vlaneseq
        %v3774 = vshrl.u32 %v3773, 7
        %v3775 = vsub.s32 %v3772, %v3774
        %v3776 = vrot.slane %v3768, %v3775
        %v3778 = vunpack.c.l.s4 1983009808
        %v3779 = vunpack.c.0.s8 %v3778
        %v3780 = vlaneseq
        %v3781 = vshrl.u32 %v3780, 7
        %v3782 = vsub.s32 %v3779, %v3781
        %v3783 = vrot.slane %v3769, %v3782
        %v3784 = vcombine.low %v3709, %v3717
        %v3785 = vcombine.high %v3709, %v3717
        %v3787 = vunpack.c.l.s4 1983009808
        %v3788 = vunpack.c.0.s8 %v3787
        %v3789 = vlaneseq
        %v3790 = vshrl.u32 %v3789, 7
        %v3791 = vsub.s32 %v3788, %v3790
        %v3792 = vrot.slane %v3784, %v3791
        %v3794 = vunpack.c.l.s4 1983009808
        %v3795 = vunpack.c.0.s8 %v3794
        %v3796 = vlaneseq
        %v3797 = vshrl.u32 %v3796, 7
        %v3798 = vsub.s32 %v3795, %v3797
        %v3799 = vrot.slane %v3785, %v3798
        %v3800 = vcombine.low %v3744, %v3760
        %v3801 = vcombine.high %v3744, %v3760
        %v3803 = vunpack.c.l.s4 1934713408
        %v3804 = vunpack.c.0.s8 %v3803
        %v3805 = vlaneseq
        %v3806 = vshrl.u32 %v3805, 7
        %v3807 = vsub.s32 %v3804, %v3806
        %v3808 = vrot.slane %v3800, %v3807
        %v3810 = vunpack.c.l.s4 1934713408
        %v3811 = vunpack.c.0.s8 %v3810
        %v3812 = vlaneseq
        %v3813 = vshrl.u32 %v3812, 7
        %v3814 = vsub.s32 %v3811, %v3813
        %v3815 = vrot.slane %v3801, %v3814
        %v3816 = vcombine.low %v3751, %v3767
        %v3817 = vcombine.high %v3751, %v3767
        %v3819 = vunpack.c.l.s4 1934713408
        %v3820 = vunpack.c.0.s8 %v3819
        %v3821 = vlaneseq
        %v3822 = vshrl.u32 %v3821, 7
        %v3823 = vsub.s32 %v3820, %v3822
        %v3824 = vrot.slane %v3816, %v3823
        %v3826 = vunpack.c.l.s4 1934713408
        %v3827 = vunpack.c.0.s8 %v3826
        %v3828 = vlaneseq
        %v3829 = vshrl.u32 %v3828, 7
        %v3830 = vsub.s32 %v3827, %v3829
        %v3831 = vrot.slane %v3817, %v3830
        %v3832 = vcombine.low %v3776, %v3792
        %v3833 = vcombine.high %v3776, %v3792
        %v3835 = vunpack.c.l.s4 1934713408
        %v3836 = vunpack.c.0.s8 %v3835
        %v3837 = vlaneseq
        %v3838 = vshrl.u32 %v3837, 7
        %v3839 = vsub.s32 %v3836, %v3838
        %v3840 = vrot.slane %v3832, %v3839
        %v3842 = vunpack.c.l.s4 1934713408
        %v3843 = vunpack.c.0.s8 %v3842
        %v3844 = vlaneseq
        %v3845 = vshrl.u32 %v3844, 7
        %v3846 = vsub.s32 %v3843, %v3845
        %v3847 = vrot.slane %v3833, %v3846
        %v3848 = vcombine.low %v3783, %v3799
        %v3849 = vcombine.high %v3783, %v3799
        %v3851 = vunpack.c.l.s4 1934713408
        %v3852 = vunpack.c.0.s8 %v3851
        %v3853 = vlaneseq
        %v3854 = vshrl.u32 %v3853, 7
        %v3855 = vsub.s32 %v3852, %v3854
        %v3856 = vrot.slane %v3848, %v3855
        %v3858 = vunpack.c.l.s4 1934713408
        %v3859 = vunpack.c.0.s8 %v3858
        %v3860 = vlaneseq
        %v3861 = vshrl.u32 %v3860, 7
        %v3862 = vsub.s32 %v3859, %v3861
        %v3863 = vrot.slane %v3849, %v3862
        %v3864 = vcombine.low %v3808, %v3840
        %v3865 = vcombine.high %v3808, %v3840
        %v3866 = vcombine.low %v3815, %v3847
        %v3867 = vcombine.high %v3815, %v3847
        %v3868 = vcombine.low %v3824, %v3856
        %v3869 = vcombine.high %v3824, %v3856
        %v3870 = vcombine.low %v3831, %v3863
        %v3871 = vcombine.high %v3831, %v3863
        %v3872 = vcombine.low %v3691, %v3699
        %v3873 = vcombine.high %v3691, %v3699
        %v3875 = vunpack.c.l.s4 1983009808
        %v3876 = vunpack.c.0.s8 %v3875
        %v3877 = vlaneseq
        %v3878 = vshrl.u32 %v3877, 7
        %v3879 = vsub.s32 %v3876, %v3878
        %v3880 = vrot.slane %v3872, %v3879
        %v3882 = vunpack.c.l.s4 1983009808
        %v3883 = vunpack.c.0.s8 %v3882
        %v3884 = vlaneseq
        %v3885 = vshrl.u32 %v3884, 7
        %v3886 = vsub.s32 %v3883, %v3885
        %v3887 = vrot.slane %v3873, %v3886
        %v3888 = vcombine.low %v3695, %v3703
        %v3889 = vcombine.high %v3695, %v3703
        %v3891 = vunpack.c.l.s4 1983009808
        %v3892 = vunpack.c.0.s8 %v3891
        %v3893 = vlaneseq
        %v3894 = vshrl.u32 %v3893, 7
        %v3895 = vsub.s32 %v3892, %v3894
        %v3896 = vrot.slane %v3888, %v3895
        %v3898 = vunpack.c.l.s4 1983009808
        %v3899 = vunpack.c.0.s8 %v3898
        %v3900 = vlaneseq
        %v3901 = vshrl.u32 %v3900, 7
        %v3902 = vsub.s32 %v3899, %v3901
        %v3903 = vrot.slane %v3889, %v3902
        %v3904 = vcombine.low %v3707, %v3715
        %v3905 = vcombine.high %v3707, %v3715
        %v3907 = vunpack.c.l.s4 1983009808
        %v3908 = vunpack.c.0.s8 %v3907
        %v3909 = vlaneseq
        %v3910 = vshrl.u32 %v3909, 7
        %v3911 = vsub.s32 %v3908, %v3910
        %v3912 = vrot.slane %v3904, %v3911
        %v3914 = vunpack.c.l.s4 1983009808
        %v3915 = vunpack.c.0.s8 %v3914
        %v3916 = vlaneseq
        %v3917 = vshrl.u32 %v3916, 7
        %v3918 = vsub.s32 %v3915, %v3917
        %v3919 = vrot.slane %v3905, %v3918
        %v3920 = vcombine.low %v3711, %v3719
        %v3921 = vcombine.high %v3711, %v3719
        %v3923 = vunpack.c.l.s4 1983009808
        %v3924 = vunpack.c.0.s8 %v3923
        %v3925 = vlaneseq
        %v3926 = vshrl.u32 %v3925, 7
        %v3927 = vsub.s32 %v3924, %v3926
        %v3928 = vrot.slane %v3920, %v3927
        %v3930 = vunpack.c.l.s4 1983009808
        %v3931 = vunpack.c.0.s8 %v3930
        %v3932 = vlaneseq
        %v3933 = vshrl.u32 %v3932, 7
        %v3934 = vsub.s32 %v3931, %v3933
        %v3935 = vrot.slane %v3921, %v3934
        %v3936 = vcombine.low %v3880, %v3896
        %v3937 = vcombine.high %v3880, %v3896
        %v3939 = vunpack.c.l.s4 1934713408
        %v3940 = vunpack.c.0.s8 %v3939
        %v3941 = vlaneseq
        %v3942 = vshrl.u32 %v3941, 7
        %v3943 = vsub.s32 %v3940, %v3942
        %v3944 = vrot.slane %v3936, %v3943
        %v3946 = vunpack.c.l.s4 1934713408
        %v3947 = vunpack.c.0.s8 %v3946
        %v3948 = vlaneseq
        %v3949 = vshrl.u32 %v3948, 7
        %v3950 = vsub.s32 %v3947, %v3949
        %v3951 = vrot.slane %v3937, %v3950
        %v3952 = vcombine.low %v3887, %v3903
        %v3953 = vcombine.high %v3887, %v3903
        %v3955 = vunpack.c.l.s4 1934713408
        %v3956 = vunpack.c.0.s8 %v3955
        %v3957 = vlaneseq
        %v3958 = vshrl.u32 %v3957, 7
        %v3959 = vsub.s32 %v3956, %v3958
        %v3960 = vrot.slane %v3952, %v3959
        %v3962 = vunpack.c.l.s4 1934713408
        %v3963 = vunpack.c.0.s8 %v3962
        %v3964 = vlaneseq
        %v3965 = vshrl.u32 %v3964, 7
        %v3966 = vsub.s32 %v3963, %v3965
        %v3967 = vrot.slane %v3953, %v3966
        %v3968 = vcombine.low %v3912, %v3928
        %v3969 = vcombine.high %v3912, %v3928
        %v3971 = vunpack.c.l.s4 1934713408
        %v3972 = vunpack.c.0.s8 %v3971
        %v3973 = vlaneseq
        %v3974 = vshrl.u32 %v3973, 7
        %v3975 = vsub.s32 %v3972, %v3974
        %v3976 = vrot.slane %v3968, %v3975
        %v3978 = vunpack.c.l.s4 1934713408
        %v3979 = vunpack.c.0.s8 %v3978
        %v3980 = vlaneseq
        %v3981 = vshrl.u32 %v3980, 7
        %v3982 = vsub.s32 %v3979, %v3981
        %v3983 = vrot.slane %v3969, %v3982
        %v3984 = vcombine.low %v3919, %v3935
        %v3985 = vcombine.high %v3919, %v3935
        %v3987 = vunpack.c.l.s4 1934713408
        %v3988 = vunpack.c.0.s8 %v3987
        %v3989 = vlaneseq
        %v3990 = vshrl.u32 %v3989, 7
        %v3991 = vsub.s32 %v3988, %v3990
        %v3992 = vrot.slane %v3984, %v3991
        %v3994 = vunpack.c.l.s4 1934713408
        %v3995 = vunpack.c.0.s8 %v3994
        %v3996 = vlaneseq
        %v3997 = vshrl.u32 %v3996, 7
        %v3998 = vsub.s32 %v3995, %v3997
        %v3999 = vrot.slane %v3985, %v3998
        %v4000 = vcombine.low %v3944, %v3976
        %v4001 = vcombine.high %v3944, %v3976
        %v4002 = vcombine.low %v3951, %v3983
        %v4003 = vcombine.high %v3951, %v3983
        %v4004 = vcombine.low %v3960, %v3992
        %v4005 = vcombine.high %v3960, %v3992
        %v4006 = vcombine.low %v3967, %v3999
        %v4007 = vcombine.high %v3967, %v3999
        %4009 = vrot.lane.b32.xlu0 %v3865, 16
        %v4010 = vpop.permute.xlu0 %4009
        %4013 = vrot.lane.b32.xlu0 %v3866, 32
        %v4014 = vpop.permute.xlu0 %4013
        %4017 = vrot.lane.b32.xlu0 %v3867, 48
        %v4018 = vpop.permute.xlu0 %4017
        %4021 = vrot.lane.b32.xlu0 %v3868, 64
        %v4022 = vpop.permute.xlu0 %4021
        %4025 = vrot.lane.b32.xlu0 %v3869, 80
        %v4026 = vpop.permute.xlu0 %4025
        %4029 = vrot.lane.b32.xlu0 %v3870, 96
        %v4030 = vpop.permute.xlu0 %4029
        %4033 = vrot.lane.b32.xlu0 %v3871, 112
        %v4034 = vpop.permute.xlu0 %4033
        %4037 = vrot.lane.b32.xlu0 %v4001, 16
        %v4038 = vpop.permute.xlu0 %4037
        %4041 = vrot.lane.b32.xlu0 %v4002, 32
        %v4042 = vpop.permute.xlu0 %4041
        %4045 = vrot.lane.b32.xlu0 %v4003, 48
        %v4046 = vpop.permute.xlu0 %4045
        %4049 = vrot.lane.b32.xlu0 %v4004, 64
        %v4050 = vpop.permute.xlu0 %4049
        %4053 = vrot.lane.b32.xlu0 %v4005, 80
        %v4054 = vpop.permute.xlu0 %4053
        %4057 = vrot.lane.b32.xlu0 %v4006, 96
        %v4058 = vpop.permute.xlu0 %4057
        %4061 = vrot.lane.b32.xlu0 %v4007, 112
        %v4062 = vpop.permute.xlu0 %4061
        %v4064 = vsel %vm609, %v3864, %v4010
        %v4065 = vsel %vm611, %v4064, %v4014
        %v4066 = vsel %vm613, %v4065, %v4018
        %v4067 = vsel %vm615, %v4066, %v4022
        %v4068 = vsel %vm617, %v4067, %v4026
        %v4069 = vsel %vm619, %v4068, %v4030
        %v4070 = vsel %vm621, %v4069, %v4034
        %v4071 = vsel %vm609, %v4000, %v4038
        %v4072 = vsel %vm611, %v4071, %v4042
        %v4073 = vsel %vm613, %v4072, %v4046
        %v4074 = vsel %vm615, %v4073, %v4050
        %v4075 = vsel %vm617, %v4074, %v4054
        %v4076 = vsel %vm619, %v4075, %v4058
        %v4077 = vsel %vm621, %v4076, %v4062
        %4078 = vrot.lane.b32.xlu0 %v3306, 126
        %v4079 = vpop.permute.xlu0 %4078
        %4080 = vrot.lane.b32.xlu0 %v3307, 126
        %v4081 = vpop.permute.xlu0 %4080
        %4082 = vrot.lane.b32.xlu0 %v3309, 126
        %v4083 = vpop.permute.xlu0 %4082
        %4084 = vrot.lane.b32.xlu0 %v3310, 126
        %v4085 = vpop.permute.xlu0 %4084
        %4086 = vrot.lane.b32.xlu0 %v3312, 126
        %v4087 = vpop.permute.xlu0 %4086
        %4088 = vrot.lane.b32.xlu0 %v3313, 126
        %v4089 = vpop.permute.xlu0 %4088
        %4090 = vrot.lane.b32.xlu0 %v3315, 126
        %v4091 = vpop.permute.xlu0 %4090
        %4092 = vrot.lane.b32.xlu0 %v3316, 126
        %v4093 = vpop.permute.xlu0 %4092
        %4094 = vrot.lane.b32.xlu0 %v3318, 126
        %v4095 = vpop.permute.xlu0 %4094
        %4096 = vrot.lane.b32.xlu0 %v3319, 126
        %v4097 = vpop.permute.xlu0 %4096
        %4098 = vrot.lane.b32.xlu0 %v3321, 126
        %v4099 = vpop.permute.xlu0 %4098
        %4100 = vrot.lane.b32.xlu0 %v3322, 126
        %v4101 = vpop.permute.xlu0 %4100
        %4102 = vrot.lane.b32.xlu0 %v3324, 126
        %v4103 = vpop.permute.xlu0 %4102
        %4104 = vrot.lane.b32.xlu0 %v3325, 126
        %v4105 = vpop.permute.xlu0 %4104
        %4106 = vrot.lane.b32.xlu0 %v3327, 126
        %v4107 = vpop.permute.xlu0 %4106
        %4108 = vrot.lane.b32.xlu0 %v3328, 126
        %v4109 = vpop.permute.xlu0 %4108
        %v4126 = vcombine.low %v4079, %v4087
        %v4127 = vcombine.high %v4079, %v4087
        %v4129 = vunpack.c.l.s4 1983009808
        %v4130 = vunpack.c.0.s8 %v4129
        %v4131 = vlaneseq
        %v4132 = vshrl.u32 %v4131, 7
        %v4133 = vsub.s32 %v4130, %v4132
        %v4134 = vrot.slane %v4126, %v4133
        %v4136 = vunpack.c.l.s4 1983009808
        %v4137 = vunpack.c.0.s8 %v4136
        %v4138 = vlaneseq
        %v4139 = vshrl.u32 %v4138, 7
        %v4140 = vsub.s32 %v4137, %v4139
        %v4141 = vrot.slane %v4127, %v4140
        %v4142 = vcombine.low %v4083, %v4091
        %v4143 = vcombine.high %v4083, %v4091
        %v4145 = vunpack.c.l.s4 1983009808
        %v4146 = vunpack.c.0.s8 %v4145
        %v4147 = vlaneseq
        %v4148 = vshrl.u32 %v4147, 7
        %v4149 = vsub.s32 %v4146, %v4148
        %v4150 = vrot.slane %v4142, %v4149
        %v4152 = vunpack.c.l.s4 1983009808
        %v4153 = vunpack.c.0.s8 %v4152
        %v4154 = vlaneseq
        %v4155 = vshrl.u32 %v4154, 7
        %v4156 = vsub.s32 %v4153, %v4155
        %v4157 = vrot.slane %v4143, %v4156
        %v4158 = vcombine.low %v4095, %v4103
        %v4159 = vcombine.high %v4095, %v4103
        %v4161 = vunpack.c.l.s4 1983009808
        %v4162 = vunpack.c.0.s8 %v4161
        %v4163 = vlaneseq
        %v4164 = vshrl.u32 %v4163, 7
        %v4165 = vsub.s32 %v4162, %v4164
        %v4166 = vrot.slane %v4158, %v4165
        %v4168 = vunpack.c.l.s4 1983009808
        %v4169 = vunpack.c.0.s8 %v4168
        %v4170 = vlaneseq
        %v4171 = vshrl.u32 %v4170, 7
        %v4172 = vsub.s32 %v4169, %v4171
        %v4173 = vrot.slane %v4159, %v4172
        %v4174 = vcombine.low %v4099, %v4107
        %v4175 = vcombine.high %v4099, %v4107
        %v4177 = vunpack.c.l.s4 1983009808
        %v4178 = vunpack.c.0.s8 %v4177
        %v4179 = vlaneseq
        %v4180 = vshrl.u32 %v4179, 7
        %v4181 = vsub.s32 %v4178, %v4180
        %v4182 = vrot.slane %v4174, %v4181
        %v4184 = vunpack.c.l.s4 1983009808
        %v4185 = vunpack.c.0.s8 %v4184
        %v4186 = vlaneseq
        %v4187 = vshrl.u32 %v4186, 7
        %v4188 = vsub.s32 %v4185, %v4187
        %v4189 = vrot.slane %v4175, %v4188
        %v4190 = vcombine.low %v4134, %v4150
        %v4191 = vcombine.high %v4134, %v4150
        %v4193 = vunpack.c.l.s4 1934713408
        %v4194 = vunpack.c.0.s8 %v4193
        %v4195 = vlaneseq
        %v4196 = vshrl.u32 %v4195, 7
        %v4197 = vsub.s32 %v4194, %v4196
        %v4198 = vrot.slane %v4190, %v4197
        %v4200 = vunpack.c.l.s4 1934713408
        %v4201 = vunpack.c.0.s8 %v4200
        %v4202 = vlaneseq
        %v4203 = vshrl.u32 %v4202, 7
        %v4204 = vsub.s32 %v4201, %v4203
        %v4205 = vrot.slane %v4191, %v4204
        %v4206 = vcombine.low %v4141, %v4157
        %v4207 = vcombine.high %v4141, %v4157
        %v4209 = vunpack.c.l.s4 1934713408
        %v4210 = vunpack.c.0.s8 %v4209
        %v4211 = vlaneseq
        %v4212 = vshrl.u32 %v4211, 7
        %v4213 = vsub.s32 %v4210, %v4212
        %v4214 = vrot.slane %v4206, %v4213
        %v4216 = vunpack.c.l.s4 1934713408
        %v4217 = vunpack.c.0.s8 %v4216
        %v4218 = vlaneseq
        %v4219 = vshrl.u32 %v4218, 7
        %v4220 = vsub.s32 %v4217, %v4219
        %v4221 = vrot.slane %v4207, %v4220
        %v4222 = vcombine.low %v4166, %v4182
        %v4223 = vcombine.high %v4166, %v4182
        %v4225 = vunpack.c.l.s4 1934713408
        %v4226 = vunpack.c.0.s8 %v4225
        %v4227 = vlaneseq
        %v4228 = vshrl.u32 %v4227, 7
        %v4229 = vsub.s32 %v4226, %v4228
        %v4230 = vrot.slane %v4222, %v4229
        %v4232 = vunpack.c.l.s4 1934713408
        %v4233 = vunpack.c.0.s8 %v4232
        %v4234 = vlaneseq
        %v4235 = vshrl.u32 %v4234, 7
        %v4236 = vsub.s32 %v4233, %v4235
        %v4237 = vrot.slane %v4223, %v4236
        %v4238 = vcombine.low %v4173, %v4189
        %v4239 = vcombine.high %v4173, %v4189
        %v4241 = vunpack.c.l.s4 1934713408
        %v4242 = vunpack.c.0.s8 %v4241
        %v4243 = vlaneseq
        %v4244 = vshrl.u32 %v4243, 7
        %v4245 = vsub.s32 %v4242, %v4244
        %v4246 = vrot.slane %v4238, %v4245
        %v4248 = vunpack.c.l.s4 1934713408
        %v4249 = vunpack.c.0.s8 %v4248
        %v4250 = vlaneseq
        %v4251 = vshrl.u32 %v4250, 7
        %v4252 = vsub.s32 %v4249, %v4251
        %v4253 = vrot.slane %v4239, %v4252
        %v4254 = vcombine.low %v4198, %v4230
        %v4255 = vcombine.high %v4198, %v4230
        %v4256 = vcombine.low %v4205, %v4237
        %v4257 = vcombine.high %v4205, %v4237
        %v4258 = vcombine.low %v4214, %v4246
        %v4259 = vcombine.high %v4214, %v4246
        %v4260 = vcombine.low %v4221, %v4253
        %v4261 = vcombine.high %v4221, %v4253
        %v4262 = vcombine.low %v4081, %v4089
        %v4263 = vcombine.high %v4081, %v4089
        %v4265 = vunpack.c.l.s4 1983009808
        %v4266 = vunpack.c.0.s8 %v4265
        %v4267 = vlaneseq
        %v4268 = vshrl.u32 %v4267, 7
        %v4269 = vsub.s32 %v4266, %v4268
        %v4270 = vrot.slane %v4262, %v4269
        %v4272 = vunpack.c.l.s4 1983009808
        %v4273 = vunpack.c.0.s8 %v4272
        %v4274 = vlaneseq
        %v4275 = vshrl.u32 %v4274, 7
        %v4276 = vsub.s32 %v4273, %v4275
        %v4277 = vrot.slane %v4263, %v4276
        %v4278 = vcombine.low %v4085, %v4093
        %v4279 = vcombine.high %v4085, %v4093
        %v4281 = vunpack.c.l.s4 1983009808
        %v4282 = vunpack.c.0.s8 %v4281
        %v4283 = vlaneseq
        %v4284 = vshrl.u32 %v4283, 7
        %v4285 = vsub.s32 %v4282, %v4284
        %v4286 = vrot.slane %v4278, %v4285
        %v4288 = vunpack.c.l.s4 1983009808
        %v4289 = vunpack.c.0.s8 %v4288
        %v4290 = vlaneseq
        %v4291 = vshrl.u32 %v4290, 7
        %v4292 = vsub.s32 %v4289, %v4291
        %v4293 = vrot.slane %v4279, %v4292
        %v4294 = vcombine.low %v4097, %v4105
        %v4295 = vcombine.high %v4097, %v4105
        %v4297 = vunpack.c.l.s4 1983009808
        %v4298 = vunpack.c.0.s8 %v4297
        %v4299 = vlaneseq
        %v4300 = vshrl.u32 %v4299, 7
        %v4301 = vsub.s32 %v4298, %v4300
        %v4302 = vrot.slane %v4294, %v4301
        %v4304 = vunpack.c.l.s4 1983009808
        %v4305 = vunpack.c.0.s8 %v4304
        %v4306 = vlaneseq
        %v4307 = vshrl.u32 %v4306, 7
        %v4308 = vsub.s32 %v4305, %v4307
        %v4309 = vrot.slane %v4295, %v4308
        %v4310 = vcombine.low %v4101, %v4109
        %v4311 = vcombine.high %v4101, %v4109
        %v4313 = vunpack.c.l.s4 1983009808
        %v4314 = vunpack.c.0.s8 %v4313
        %v4315 = vlaneseq
        %v4316 = vshrl.u32 %v4315, 7
        %v4317 = vsub.s32 %v4314, %v4316
        %v4318 = vrot.slane %v4310, %v4317
        %v4320 = vunpack.c.l.s4 1983009808
        %v4321 = vunpack.c.0.s8 %v4320
        %v4322 = vlaneseq
        %v4323 = vshrl.u32 %v4322, 7
        %v4324 = vsub.s32 %v4321, %v4323
        %v4325 = vrot.slane %v4311, %v4324
        %v4326 = vcombine.low %v4270, %v4286
        %v4327 = vcombine.high %v4270, %v4286
        %v4329 = vunpack.c.l.s4 1934713408
        %v4330 = vunpack.c.0.s8 %v4329
        %v4331 = vlaneseq
        %v4332 = vshrl.u32 %v4331, 7
        %v4333 = vsub.s32 %v4330, %v4332
        %v4334 = vrot.slane %v4326, %v4333
        %v4336 = vunpack.c.l.s4 1934713408
        %v4337 = vunpack.c.0.s8 %v4336
        %v4338 = vlaneseq
        %v4339 = vshrl.u32 %v4338, 7
        %v4340 = vsub.s32 %v4337, %v4339
        %v4341 = vrot.slane %v4327, %v4340
        %v4342 = vcombine.low %v4277, %v4293
        %v4343 = vcombine.high %v4277, %v4293
        %v4345 = vunpack.c.l.s4 1934713408
        %v4346 = vunpack.c.0.s8 %v4345
        %v4347 = vlaneseq
        %v4348 = vshrl.u32 %v4347, 7
        %v4349 = vsub.s32 %v4346, %v4348
        %v4350 = vrot.slane %v4342, %v4349
        %v4352 = vunpack.c.l.s4 1934713408
        %v4353 = vunpack.c.0.s8 %v4352
        %v4354 = vlaneseq
        %v4355 = vshrl.u32 %v4354, 7
        %v4356 = vsub.s32 %v4353, %v4355
        %v4357 = vrot.slane %v4343, %v4356
        %v4358 = vcombine.low %v4302, %v4318
        %v4359 = vcombine.high %v4302, %v4318
        %v4361 = vunpack.c.l.s4 1934713408
        %v4362 = vunpack.c.0.s8 %v4361
        %v4363 = vlaneseq
        %v4364 = vshrl.u32 %v4363, 7
        %v4365 = vsub.s32 %v4362, %v4364
        %v4366 = vrot.slane %v4358, %v4365
        %v4368 = vunpack.c.l.s4 1934713408
        %v4369 = vunpack.c.0.s8 %v4368
        %v4370 = vlaneseq
        %v4371 = vshrl.u32 %v4370, 7
        %v4372 = vsub.s32 %v4369, %v4371
        %v4373 = vrot.slane %v4359, %v4372
        %v4374 = vcombine.low %v4309, %v4325
        %v4375 = vcombine.high %v4309, %v4325
        %v4377 = vunpack.c.l.s4 1934713408
        %v4378 = vunpack.c.0.s8 %v4377
        %v4379 = vlaneseq
        %v4380 = vshrl.u32 %v4379, 7
        %v4381 = vsub.s32 %v4378, %v4380
        %v4382 = vrot.slane %v4374, %v4381
        %v4384 = vunpack.c.l.s4 1934713408
        %v4385 = vunpack.c.0.s8 %v4384
        %v4386 = vlaneseq
        %v4387 = vshrl.u32 %v4386, 7
        %v4388 = vsub.s32 %v4385, %v4387
        %v4389 = vrot.slane %v4375, %v4388
        %v4390 = vcombine.low %v4334, %v4366
        %v4391 = vcombine.high %v4334, %v4366
        %v4392 = vcombine.low %v4341, %v4373
        %v4393 = vcombine.high %v4341, %v4373
        %v4394 = vcombine.low %v4350, %v4382
        %v4395 = vcombine.high %v4350, %v4382
        %v4396 = vcombine.low %v4357, %v4389
        %v4397 = vcombine.high %v4357, %v4389
        %4399 = vrot.lane.b32.xlu0 %v4255, 16
        %v4400 = vpop.permute.xlu0 %4399
        %4403 = vrot.lane.b32.xlu0 %v4256, 32
        %v4404 = vpop.permute.xlu0 %4403
        %4407 = vrot.lane.b32.xlu0 %v4257, 48
        %v4408 = vpop.permute.xlu0 %4407
        %4411 = vrot.lane.b32.xlu0 %v4258, 64
        %v4412 = vpop.permute.xlu0 %4411
        %4415 = vrot.lane.b32.xlu0 %v4259, 80
        %v4416 = vpop.permute.xlu0 %4415
        %4419 = vrot.lane.b32.xlu0 %v4260, 96
        %v4420 = vpop.permute.xlu0 %4419
        %4423 = vrot.lane.b32.xlu0 %v4261, 112
        %v4424 = vpop.permute.xlu0 %4423
        %4427 = vrot.lane.b32.xlu0 %v4391, 16
        %v4428 = vpop.permute.xlu0 %4427
        %4431 = vrot.lane.b32.xlu0 %v4392, 32
        %v4432 = vpop.permute.xlu0 %4431
        %4435 = vrot.lane.b32.xlu0 %v4393, 48
        %v4436 = vpop.permute.xlu0 %4435
        %4439 = vrot.lane.b32.xlu0 %v4394, 64
        %v4440 = vpop.permute.xlu0 %4439
        %4443 = vrot.lane.b32.xlu0 %v4395, 80
        %v4444 = vpop.permute.xlu0 %4443
        %4447 = vrot.lane.b32.xlu0 %v4396, 96
        %v4448 = vpop.permute.xlu0 %4447
        %4451 = vrot.lane.b32.xlu0 %v4397, 112
        %v4452 = vpop.permute.xlu0 %4451
        %v4454 = vsel %vm609, %v4254, %v4400
        %v4455 = vsel %vm611, %v4454, %v4404
        %v4456 = vsel %vm613, %v4455, %v4408
        %v4457 = vsel %vm615, %v4456, %v4412
        %v4458 = vsel %vm617, %v4457, %v4416
        %v4459 = vsel %vm619, %v4458, %v4420
        %v4460 = vsel %vm621, %v4459, %v4424
        %v4461 = vsel %vm609, %v4390, %v4428
        %v4462 = vsel %vm611, %v4461, %v4432
        %v4463 = vsel %vm613, %v4462, %v4436
        %v4464 = vsel %vm615, %v4463, %v4440
        %v4465 = vsel %vm617, %v4464, %v4444
        %v4466 = vsel %vm619, %v4465, %v4448
        %v4467 = vsel %vm621, %v4466, %v4452
        %v4476 = vrot.slane %v3306, 1
        %v4477 = vrot.slane %v3307, 1
        %v4478 = vsel %vm1102, %v4476, %v4477
        %v4479 = vrot.slane %v3308, 1
        %v4480 = vsel %vm1102, %v4477, %v4479
        %v4481 = vrot.slane %v3309, 1
        %v4482 = vrot.slane %v3310, 1
        %v4483 = vsel %vm1102, %v4481, %v4482
        %v4484 = vrot.slane %v3311, 1
        %v4485 = vsel %vm1102, %v4482, %v4484
        %v4486 = vrot.slane %v3312, 1
        %v4487 = vrot.slane %v3313, 1
        %v4488 = vsel %vm1102, %v4486, %v4487
        %v4489 = vrot.slane %v3314, 1
        %v4490 = vsel %vm1102, %v4487, %v4489
        %v4491 = vrot.slane %v3315, 1
        %v4492 = vrot.slane %v3316, 1
        %v4493 = vsel %vm1102, %v4491, %v4492
        %v4494 = vrot.slane %v3317, 1
        %v4495 = vsel %vm1102, %v4492, %v4494
        %v4496 = vrot.slane %v3318, 1
        %v4497 = vrot.slane %v3319, 1
        %v4498 = vsel %vm1102, %v4496, %v4497
        %v4499 = vrot.slane %v3320, 1
        %v4500 = vsel %vm1102, %v4497, %v4499
        %v4501 = vrot.slane %v3321, 1
        %v4502 = vrot.slane %v3322, 1
        %v4503 = vsel %vm1102, %v4501, %v4502
        %v4504 = vrot.slane %v3323, 1
        %v4505 = vsel %vm1102, %v4502, %v4504
        %v4506 = vrot.slane %v3324, 1
        %v4507 = vrot.slane %v3325, 1
        %v4508 = vsel %vm1102, %v4506, %v4507
        %v4509 = vrot.slane %v3326, 1
        %v4510 = vsel %vm1102, %v4507, %v4509
        %v4511 = vrot.slane %v3327, 1
        %v4512 = vrot.slane %v3328, 1
        %v4513 = vsel %vm1102, %v4511, %v4512
        %v4514 = vrot.slane %v3329, 1
        %v4515 = vsel %vm1102, %v4512, %v4514
        %v4532 = vcombine.low %v4478, %v4488
        %v4533 = vcombine.high %v4478, %v4488
        %v4535 = vunpack.c.l.s4 1983009808
        %v4536 = vunpack.c.0.s8 %v4535
        %v4537 = vlaneseq
        %v4538 = vshrl.u32 %v4537, 7
        %v4539 = vsub.s32 %v4536, %v4538
        %v4540 = vrot.slane %v4532, %v4539
        %v4542 = vunpack.c.l.s4 1983009808
        %v4543 = vunpack.c.0.s8 %v4542
        %v4544 = vlaneseq
        %v4545 = vshrl.u32 %v4544, 7
        %v4546 = vsub.s32 %v4543, %v4545
        %v4547 = vrot.slane %v4533, %v4546
        %v4548 = vcombine.low %v4483, %v4493
        %v4549 = vcombine.high %v4483, %v4493
        %v4551 = vunpack.c.l.s4 1983009808
        %v4552 = vunpack.c.0.s8 %v4551
        %v4553 = vlaneseq
        %v4554 = vshrl.u32 %v4553, 7
        %v4555 = vsub.s32 %v4552, %v4554
        %v4556 = vrot.slane %v4548, %v4555
        %v4558 = vunpack.c.l.s4 1983009808
        %v4559 = vunpack.c.0.s8 %v4558
        %v4560 = vlaneseq
        %v4561 = vshrl.u32 %v4560, 7
        %v4562 = vsub.s32 %v4559, %v4561
        %v4563 = vrot.slane %v4549, %v4562
        %v4564 = vcombine.low %v4498, %v4508
        %v4565 = vcombine.high %v4498, %v4508
        %v4567 = vunpack.c.l.s4 1983009808
        %v4568 = vunpack.c.0.s8 %v4567
        %v4569 = vlaneseq
        %v4570 = vshrl.u32 %v4569, 7
        %v4571 = vsub.s32 %v4568, %v4570
        %v4572 = vrot.slane %v4564, %v4571
        %v4574 = vunpack.c.l.s4 1983009808
        %v4575 = vunpack.c.0.s8 %v4574
        %v4576 = vlaneseq
        %v4577 = vshrl.u32 %v4576, 7
        %v4578 = vsub.s32 %v4575, %v4577
        %v4579 = vrot.slane %v4565, %v4578
        %v4580 = vcombine.low %v4503, %v4513
        %v4581 = vcombine.high %v4503, %v4513
        %v4583 = vunpack.c.l.s4 1983009808
        %v4584 = vunpack.c.0.s8 %v4583
        %v4585 = vlaneseq
        %v4586 = vshrl.u32 %v4585, 7
        %v4587 = vsub.s32 %v4584, %v4586
        %v4588 = vrot.slane %v4580, %v4587
        %v4590 = vunpack.c.l.s4 1983009808
        %v4591 = vunpack.c.0.s8 %v4590
        %v4592 = vlaneseq
        %v4593 = vshrl.u32 %v4592, 7
        %v4594 = vsub.s32 %v4591, %v4593
        %v4595 = vrot.slane %v4581, %v4594
        %v4596 = vcombine.low %v4540, %v4556
        %v4597 = vcombine.high %v4540, %v4556
        %v4599 = vunpack.c.l.s4 1934713408
        %v4600 = vunpack.c.0.s8 %v4599
        %v4601 = vlaneseq
        %v4602 = vshrl.u32 %v4601, 7
        %v4603 = vsub.s32 %v4600, %v4602
        %v4604 = vrot.slane %v4596, %v4603
        %v4606 = vunpack.c.l.s4 1934713408
        %v4607 = vunpack.c.0.s8 %v4606
        %v4608 = vlaneseq
        %v4609 = vshrl.u32 %v4608, 7
        %v4610 = vsub.s32 %v4607, %v4609
        %v4611 = vrot.slane %v4597, %v4610
        %v4612 = vcombine.low %v4547, %v4563
        %v4613 = vcombine.high %v4547, %v4563
        %v4615 = vunpack.c.l.s4 1934713408
        %v4616 = vunpack.c.0.s8 %v4615
        %v4617 = vlaneseq
        %v4618 = vshrl.u32 %v4617, 7
        %v4619 = vsub.s32 %v4616, %v4618
        %v4620 = vrot.slane %v4612, %v4619
        %v4622 = vunpack.c.l.s4 1934713408
        %v4623 = vunpack.c.0.s8 %v4622
        %v4624 = vlaneseq
        %v4625 = vshrl.u32 %v4624, 7
        %v4626 = vsub.s32 %v4623, %v4625
        %v4627 = vrot.slane %v4613, %v4626
        %v4628 = vcombine.low %v4572, %v4588
        %v4629 = vcombine.high %v4572, %v4588
        %v4631 = vunpack.c.l.s4 1934713408
        %v4632 = vunpack.c.0.s8 %v4631
        %v4633 = vlaneseq
        %v4634 = vshrl.u32 %v4633, 7
        %v4635 = vsub.s32 %v4632, %v4634
        %v4636 = vrot.slane %v4628, %v4635
        %v4638 = vunpack.c.l.s4 1934713408
        %v4639 = vunpack.c.0.s8 %v4638
        %v4640 = vlaneseq
        %v4641 = vshrl.u32 %v4640, 7
        %v4642 = vsub.s32 %v4639, %v4641
        %v4643 = vrot.slane %v4629, %v4642
        %v4644 = vcombine.low %v4579, %v4595
        %v4645 = vcombine.high %v4579, %v4595
        %v4647 = vunpack.c.l.s4 1934713408
        %v4648 = vunpack.c.0.s8 %v4647
        %v4649 = vlaneseq
        %v4650 = vshrl.u32 %v4649, 7
        %v4651 = vsub.s32 %v4648, %v4650
        %v4652 = vrot.slane %v4644, %v4651
        %v4654 = vunpack.c.l.s4 1934713408
        %v4655 = vunpack.c.0.s8 %v4654
        %v4656 = vlaneseq
        %v4657 = vshrl.u32 %v4656, 7
        %v4658 = vsub.s32 %v4655, %v4657
        %v4659 = vrot.slane %v4645, %v4658
        %v4660 = vcombine.low %v4604, %v4636
        %v4661 = vcombine.high %v4604, %v4636
        %v4662 = vcombine.low %v4611, %v4643
        %v4663 = vcombine.high %v4611, %v4643
        %v4664 = vcombine.low %v4620, %v4652
        %v4665 = vcombine.high %v4620, %v4652
        %v4666 = vcombine.low %v4627, %v4659
        %v4667 = vcombine.high %v4627, %v4659
        %v4668 = vcombine.low %v4480, %v4490
        %v4669 = vcombine.high %v4480, %v4490
        %v4671 = vunpack.c.l.s4 1983009808
        %v4672 = vunpack.c.0.s8 %v4671
        %v4673 = vlaneseq
        %v4674 = vshrl.u32 %v4673, 7
        %v4675 = vsub.s32 %v4672, %v4674
        %v4676 = vrot.slane %v4668, %v4675
        %v4678 = vunpack.c.l.s4 1983009808
        %v4679 = vunpack.c.0.s8 %v4678
        %v4680 = vlaneseq
        %v4681 = vshrl.u32 %v4680, 7
        %v4682 = vsub.s32 %v4679, %v4681
        %v4683 = vrot.slane %v4669, %v4682
        %v4684 = vcombine.low %v4485, %v4495
        %v4685 = vcombine.high %v4485, %v4495
        %v4687 = vunpack.c.l.s4 1983009808
        %v4688 = vunpack.c.0.s8 %v4687
        %v4689 = vlaneseq
        %v4690 = vshrl.u32 %v4689, 7
        %v4691 = vsub.s32 %v4688, %v4690
        %v4692 = vrot.slane %v4684, %v4691
        %v4694 = vunpack.c.l.s4 1983009808
        %v4695 = vunpack.c.0.s8 %v4694
        %v4696 = vlaneseq
        %v4697 = vshrl.u32 %v4696, 7
        %v4698 = vsub.s32 %v4695, %v4697
        %v4699 = vrot.slane %v4685, %v4698
        %v4700 = vcombine.low %v4500, %v4510
        %v4701 = vcombine.high %v4500, %v4510
        %v4703 = vunpack.c.l.s4 1983009808
        %v4704 = vunpack.c.0.s8 %v4703
        %v4705 = vlaneseq
        %v4706 = vshrl.u32 %v4705, 7
        %v4707 = vsub.s32 %v4704, %v4706
        %v4708 = vrot.slane %v4700, %v4707
        %v4710 = vunpack.c.l.s4 1983009808
        %v4711 = vunpack.c.0.s8 %v4710
        %v4712 = vlaneseq
        %v4713 = vshrl.u32 %v4712, 7
        %v4714 = vsub.s32 %v4711, %v4713
        %v4715 = vrot.slane %v4701, %v4714
        %v4716 = vcombine.low %v4505, %v4515
        %v4717 = vcombine.high %v4505, %v4515
        %v4719 = vunpack.c.l.s4 1983009808
        %v4720 = vunpack.c.0.s8 %v4719
        %v4721 = vlaneseq
        %v4722 = vshrl.u32 %v4721, 7
        %v4723 = vsub.s32 %v4720, %v4722
        %v4724 = vrot.slane %v4716, %v4723
        %v4726 = vunpack.c.l.s4 1983009808
        %v4727 = vunpack.c.0.s8 %v4726
        %v4728 = vlaneseq
        %v4729 = vshrl.u32 %v4728, 7
        %v4730 = vsub.s32 %v4727, %v4729
        %v4731 = vrot.slane %v4717, %v4730
        %v4732 = vcombine.low %v4676, %v4692
        %v4733 = vcombine.high %v4676, %v4692
        %v4735 = vunpack.c.l.s4 1934713408
        %v4736 = vunpack.c.0.s8 %v4735
        %v4737 = vlaneseq
        %v4738 = vshrl.u32 %v4737, 7
        %v4739 = vsub.s32 %v4736, %v4738
        %v4740 = vrot.slane %v4732, %v4739
        %v4742 = vunpack.c.l.s4 1934713408
        %v4743 = vunpack.c.0.s8 %v4742
        %v4744 = vlaneseq
        %v4745 = vshrl.u32 %v4744, 7
        %v4746 = vsub.s32 %v4743, %v4745
        %v4747 = vrot.slane %v4733, %v4746
        %v4748 = vcombine.low %v4683, %v4699
        %v4749 = vcombine.high %v4683, %v4699
        %v4751 = vunpack.c.l.s4 1934713408
        %v4752 = vunpack.c.0.s8 %v4751
        %v4753 = vlaneseq
        %v4754 = vshrl.u32 %v4753, 7
        %v4755 = vsub.s32 %v4752, %v4754
        %v4756 = vrot.slane %v4748, %v4755
        %v4758 = vunpack.c.l.s4 1934713408
        %v4759 = vunpack.c.0.s8 %v4758
        %v4760 = vlaneseq
        %v4761 = vshrl.u32 %v4760, 7
        %v4762 = vsub.s32 %v4759, %v4761
        %v4763 = vrot.slane %v4749, %v4762
        %v4764 = vcombine.low %v4708, %v4724
        %v4765 = vcombine.high %v4708, %v4724
        %v4767 = vunpack.c.l.s4 1934713408
        %v4768 = vunpack.c.0.s8 %v4767
        %v4769 = vlaneseq
        %v4770 = vshrl.u32 %v4769, 7
        %v4771 = vsub.s32 %v4768, %v4770
        %v4772 = vrot.slane %v4764, %v4771
        %v4774 = vunpack.c.l.s4 1934713408
        %v4775 = vunpack.c.0.s8 %v4774
        %v4776 = vlaneseq
        %v4777 = vshrl.u32 %v4776, 7
        %v4778 = vsub.s32 %v4775, %v4777
        %v4779 = vrot.slane %v4765, %v4778
        %v4780 = vcombine.low %v4715, %v4731
        %v4781 = vcombine.high %v4715, %v4731
        %v4783 = vunpack.c.l.s4 1934713408
        %v4784 = vunpack.c.0.s8 %v4783
        %v4785 = vlaneseq
        %v4786 = vshrl.u32 %v4785, 7
        %v4787 = vsub.s32 %v4784, %v4786
        %v4788 = vrot.slane %v4780, %v4787
        %v4790 = vunpack.c.l.s4 1934713408
        %v4791 = vunpack.c.0.s8 %v4790
        %v4792 = vlaneseq
        %v4793 = vshrl.u32 %v4792, 7
        %v4794 = vsub.s32 %v4791, %v4793
        %v4795 = vrot.slane %v4781, %v4794
        %v4796 = vcombine.low %v4740, %v4772
        %v4797 = vcombine.high %v4740, %v4772
        %v4798 = vcombine.low %v4747, %v4779
        %v4799 = vcombine.high %v4747, %v4779
        %v4800 = vcombine.low %v4756, %v4788
        %v4801 = vcombine.high %v4756, %v4788
        %v4802 = vcombine.low %v4763, %v4795
        %v4803 = vcombine.high %v4763, %v4795
        %4805 = vrot.lane.b32.xlu0 %v4661, 16
        %v4806 = vpop.permute.xlu0 %4805
        %4809 = vrot.lane.b32.xlu0 %v4662, 32
        %v4810 = vpop.permute.xlu0 %4809
        %4813 = vrot.lane.b32.xlu0 %v4663, 48
        %v4814 = vpop.permute.xlu0 %4813
        %4817 = vrot.lane.b32.xlu0 %v4664, 64
        %v4818 = vpop.permute.xlu0 %4817
        %4821 = vrot.lane.b32.xlu0 %v4665, 80
        %v4822 = vpop.permute.xlu0 %4821
        %4825 = vrot.lane.b32.xlu0 %v4666, 96
        %v4826 = vpop.permute.xlu0 %4825
        %4829 = vrot.lane.b32.xlu0 %v4667, 112
        %v4830 = vpop.permute.xlu0 %4829
        %4833 = vrot.lane.b32.xlu0 %v4797, 16
        %v4834 = vpop.permute.xlu0 %4833
        %4837 = vrot.lane.b32.xlu0 %v4798, 32
        %v4838 = vpop.permute.xlu0 %4837
        %4841 = vrot.lane.b32.xlu0 %v4799, 48
        %v4842 = vpop.permute.xlu0 %4841
        %4845 = vrot.lane.b32.xlu0 %v4800, 64
        %v4846 = vpop.permute.xlu0 %4845
        %4849 = vrot.lane.b32.xlu0 %v4801, 80
        %v4850 = vpop.permute.xlu0 %4849
        %4853 = vrot.lane.b32.xlu0 %v4802, 96
        %v4854 = vpop.permute.xlu0 %4853
        %4857 = vrot.lane.b32.xlu0 %v4803, 112
        %v4858 = vpop.permute.xlu0 %4857
        %v4860 = vsel %vm609, %v4660, %v4806
        %v4861 = vsel %vm611, %v4860, %v4810
        %v4862 = vsel %vm613, %v4861, %v4814
        %v4863 = vsel %vm615, %v4862, %v4818
        %v4864 = vsel %vm617, %v4863, %v4822
        %v4865 = vsel %vm619, %v4864, %v4826
        %v4866 = vsel %vm621, %v4865, %v4830
        %v4867 = vsel %vm609, %v4796, %v4834
        %v4868 = vsel %vm611, %v4867, %v4838
        %v4869 = vsel %vm613, %v4868, %v4842
        %v4870 = vsel %vm615, %v4869, %v4846
        %v4871 = vsel %vm617, %v4870, %v4850
        %v4872 = vsel %vm619, %v4871, %v4854
        %v4873 = vsel %vm621, %v4872, %v4858
        %4874 = vrot.lane.b32.xlu0 %v4478, 127
        %v4875 = vpop.permute.xlu0 %4874
        %4876 = vrot.lane.b32.xlu0 %v4480, 127
        %v4877 = vpop.permute.xlu0 %4876
        %4878 = vrot.lane.b32.xlu0 %v4483, 127
        %v4879 = vpop.permute.xlu0 %4878
        %4880 = vrot.lane.b32.xlu0 %v4485, 127
        %v4881 = vpop.permute.xlu0 %4880
        %4882 = vrot.lane.b32.xlu0 %v4488, 127
        %v4883 = vpop.permute.xlu0 %4882
        %4884 = vrot.lane.b32.xlu0 %v4490, 127
        %v4885 = vpop.permute.xlu0 %4884
        %4886 = vrot.lane.b32.xlu0 %v4493, 127
        %v4887 = vpop.permute.xlu0 %4886
        %4888 = vrot.lane.b32.xlu0 %v4495, 127
        %v4889 = vpop.permute.xlu0 %4888
        %4890 = vrot.lane.b32.xlu0 %v4498, 127
        %v4891 = vpop.permute.xlu0 %4890
        %4892 = vrot.lane.b32.xlu0 %v4500, 127
        %v4893 = vpop.permute.xlu0 %4892
        %4894 = vrot.lane.b32.xlu0 %v4503, 127
        %v4895 = vpop.permute.xlu0 %4894
        %4896 = vrot.lane.b32.xlu0 %v4505, 127
        %v4897 = vpop.permute.xlu0 %4896
        %4898 = vrot.lane.b32.xlu0 %v4508, 127
        %v4899 = vpop.permute.xlu0 %4898
        %4900 = vrot.lane.b32.xlu0 %v4510, 127
        %v4901 = vpop.permute.xlu0 %4900
        %4902 = vrot.lane.b32.xlu0 %v4513, 127
        %v4903 = vpop.permute.xlu0 %4902
        %4904 = vrot.lane.b32.xlu0 %v4515, 127
        %v4905 = vpop.permute.xlu0 %4904
        %v4922 = vcombine.low %v4875, %v4883
        %v4923 = vcombine.high %v4875, %v4883
        %v4925 = vunpack.c.l.s4 1983009808
        %v4926 = vunpack.c.0.s8 %v4925
        %v4927 = vlaneseq
        %v4928 = vshrl.u32 %v4927, 7
        %v4929 = vsub.s32 %v4926, %v4928
        %v4930 = vrot.slane %v4922, %v4929
        %v4932 = vunpack.c.l.s4 1983009808
        %v4933 = vunpack.c.0.s8 %v4932
        %v4934 = vlaneseq
        %v4935 = vshrl.u32 %v4934, 7
        %v4936 = vsub.s32 %v4933, %v4935
        %v4937 = vrot.slane %v4923, %v4936
        %v4938 = vcombine.low %v4879, %v4887
        %v4939 = vcombine.high %v4879, %v4887
        %v4941 = vunpack.c.l.s4 1983009808
        %v4942 = vunpack.c.0.s8 %v4941
        %v4943 = vlaneseq
        %v4944 = vshrl.u32 %v4943, 7
        %v4945 = vsub.s32 %v4942, %v4944
        %v4946 = vrot.slane %v4938, %v4945
        %v4948 = vunpack.c.l.s4 1983009808
        %v4949 = vunpack.c.0.s8 %v4948
        %v4950 = vlaneseq
        %v4951 = vshrl.u32 %v4950, 7
        %v4952 = vsub.s32 %v4949, %v4951
        %v4953 = vrot.slane %v4939, %v4952
        %v4954 = vcombine.low %v4891, %v4899
        %v4955 = vcombine.high %v4891, %v4899
        %v4957 = vunpack.c.l.s4 1983009808
        %v4958 = vunpack.c.0.s8 %v4957
        %v4959 = vlaneseq
        %v4960 = vshrl.u32 %v4959, 7
        %v4961 = vsub.s32 %v4958, %v4960
        %v4962 = vrot.slane %v4954, %v4961
        %v4964 = vunpack.c.l.s4 1983009808
        %v4965 = vunpack.c.0.s8 %v4964
        %v4966 = vlaneseq
        %v4967 = vshrl.u32 %v4966, 7
        %v4968 = vsub.s32 %v4965, %v4967
        %v4969 = vrot.slane %v4955, %v4968
        %v4970 = vcombine.low %v4895, %v4903
        %v4971 = vcombine.high %v4895, %v4903
        %v4973 = vunpack.c.l.s4 1983009808
        %v4974 = vunpack.c.0.s8 %v4973
        %v4975 = vlaneseq
        %v4976 = vshrl.u32 %v4975, 7
        %v4977 = vsub.s32 %v4974, %v4976
        %v4978 = vrot.slane %v4970, %v4977
        %v4980 = vunpack.c.l.s4 1983009808
        %v4981 = vunpack.c.0.s8 %v4980
        %v4982 = vlaneseq
        %v4983 = vshrl.u32 %v4982, 7
        %v4984 = vsub.s32 %v4981, %v4983
        %v4985 = vrot.slane %v4971, %v4984
        %v4986 = vcombine.low %v4930, %v4946
        %v4987 = vcombine.high %v4930, %v4946
        %v4989 = vunpack.c.l.s4 1934713408
        %v4990 = vunpack.c.0.s8 %v4989
        %v4991 = vlaneseq
        %v4992 = vshrl.u32 %v4991, 7
        %v4993 = vsub.s32 %v4990, %v4992
        %v4994 = vrot.slane %v4986, %v4993
        %v4996 = vunpack.c.l.s4 1934713408
        %v4997 = vunpack.c.0.s8 %v4996
        %v4998 = vlaneseq
        %v4999 = vshrl.u32 %v4998, 7
        %v5000 = vsub.s32 %v4997, %v4999
        %v5001 = vrot.slane %v4987, %v5000
        %v5002 = vcombine.low %v4937, %v4953
        %v5003 = vcombine.high %v4937, %v4953
        %v5005 = vunpack.c.l.s4 1934713408
        %v5006 = vunpack.c.0.s8 %v5005
        %v5007 = vlaneseq
        %v5008 = vshrl.u32 %v5007, 7
        %v5009 = vsub.s32 %v5006, %v5008
        %v5010 = vrot.slane %v5002, %v5009
        %v5012 = vunpack.c.l.s4 1934713408
        %v5013 = vunpack.c.0.s8 %v5012
        %v5014 = vlaneseq
        %v5015 = vshrl.u32 %v5014, 7
        %v5016 = vsub.s32 %v5013, %v5015
        %v5017 = vrot.slane %v5003, %v5016
        %v5018 = vcombine.low %v4962, %v4978
        %v5019 = vcombine.high %v4962, %v4978
        %v5021 = vunpack.c.l.s4 1934713408
        %v5022 = vunpack.c.0.s8 %v5021
        %v5023 = vlaneseq
        %v5024 = vshrl.u32 %v5023, 7
        %v5025 = vsub.s32 %v5022, %v5024
        %v5026 = vrot.slane %v5018, %v5025
        %v5028 = vunpack.c.l.s4 1934713408
        %v5029 = vunpack.c.0.s8 %v5028
        %v5030 = vlaneseq
        %v5031 = vshrl.u32 %v5030, 7
        %v5032 = vsub.s32 %v5029, %v5031
        %v5033 = vrot.slane %v5019, %v5032
        %v5034 = vcombine.low %v4969, %v4985
        %v5035 = vcombine.high %v4969, %v4985
        %v5037 = vunpack.c.l.s4 1934713408
        %v5038 = vunpack.c.0.s8 %v5037
        %v5039 = vlaneseq
        %v5040 = vshrl.u32 %v5039, 7
        %v5041 = vsub.s32 %v5038, %v5040
        %v5042 = vrot.slane %v5034, %v5041
        %v5044 = vunpack.c.l.s4 1934713408
        %v5045 = vunpack.c.0.s8 %v5044
        %v5046 = vlaneseq
        %v5047 = vshrl.u32 %v5046, 7
        %v5048 = vsub.s32 %v5045, %v5047
        %v5049 = vrot.slane %v5035, %v5048
        %v5050 = vcombine.low %v4994, %v5026
        %v5051 = vcombine.high %v4994, %v5026
        %v5052 = vcombine.low %v5001, %v5033
        %v5053 = vcombine.high %v5001, %v5033
        %v5054 = vcombine.low %v5010, %v5042
        %v5055 = vcombine.high %v5010, %v5042
        %v5056 = vcombine.low %v5017, %v5049
        %v5057 = vcombine.high %v5017, %v5049
        %v5058 = vcombine.low %v4877, %v4885
        %v5059 = vcombine.high %v4877, %v4885
        %v5061 = vunpack.c.l.s4 1983009808
        %v5062 = vunpack.c.0.s8 %v5061
        %v5063 = vlaneseq
        %v5064 = vshrl.u32 %v5063, 7
        %v5065 = vsub.s32 %v5062, %v5064
        %v5066 = vrot.slane %v5058, %v5065
        %v5068 = vunpack.c.l.s4 1983009808
        %v5069 = vunpack.c.0.s8 %v5068
        %v5070 = vlaneseq
        %v5071 = vshrl.u32 %v5070, 7
        %v5072 = vsub.s32 %v5069, %v5071
        %v5073 = vrot.slane %v5059, %v5072
        %v5074 = vcombine.low %v4881, %v4889
        %v5075 = vcombine.high %v4881, %v4889
        %v5077 = vunpack.c.l.s4 1983009808
        %v5078 = vunpack.c.0.s8 %v5077
        %v5079 = vlaneseq
        %v5080 = vshrl.u32 %v5079, 7
        %v5081 = vsub.s32 %v5078, %v5080
        %v5082 = vrot.slane %v5074, %v5081
        %v5084 = vunpack.c.l.s4 1983009808
        %v5085 = vunpack.c.0.s8 %v5084
        %v5086 = vlaneseq
        %v5087 = vshrl.u32 %v5086, 7
        %v5088 = vsub.s32 %v5085, %v5087
        %v5089 = vrot.slane %v5075, %v5088
        %v5090 = vcombine.low %v4893, %v4901
        %v5091 = vcombine.high %v4893, %v4901
        %v5093 = vunpack.c.l.s4 1983009808
        %v5094 = vunpack.c.0.s8 %v5093
        %v5095 = vlaneseq
        %v5096 = vshrl.u32 %v5095, 7
        %v5097 = vsub.s32 %v5094, %v5096
        %v5098 = vrot.slane %v5090, %v5097
        %v5100 = vunpack.c.l.s4 1983009808
        %v5101 = vunpack.c.0.s8 %v5100
        %v5102 = vlaneseq
        %v5103 = vshrl.u32 %v5102, 7
        %v5104 = vsub.s32 %v5101, %v5103
        %v5105 = vrot.slane %v5091, %v5104
        %v5106 = vcombine.low %v4897, %v4905
        %v5107 = vcombine.high %v4897, %v4905
        %v5109 = vunpack.c.l.s4 1983009808
        %v5110 = vunpack.c.0.s8 %v5109
        %v5111 = vlaneseq
        %v5112 = vshrl.u32 %v5111, 7
        %v5113 = vsub.s32 %v5110, %v5112
        %v5114 = vrot.slane %v5106, %v5113
        %v5116 = vunpack.c.l.s4 1983009808
        %v5117 = vunpack.c.0.s8 %v5116
        %v5118 = vlaneseq
        %v5119 = vshrl.u32 %v5118, 7
        %v5120 = vsub.s32 %v5117, %v5119
        %v5121 = vrot.slane %v5107, %v5120
        %v5122 = vcombine.low %v5066, %v5082
        %v5123 = vcombine.high %v5066, %v5082
        %v5125 = vunpack.c.l.s4 1934713408
        %v5126 = vunpack.c.0.s8 %v5125
        %v5127 = vlaneseq
        %v5128 = vshrl.u32 %v5127, 7
        %v5129 = vsub.s32 %v5126, %v5128
        %v5130 = vrot.slane %v5122, %v5129
        %v5132 = vunpack.c.l.s4 1934713408
        %v5133 = vunpack.c.0.s8 %v5132
        %v5134 = vlaneseq
        %v5135 = vshrl.u32 %v5134, 7
        %v5136 = vsub.s32 %v5133, %v5135
        %v5137 = vrot.slane %v5123, %v5136
        %v5138 = vcombine.low %v5073, %v5089
        %v5139 = vcombine.high %v5073, %v5089
        %v5141 = vunpack.c.l.s4 1934713408
        %v5142 = vunpack.c.0.s8 %v5141
        %v5143 = vlaneseq
        %v5144 = vshrl.u32 %v5143, 7
        %v5145 = vsub.s32 %v5142, %v5144
        %v5146 = vrot.slane %v5138, %v5145
        %v5148 = vunpack.c.l.s4 1934713408
        %v5149 = vunpack.c.0.s8 %v5148
        %v5150 = vlaneseq
        %v5151 = vshrl.u32 %v5150, 7
        %v5152 = vsub.s32 %v5149, %v5151
        %v5153 = vrot.slane %v5139, %v5152
        %v5154 = vcombine.low %v5098, %v5114
        %v5155 = vcombine.high %v5098, %v5114
        %v5157 = vunpack.c.l.s4 1934713408
        %v5158 = vunpack.c.0.s8 %v5157
        %v5159 = vlaneseq
        %v5160 = vshrl.u32 %v5159, 7
        %v5161 = vsub.s32 %v5158, %v5160
        %v5162 = vrot.slane %v5154, %v5161
        %v5164 = vunpack.c.l.s4 1934713408
        %v5165 = vunpack.c.0.s8 %v5164
        %v5166 = vlaneseq
        %v5167 = vshrl.u32 %v5166, 7
        %v5168 = vsub.s32 %v5165, %v5167
        %v5169 = vrot.slane %v5155, %v5168
        %v5170 = vcombine.low %v5105, %v5121
        %v5171 = vcombine.high %v5105, %v5121
        %v5173 = vunpack.c.l.s4 1934713408
        %v5174 = vunpack.c.0.s8 %v5173
        %v5175 = vlaneseq
        %v5176 = vshrl.u32 %v5175, 7
        %v5177 = vsub.s32 %v5174, %v5176
        %v5178 = vrot.slane %v5170, %v5177
        %v5180 = vunpack.c.l.s4 1934713408
        %v5181 = vunpack.c.0.s8 %v5180
        %v5182 = vlaneseq
        %v5183 = vshrl.u32 %v5182, 7
        %v5184 = vsub.s32 %v5181, %v5183
        %v5185 = vrot.slane %v5171, %v5184
        %v5186 = vcombine.low %v5130, %v5162
        %v5187 = vcombine.high %v5130, %v5162
        %v5188 = vcombine.low %v5137, %v5169
        %v5189 = vcombine.high %v5137, %v5169
        %v5190 = vcombine.low %v5146, %v5178
        %v5191 = vcombine.high %v5146, %v5178
        %v5192 = vcombine.low %v5153, %v5185
        %v5193 = vcombine.high %v5153, %v5185
        %5195 = vrot.lane.b32.xlu0 %v5051, 16
        %v5196 = vpop.permute.xlu0 %5195
        %5199 = vrot.lane.b32.xlu0 %v5052, 32
        %v5200 = vpop.permute.xlu0 %5199
        %5203 = vrot.lane.b32.xlu0 %v5053, 48
        %v5204 = vpop.permute.xlu0 %5203
        %5207 = vrot.lane.b32.xlu0 %v5054, 64
        %v5208 = vpop.permute.xlu0 %5207
        %5211 = vrot.lane.b32.xlu0 %v5055, 80
        %v5212 = vpop.permute.xlu0 %5211
        %5215 = vrot.lane.b32.xlu0 %v5056, 96
        %v5216 = vpop.permute.xlu0 %5215
        %5219 = vrot.lane.b32.xlu0 %v5057, 112
        %v5220 = vpop.permute.xlu0 %5219
        %5223 = vrot.lane.b32.xlu0 %v5187, 16
        %v5224 = vpop.permute.xlu0 %5223
        %5227 = vrot.lane.b32.xlu0 %v5188, 32
        %v5228 = vpop.permute.xlu0 %5227
        %5231 = vrot.lane.b32.xlu0 %v5189, 48
        %v5232 = vpop.permute.xlu0 %5231
        %5235 = vrot.lane.b32.xlu0 %v5190, 64
        %v5236 = vpop.permute.xlu0 %5235
        %5239 = vrot.lane.b32.xlu0 %v5191, 80
        %v5240 = vpop.permute.xlu0 %5239
        %5243 = vrot.lane.b32.xlu0 %v5192, 96
        %v5244 = vpop.permute.xlu0 %5243
        %5247 = vrot.lane.b32.xlu0 %v5193, 112
        %v5248 = vpop.permute.xlu0 %5247
        %v5250 = vsel %vm609, %v5050, %v5196
        %v5251 = vsel %vm611, %v5250, %v5200
        %v5252 = vsel %vm613, %v5251, %v5204
        %v5253 = vsel %vm615, %v5252, %v5208
        %v5254 = vsel %vm617, %v5253, %v5212
        %v5255 = vsel %vm619, %v5254, %v5216
        %v5256 = vsel %vm621, %v5255, %v5220
        %v5257 = vsel %vm609, %v5186, %v5224
        %v5258 = vsel %vm611, %v5257, %v5228
        %v5259 = vsel %vm613, %v5258, %v5232
        %v5260 = vsel %vm615, %v5259, %v5236
        %v5261 = vsel %vm617, %v5260, %v5240
        %v5262 = vsel %vm619, %v5261, %v5244
        %v5263 = vsel %vm621, %v5262, %v5248
        %5264 = vrot.lane.b32.xlu0 %v4478, 126
        %v5265 = vpop.permute.xlu0 %5264
        %5266 = vrot.lane.b32.xlu0 %v4480, 126
        %v5267 = vpop.permute.xlu0 %5266
        %5268 = vrot.lane.b32.xlu0 %v4483, 126
        %v5269 = vpop.permute.xlu0 %5268
        %5270 = vrot.lane.b32.xlu0 %v4485, 126
        %v5271 = vpop.permute.xlu0 %5270
        %5272 = vrot.lane.b32.xlu0 %v4488, 126
        %v5273 = vpop.permute.xlu0 %5272
        %5274 = vrot.lane.b32.xlu0 %v4490, 126
        %v5275 = vpop.permute.xlu0 %5274
        %5276 = vrot.lane.b32.xlu0 %v4493, 126
        %v5277 = vpop.permute.xlu0 %5276
        %5278 = vrot.lane.b32.xlu0 %v4495, 126
        %v5279 = vpop.permute.xlu0 %5278
        %5280 = vrot.lane.b32.xlu0 %v4498, 126
        %v5281 = vpop.permute.xlu0 %5280
        %5282 = vrot.lane.b32.xlu0 %v4500, 126
        %v5283 = vpop.permute.xlu0 %5282
        %5284 = vrot.lane.b32.xlu0 %v4503, 126
        %v5285 = vpop.permute.xlu0 %5284
        %5286 = vrot.lane.b32.xlu0 %v4505, 126
        %v5287 = vpop.permute.xlu0 %5286
        %5288 = vrot.lane.b32.xlu0 %v4508, 126
        %v5289 = vpop.permute.xlu0 %5288
        %5290 = vrot.lane.b32.xlu0 %v4510, 126
        %v5291 = vpop.permute.xlu0 %5290
        %5292 = vrot.lane.b32.xlu0 %v4513, 126
        %v5293 = vpop.permute.xlu0 %5292
        %5294 = vrot.lane.b32.xlu0 %v4515, 126
        %v5295 = vpop.permute.xlu0 %5294
        %v5312 = vcombine.low %v5265, %v5273
        %v5313 = vcombine.high %v5265, %v5273
        %v5315 = vunpack.c.l.s4 1983009808
        %v5316 = vunpack.c.0.s8 %v5315
        %v5317 = vlaneseq
        %v5318 = vshrl.u32 %v5317, 7
        %v5319 = vsub.s32 %v5316, %v5318
        %v5320 = vrot.slane %v5312, %v5319
        %v5322 = vunpack.c.l.s4 1983009808
        %v5323 = vunpack.c.0.s8 %v5322
        %v5324 = vlaneseq
        %v5325 = vshrl.u32 %v5324, 7
        %v5326 = vsub.s32 %v5323, %v5325
        %v5327 = vrot.slane %v5313, %v5326
        %v5328 = vcombine.low %v5269, %v5277
        %v5329 = vcombine.high %v5269, %v5277
        %v5331 = vunpack.c.l.s4 1983009808
        %v5332 = vunpack.c.0.s8 %v5331
        %v5333 = vlaneseq
        %v5334 = vshrl.u32 %v5333, 7
        %v5335 = vsub.s32 %v5332, %v5334
        %v5336 = vrot.slane %v5328, %v5335
        %v5338 = vunpack.c.l.s4 1983009808
        %v5339 = vunpack.c.0.s8 %v5338
        %v5340 = vlaneseq
        %v5341 = vshrl.u32 %v5340, 7
        %v5342 = vsub.s32 %v5339, %v5341
        %v5343 = vrot.slane %v5329, %v5342
        %v5344 = vcombine.low %v5281, %v5289
        %v5345 = vcombine.high %v5281, %v5289
        %v5347 = vunpack.c.l.s4 1983009808
        %v5348 = vunpack.c.0.s8 %v5347
        %v5349 = vlaneseq
        %v5350 = vshrl.u32 %v5349, 7
        %v5351 = vsub.s32 %v5348, %v5350
        %v5352 = vrot.slane %v5344, %v5351
        %v5354 = vunpack.c.l.s4 1983009808
        %v5355 = vunpack.c.0.s8 %v5354
        %v5356 = vlaneseq
        %v5357 = vshrl.u32 %v5356, 7
        %v5358 = vsub.s32 %v5355, %v5357
        %v5359 = vrot.slane %v5345, %v5358
        %v5360 = vcombine.low %v5285, %v5293
        %v5361 = vcombine.high %v5285, %v5293
        %v5363 = vunpack.c.l.s4 1983009808
        %v5364 = vunpack.c.0.s8 %v5363
        %v5365 = vlaneseq
        %v5366 = vshrl.u32 %v5365, 7
        %v5367 = vsub.s32 %v5364, %v5366
        %v5368 = vrot.slane %v5360, %v5367
        %v5370 = vunpack.c.l.s4 1983009808
        %v5371 = vunpack.c.0.s8 %v5370
        %v5372 = vlaneseq
        %v5373 = vshrl.u32 %v5372, 7
        %v5374 = vsub.s32 %v5371, %v5373
        %v5375 = vrot.slane %v5361, %v5374
        %v5376 = vcombine.low %v5320, %v5336
        %v5377 = vcombine.high %v5320, %v5336
        %v5379 = vunpack.c.l.s4 1934713408
        %v5380 = vunpack.c.0.s8 %v5379
        %v5381 = vlaneseq
        %v5382 = vshrl.u32 %v5381, 7
        %v5383 = vsub.s32 %v5380, %v5382
        %v5384 = vrot.slane %v5376, %v5383
        %v5386 = vunpack.c.l.s4 1934713408
        %v5387 = vunpack.c.0.s8 %v5386
        %v5388 = vlaneseq
        %v5389 = vshrl.u32 %v5388, 7
        %v5390 = vsub.s32 %v5387, %v5389
        %v5391 = vrot.slane %v5377, %v5390
        %v5392 = vcombine.low %v5327, %v5343
        %v5393 = vcombine.high %v5327, %v5343
        %v5395 = vunpack.c.l.s4 1934713408
        %v5396 = vunpack.c.0.s8 %v5395
        %v5397 = vlaneseq
        %v5398 = vshrl.u32 %v5397, 7
        %v5399 = vsub.s32 %v5396, %v5398
        %v5400 = vrot.slane %v5392, %v5399
        %v5402 = vunpack.c.l.s4 1934713408
        %v5403 = vunpack.c.0.s8 %v5402
        %v5404 = vlaneseq
        %v5405 = vshrl.u32 %v5404, 7
        %v5406 = vsub.s32 %v5403, %v5405
        %v5407 = vrot.slane %v5393, %v5406
        %v5408 = vcombine.low %v5352, %v5368
        %v5409 = vcombine.high %v5352, %v5368
        %v5411 = vunpack.c.l.s4 1934713408
        %v5412 = vunpack.c.0.s8 %v5411
        %v5413 = vlaneseq
        %v5414 = vshrl.u32 %v5413, 7
        %v5415 = vsub.s32 %v5412, %v5414
        %v5416 = vrot.slane %v5408, %v5415
        %v5418 = vunpack.c.l.s4 1934713408
        %v5419 = vunpack.c.0.s8 %v5418
        %v5420 = vlaneseq
        %v5421 = vshrl.u32 %v5420, 7
        %v5422 = vsub.s32 %v5419, %v5421
        %v5423 = vrot.slane %v5409, %v5422
        %v5424 = vcombine.low %v5359, %v5375
        %v5425 = vcombine.high %v5359, %v5375
        %v5427 = vunpack.c.l.s4 1934713408
        %v5428 = vunpack.c.0.s8 %v5427
        %v5429 = vlaneseq
        %v5430 = vshrl.u32 %v5429, 7
        %v5431 = vsub.s32 %v5428, %v5430
        %v5432 = vrot.slane %v5424, %v5431
        %v5434 = vunpack.c.l.s4 1934713408
        %v5435 = vunpack.c.0.s8 %v5434
        %v5436 = vlaneseq
        %v5437 = vshrl.u32 %v5436, 7
        %v5438 = vsub.s32 %v5435, %v5437
        %v5439 = vrot.slane %v5425, %v5438
        %v5440 = vcombine.low %v5384, %v5416
        %v5441 = vcombine.high %v5384, %v5416
        %v5442 = vcombine.low %v5391, %v5423
        %v5443 = vcombine.high %v5391, %v5423
        %v5444 = vcombine.low %v5400, %v5432
        %v5445 = vcombine.high %v5400, %v5432
        %v5446 = vcombine.low %v5407, %v5439
        %v5447 = vcombine.high %v5407, %v5439
        %v5448 = vcombine.low %v5267, %v5275
        %v5449 = vcombine.high %v5267, %v5275
        %v5451 = vunpack.c.l.s4 1983009808
        %v5452 = vunpack.c.0.s8 %v5451
        %v5453 = vlaneseq
        %v5454 = vshrl.u32 %v5453, 7
        %v5455 = vsub.s32 %v5452, %v5454
        %v5456 = vrot.slane %v5448, %v5455
        %v5458 = vunpack.c.l.s4 1983009808
        %v5459 = vunpack.c.0.s8 %v5458
        %v5460 = vlaneseq
        %v5461 = vshrl.u32 %v5460, 7
        %v5462 = vsub.s32 %v5459, %v5461
        %v5463 = vrot.slane %v5449, %v5462
        %v5464 = vcombine.low %v5271, %v5279
        %v5465 = vcombine.high %v5271, %v5279
        %v5467 = vunpack.c.l.s4 1983009808
        %v5468 = vunpack.c.0.s8 %v5467
        %v5469 = vlaneseq
        %v5470 = vshrl.u32 %v5469, 7
        %v5471 = vsub.s32 %v5468, %v5470
        %v5472 = vrot.slane %v5464, %v5471
        %v5474 = vunpack.c.l.s4 1983009808
        %v5475 = vunpack.c.0.s8 %v5474
        %v5476 = vlaneseq
        %v5477 = vshrl.u32 %v5476, 7
        %v5478 = vsub.s32 %v5475, %v5477
        %v5479 = vrot.slane %v5465, %v5478
        %v5480 = vcombine.low %v5283, %v5291
        %v5481 = vcombine.high %v5283, %v5291
        %v5483 = vunpack.c.l.s4 1983009808
        %v5484 = vunpack.c.0.s8 %v5483
        %v5485 = vlaneseq
        %v5486 = vshrl.u32 %v5485, 7
        %v5487 = vsub.s32 %v5484, %v5486
        %v5488 = vrot.slane %v5480, %v5487
        %v5490 = vunpack.c.l.s4 1983009808
        %v5491 = vunpack.c.0.s8 %v5490
        %v5492 = vlaneseq
        %v5493 = vshrl.u32 %v5492, 7
        %v5494 = vsub.s32 %v5491, %v5493
        %v5495 = vrot.slane %v5481, %v5494
        %v5496 = vcombine.low %v5287, %v5295
        %v5497 = vcombine.high %v5287, %v5295
        %v5499 = vunpack.c.l.s4 1983009808
        %v5500 = vunpack.c.0.s8 %v5499
        %v5501 = vlaneseq
        %v5502 = vshrl.u32 %v5501, 7
        %v5503 = vsub.s32 %v5500, %v5502
        %v5504 = vrot.slane %v5496, %v5503
        %v5506 = vunpack.c.l.s4 1983009808
        %v5507 = vunpack.c.0.s8 %v5506
        %v5508 = vlaneseq
        %v5509 = vshrl.u32 %v5508, 7
        %v5510 = vsub.s32 %v5507, %v5509
        %v5511 = vrot.slane %v5497, %v5510
        %v5512 = vcombine.low %v5456, %v5472
        %v5513 = vcombine.high %v5456, %v5472
        %v5515 = vunpack.c.l.s4 1934713408
        %v5516 = vunpack.c.0.s8 %v5515
        %v5517 = vlaneseq
        %v5518 = vshrl.u32 %v5517, 7
        %v5519 = vsub.s32 %v5516, %v5518
        %v5520 = vrot.slane %v5512, %v5519
        %v5522 = vunpack.c.l.s4 1934713408
        %v5523 = vunpack.c.0.s8 %v5522
        %v5524 = vlaneseq
        %v5525 = vshrl.u32 %v5524, 7
        %v5526 = vsub.s32 %v5523, %v5525
        %v5527 = vrot.slane %v5513, %v5526
        %v5528 = vcombine.low %v5463, %v5479
        %v5529 = vcombine.high %v5463, %v5479
        %v5531 = vunpack.c.l.s4 1934713408
        %v5532 = vunpack.c.0.s8 %v5531
        %v5533 = vlaneseq
        %v5534 = vshrl.u32 %v5533, 7
        %v5535 = vsub.s32 %v5532, %v5534
        %v5536 = vrot.slane %v5528, %v5535
        %v5538 = vunpack.c.l.s4 1934713408
        %v5539 = vunpack.c.0.s8 %v5538
        %v5540 = vlaneseq
        %v5541 = vshrl.u32 %v5540, 7
        %v5542 = vsub.s32 %v5539, %v5541
        %v5543 = vrot.slane %v5529, %v5542
        %v5544 = vcombine.low %v5488, %v5504
        %v5545 = vcombine.high %v5488, %v5504
        %v5547 = vunpack.c.l.s4 1934713408
        %v5548 = vunpack.c.0.s8 %v5547
        %v5549 = vlaneseq
        %v5550 = vshrl.u32 %v5549, 7
        %v5551 = vsub.s32 %v5548, %v5550
        %v5552 = vrot.slane %v5544, %v5551
        %v5554 = vunpack.c.l.s4 1934713408
        %v5555 = vunpack.c.0.s8 %v5554
        %v5556 = vlaneseq
        %v5557 = vshrl.u32 %v5556, 7
        %v5558 = vsub.s32 %v5555, %v5557
        %v5559 = vrot.slane %v5545, %v5558
        %v5560 = vcombine.low %v5495, %v5511
        %v5561 = vcombine.high %v5495, %v5511
        %v5563 = vunpack.c.l.s4 1934713408
        %v5564 = vunpack.c.0.s8 %v5563
        %v5565 = vlaneseq
        %v5566 = vshrl.u32 %v5565, 7
        %v5567 = vsub.s32 %v5564, %v5566
        %v5568 = vrot.slane %v5560, %v5567
        %v5570 = vunpack.c.l.s4 1934713408
        %v5571 = vunpack.c.0.s8 %v5570
        %v5572 = vlaneseq
        %v5573 = vshrl.u32 %v5572, 7
        %v5574 = vsub.s32 %v5571, %v5573
        %v5575 = vrot.slane %v5561, %v5574
        %v5576 = vcombine.low %v5520, %v5552
        %v5577 = vcombine.high %v5520, %v5552
        %v5578 = vcombine.low %v5527, %v5559
        %v5579 = vcombine.high %v5527, %v5559
        %v5580 = vcombine.low %v5536, %v5568
        %v5581 = vcombine.high %v5536, %v5568
        %v5582 = vcombine.low %v5543, %v5575
        %v5583 = vcombine.high %v5543, %v5575
        %5585 = vrot.lane.b32.xlu0 %v5441, 16
        %v5586 = vpop.permute.xlu0 %5585
        %5589 = vrot.lane.b32.xlu0 %v5442, 32
        %v5590 = vpop.permute.xlu0 %5589
        %5593 = vrot.lane.b32.xlu0 %v5443, 48
        %v5594 = vpop.permute.xlu0 %5593
        %5597 = vrot.lane.b32.xlu0 %v5444, 64
        %v5598 = vpop.permute.xlu0 %5597
        %5601 = vrot.lane.b32.xlu0 %v5445, 80
        %v5602 = vpop.permute.xlu0 %5601
        %5605 = vrot.lane.b32.xlu0 %v5446, 96
        %v5606 = vpop.permute.xlu0 %5605
        %5609 = vrot.lane.b32.xlu0 %v5447, 112
        %v5610 = vpop.permute.xlu0 %5609
        %5613 = vrot.lane.b32.xlu0 %v5577, 16
        %v5614 = vpop.permute.xlu0 %5613
        %5617 = vrot.lane.b32.xlu0 %v5578, 32
        %v5618 = vpop.permute.xlu0 %5617
        %5621 = vrot.lane.b32.xlu0 %v5579, 48
        %v5622 = vpop.permute.xlu0 %5621
        %5625 = vrot.lane.b32.xlu0 %v5580, 64
        %v5626 = vpop.permute.xlu0 %5625
        %5629 = vrot.lane.b32.xlu0 %v5581, 80
        %v5630 = vpop.permute.xlu0 %5629
        %5633 = vrot.lane.b32.xlu0 %v5582, 96
        %v5634 = vpop.permute.xlu0 %5633
        %5637 = vrot.lane.b32.xlu0 %v5583, 112
        %v5638 = vpop.permute.xlu0 %5637
        %v5640 = vsel %vm609, %v5440, %v5586
        %v5641 = vsel %vm611, %v5640, %v5590
        %v5642 = vsel %vm613, %v5641, %v5594
        %v5643 = vsel %vm615, %v5642, %v5598
        %v5644 = vsel %vm617, %v5643, %v5602
        %v5645 = vsel %vm619, %v5644, %v5606
        %v5646 = vsel %vm621, %v5645, %v5610
        %v5647 = vsel %vm609, %v5576, %v5614
        %v5648 = vsel %vm611, %v5647, %v5618
        %v5649 = vsel %vm613, %v5648, %v5622
        %v5650 = vsel %vm615, %v5649, %v5626
        %v5651 = vsel %vm617, %v5650, %v5630
        %v5652 = vsel %vm619, %v5651, %v5634
        %v5653 = vsel %vm621, %v5652, %v5638
        %v5654 = vrot.slane %v3306, 2
        %v5655 = vrot.slane %v3307, 2
        %v5656 = vsel %vm1797, %v5654, %v5655
        %v5657 = vrot.slane %v3308, 2
        %v5658 = vsel %vm1797, %v5655, %v5657
        %v5659 = vrot.slane %v3309, 2
        %v5660 = vrot.slane %v3310, 2
        %v5661 = vsel %vm1797, %v5659, %v5660
        %v5662 = vrot.slane %v3311, 2
        %v5663 = vsel %vm1797, %v5660, %v5662
        %v5664 = vrot.slane %v3312, 2
        %v5665 = vrot.slane %v3313, 2
        %v5666 = vsel %vm1797, %v5664, %v5665
        %v5667 = vrot.slane %v3314, 2
        %v5668 = vsel %vm1797, %v5665, %v5667
        %v5669 = vrot.slane %v3315, 2
        %v5670 = vrot.slane %v3316, 2
        %v5671 = vsel %vm1797, %v5669, %v5670
        %v5672 = vrot.slane %v3317, 2
        %v5673 = vsel %vm1797, %v5670, %v5672
        %v5674 = vrot.slane %v3318, 2
        %v5675 = vrot.slane %v3319, 2
        %v5676 = vsel %vm1797, %v5674, %v5675
        %v5677 = vrot.slane %v3320, 2
        %v5678 = vsel %vm1797, %v5675, %v5677
        %v5679 = vrot.slane %v3321, 2
        %v5680 = vrot.slane %v3322, 2
        %v5681 = vsel %vm1797, %v5679, %v5680
        %v5682 = vrot.slane %v3323, 2
        %v5683 = vsel %vm1797, %v5680, %v5682
        %v5684 = vrot.slane %v3324, 2
        %v5685 = vrot.slane %v3325, 2
        %v5686 = vsel %vm1797, %v5684, %v5685
        %v5687 = vrot.slane %v3326, 2
        %v5688 = vsel %vm1797, %v5685, %v5687
        %v5689 = vrot.slane %v3327, 2
        %v5690 = vrot.slane %v3328, 2
        %v5691 = vsel %vm1797, %v5689, %v5690
        %v5692 = vrot.slane %v3329, 2
        %v5693 = vsel %vm1797, %v5690, %v5692
        %v5710 = vcombine.low %v5656, %v5666
        %v5711 = vcombine.high %v5656, %v5666
        %v5713 = vunpack.c.l.s4 1983009808
        %v5714 = vunpack.c.0.s8 %v5713
        %v5715 = vlaneseq
        %v5716 = vshrl.u32 %v5715, 7
        %v5717 = vsub.s32 %v5714, %v5716
        %v5718 = vrot.slane %v5710, %v5717
        %v5720 = vunpack.c.l.s4 1983009808
        %v5721 = vunpack.c.0.s8 %v5720
        %v5722 = vlaneseq
        %v5723 = vshrl.u32 %v5722, 7
        %v5724 = vsub.s32 %v5721, %v5723
        %v5725 = vrot.slane %v5711, %v5724
        %v5726 = vcombine.low %v5661, %v5671
        %v5727 = vcombine.high %v5661, %v5671
        %v5729 = vunpack.c.l.s4 1983009808
        %v5730 = vunpack.c.0.s8 %v5729
        %v5731 = vlaneseq
        %v5732 = vshrl.u32 %v5731, 7
        %v5733 = vsub.s32 %v5730, %v5732
        %v5734 = vrot.slane %v5726, %v5733
        %v5736 = vunpack.c.l.s4 1983009808
        %v5737 = vunpack.c.0.s8 %v5736
        %v5738 = vlaneseq
        %v5739 = vshrl.u32 %v5738, 7
        %v5740 = vsub.s32 %v5737, %v5739
        %v5741 = vrot.slane %v5727, %v5740
        %v5742 = vcombine.low %v5676, %v5686
        %v5743 = vcombine.high %v5676, %v5686
        %v5745 = vunpack.c.l.s4 1983009808
        %v5746 = vunpack.c.0.s8 %v5745
        %v5747 = vlaneseq
        %v5748 = vshrl.u32 %v5747, 7
        %v5749 = vsub.s32 %v5746, %v5748
        %v5750 = vrot.slane %v5742, %v5749
        %v5752 = vunpack.c.l.s4 1983009808
        %v5753 = vunpack.c.0.s8 %v5752
        %v5754 = vlaneseq
        %v5755 = vshrl.u32 %v5754, 7
        %v5756 = vsub.s32 %v5753, %v5755
        %v5757 = vrot.slane %v5743, %v5756
        %v5758 = vcombine.low %v5681, %v5691
        %v5759 = vcombine.high %v5681, %v5691
        %v5761 = vunpack.c.l.s4 1983009808
        %v5762 = vunpack.c.0.s8 %v5761
        %v5763 = vlaneseq
        %v5764 = vshrl.u32 %v5763, 7
        %v5765 = vsub.s32 %v5762, %v5764
        %v5766 = vrot.slane %v5758, %v5765
        %v5768 = vunpack.c.l.s4 1983009808
        %v5769 = vunpack.c.0.s8 %v5768
        %v5770 = vlaneseq
        %v5771 = vshrl.u32 %v5770, 7
        %v5772 = vsub.s32 %v5769, %v5771
        %v5773 = vrot.slane %v5759, %v5772
        %v5774 = vcombine.low %v5718, %v5734
        %v5775 = vcombine.high %v5718, %v5734
        %v5777 = vunpack.c.l.s4 1934713408
        %v5778 = vunpack.c.0.s8 %v5777
        %v5779 = vlaneseq
        %v5780 = vshrl.u32 %v5779, 7
        %v5781 = vsub.s32 %v5778, %v5780
        %v5782 = vrot.slane %v5774, %v5781
        %v5784 = vunpack.c.l.s4 1934713408
        %v5785 = vunpack.c.0.s8 %v5784
        %v5786 = vlaneseq
        %v5787 = vshrl.u32 %v5786, 7
        %v5788 = vsub.s32 %v5785, %v5787
        %v5789 = vrot.slane %v5775, %v5788
        %v5790 = vcombine.low %v5725, %v5741
        %v5791 = vcombine.high %v5725, %v5741
        %v5793 = vunpack.c.l.s4 1934713408
        %v5794 = vunpack.c.0.s8 %v5793
        %v5795 = vlaneseq
        %v5796 = vshrl.u32 %v5795, 7
        %v5797 = vsub.s32 %v5794, %v5796
        %v5798 = vrot.slane %v5790, %v5797
        %v5800 = vunpack.c.l.s4 1934713408
        %v5801 = vunpack.c.0.s8 %v5800
        %v5802 = vlaneseq
        %v5803 = vshrl.u32 %v5802, 7
        %v5804 = vsub.s32 %v5801, %v5803
        %v5805 = vrot.slane %v5791, %v5804
        %v5806 = vcombine.low %v5750, %v5766
        %v5807 = vcombine.high %v5750, %v5766
        %v5809 = vunpack.c.l.s4 1934713408
        %v5810 = vunpack.c.0.s8 %v5809
        %v5811 = vlaneseq
        %v5812 = vshrl.u32 %v5811, 7
        %v5813 = vsub.s32 %v5810, %v5812
        %v5814 = vrot.slane %v5806, %v5813
        %v5816 = vunpack.c.l.s4 1934713408
        %v5817 = vunpack.c.0.s8 %v5816
        %v5818 = vlaneseq
        %v5819 = vshrl.u32 %v5818, 7
        %v5820 = vsub.s32 %v5817, %v5819
        %v5821 = vrot.slane %v5807, %v5820
        %v5822 = vcombine.low %v5757, %v5773
        %v5823 = vcombine.high %v5757, %v5773
        %v5825 = vunpack.c.l.s4 1934713408
        %v5826 = vunpack.c.0.s8 %v5825
        %v5827 = vlaneseq
        %v5828 = vshrl.u32 %v5827, 7
        %v5829 = vsub.s32 %v5826, %v5828
        %v5830 = vrot.slane %v5822, %v5829
        %v5832 = vunpack.c.l.s4 1934713408
        %v5833 = vunpack.c.0.s8 %v5832
        %v5834 = vlaneseq
        %v5835 = vshrl.u32 %v5834, 7
        %v5836 = vsub.s32 %v5833, %v5835
        %v5837 = vrot.slane %v5823, %v5836
        %v5838 = vcombine.low %v5782, %v5814
        %v5839 = vcombine.high %v5782, %v5814
        %v5840 = vcombine.low %v5789, %v5821
        %v5841 = vcombine.high %v5789, %v5821
        %v5842 = vcombine.low %v5798, %v5830
        %v5843 = vcombine.high %v5798, %v5830
        %v5844 = vcombine.low %v5805, %v5837
        %v5845 = vcombine.high %v5805, %v5837
        %v5846 = vcombine.low %v5658, %v5668
        %v5847 = vcombine.high %v5658, %v5668
        %v5849 = vunpack.c.l.s4 1983009808
        %v5850 = vunpack.c.0.s8 %v5849
        %v5851 = vlaneseq
        %v5852 = vshrl.u32 %v5851, 7
        %v5853 = vsub.s32 %v5850, %v5852
        %v5854 = vrot.slane %v5846, %v5853
        %v5856 = vunpack.c.l.s4 1983009808
        %v5857 = vunpack.c.0.s8 %v5856
        %v5858 = vlaneseq
        %v5859 = vshrl.u32 %v5858, 7
        %v5860 = vsub.s32 %v5857, %v5859
        %v5861 = vrot.slane %v5847, %v5860
        %v5862 = vcombine.low %v5663, %v5673
        %v5863 = vcombine.high %v5663, %v5673
        %v5865 = vunpack.c.l.s4 1983009808
        %v5866 = vunpack.c.0.s8 %v5865
        %v5867 = vlaneseq
        %v5868 = vshrl.u32 %v5867, 7
        %v5869 = vsub.s32 %v5866, %v5868
        %v5870 = vrot.slane %v5862, %v5869
        %v5872 = vunpack.c.l.s4 1983009808
        %v5873 = vunpack.c.0.s8 %v5872
        %v5874 = vlaneseq
        %v5875 = vshrl.u32 %v5874, 7
        %v5876 = vsub.s32 %v5873, %v5875
        %v5877 = vrot.slane %v5863, %v5876
        %v5878 = vcombine.low %v5678, %v5688
        %v5879 = vcombine.high %v5678, %v5688
        %v5881 = vunpack.c.l.s4 1983009808
        %v5882 = vunpack.c.0.s8 %v5881
        %v5883 = vlaneseq
        %v5884 = vshrl.u32 %v5883, 7
        %v5885 = vsub.s32 %v5882, %v5884
        %v5886 = vrot.slane %v5878, %v5885
        %v5888 = vunpack.c.l.s4 1983009808
        %v5889 = vunpack.c.0.s8 %v5888
        %v5890 = vlaneseq
        %v5891 = vshrl.u32 %v5890, 7
        %v5892 = vsub.s32 %v5889, %v5891
        %v5893 = vrot.slane %v5879, %v5892
        %v5894 = vcombine.low %v5683, %v5693
        %v5895 = vcombine.high %v5683, %v5693
        %v5897 = vunpack.c.l.s4 1983009808
        %v5898 = vunpack.c.0.s8 %v5897
        %v5899 = vlaneseq
        %v5900 = vshrl.u32 %v5899, 7
        %v5901 = vsub.s32 %v5898, %v5900
        %v5902 = vrot.slane %v5894, %v5901
        %v5904 = vunpack.c.l.s4 1983009808
        %v5905 = vunpack.c.0.s8 %v5904
        %v5906 = vlaneseq
        %v5907 = vshrl.u32 %v5906, 7
        %v5908 = vsub.s32 %v5905, %v5907
        %v5909 = vrot.slane %v5895, %v5908
        %v5910 = vcombine.low %v5854, %v5870
        %v5911 = vcombine.high %v5854, %v5870
        %v5913 = vunpack.c.l.s4 1934713408
        %v5914 = vunpack.c.0.s8 %v5913
        %v5915 = vlaneseq
        %v5916 = vshrl.u32 %v5915, 7
        %v5917 = vsub.s32 %v5914, %v5916
        %v5918 = vrot.slane %v5910, %v5917
        %v5920 = vunpack.c.l.s4 1934713408
        %v5921 = vunpack.c.0.s8 %v5920
        %v5922 = vlaneseq
        %v5923 = vshrl.u32 %v5922, 7
        %v5924 = vsub.s32 %v5921, %v5923
        %v5925 = vrot.slane %v5911, %v5924
        %v5926 = vcombine.low %v5861, %v5877
        %v5927 = vcombine.high %v5861, %v5877
        %v5929 = vunpack.c.l.s4 1934713408
        %v5930 = vunpack.c.0.s8 %v5929
        %v5931 = vlaneseq
        %v5932 = vshrl.u32 %v5931, 7
        %v5933 = vsub.s32 %v5930, %v5932
        %v5934 = vrot.slane %v5926, %v5933
        %v5936 = vunpack.c.l.s4 1934713408
        %v5937 = vunpack.c.0.s8 %v5936
        %v5938 = vlaneseq
        %v5939 = vshrl.u32 %v5938, 7
        %v5940 = vsub.s32 %v5937, %v5939
        %v5941 = vrot.slane %v5927, %v5940
        %v5942 = vcombine.low %v5886, %v5902
        %v5943 = vcombine.high %v5886, %v5902
        %v5945 = vunpack.c.l.s4 1934713408
        %v5946 = vunpack.c.0.s8 %v5945
        %v5947 = vlaneseq
        %v5948 = vshrl.u32 %v5947, 7
        %v5949 = vsub.s32 %v5946, %v5948
        %v5950 = vrot.slane %v5942, %v5949
        %v5952 = vunpack.c.l.s4 1934713408
        %v5953 = vunpack.c.0.s8 %v5952
        %v5954 = vlaneseq
        %v5955 = vshrl.u32 %v5954, 7
        %v5956 = vsub.s32 %v5953, %v5955
        %v5957 = vrot.slane %v5943, %v5956
        %v5958 = vcombine.low %v5893, %v5909
        %v5959 = vcombine.high %v5893, %v5909
        %v5961 = vunpack.c.l.s4 1934713408
        %v5962 = vunpack.c.0.s8 %v5961
        %v5963 = vlaneseq
        %v5964 = vshrl.u32 %v5963, 7
        %v5965 = vsub.s32 %v5962, %v5964
        %v5966 = vrot.slane %v5958, %v5965
        %v5968 = vunpack.c.l.s4 1934713408
        %v5969 = vunpack.c.0.s8 %v5968
        %v5970 = vlaneseq
        %v5971 = vshrl.u32 %v5970, 7
        %v5972 = vsub.s32 %v5969, %v5971
        %v5973 = vrot.slane %v5959, %v5972
        %v5974 = vcombine.low %v5918, %v5950
        %v5975 = vcombine.high %v5918, %v5950
        %v5976 = vcombine.low %v5925, %v5957
        %v5977 = vcombine.high %v5925, %v5957
        %v5978 = vcombine.low %v5934, %v5966
        %v5979 = vcombine.high %v5934, %v5966
        %v5980 = vcombine.low %v5941, %v5973
        %v5981 = vcombine.high %v5941, %v5973
        %5983 = vrot.lane.b32.xlu0 %v5839, 16
        %v5984 = vpop.permute.xlu0 %5983
        %5987 = vrot.lane.b32.xlu0 %v5840, 32
        %v5988 = vpop.permute.xlu0 %5987
        %5991 = vrot.lane.b32.xlu0 %v5841, 48
        %v5992 = vpop.permute.xlu0 %5991
        %5995 = vrot.lane.b32.xlu0 %v5842, 64
        %v5996 = vpop.permute.xlu0 %5995
        %5999 = vrot.lane.b32.xlu0 %v5843, 80
        %v6000 = vpop.permute.xlu0 %5999
        %6003 = vrot.lane.b32.xlu0 %v5844, 96
        %v6004 = vpop.permute.xlu0 %6003
        %6007 = vrot.lane.b32.xlu0 %v5845, 112
        %v6008 = vpop.permute.xlu0 %6007
        %6011 = vrot.lane.b32.xlu0 %v5975, 16
        %v6012 = vpop.permute.xlu0 %6011
        %6015 = vrot.lane.b32.xlu0 %v5976, 32
        %v6016 = vpop.permute.xlu0 %6015
        %6019 = vrot.lane.b32.xlu0 %v5977, 48
        %v6020 = vpop.permute.xlu0 %6019
        %6023 = vrot.lane.b32.xlu0 %v5978, 64
        %v6024 = vpop.permute.xlu0 %6023
        %6027 = vrot.lane.b32.xlu0 %v5979, 80
        %v6028 = vpop.permute.xlu0 %6027
        %6031 = vrot.lane.b32.xlu0 %v5980, 96
        %v6032 = vpop.permute.xlu0 %6031
        %6035 = vrot.lane.b32.xlu0 %v5981, 112
        %v6036 = vpop.permute.xlu0 %6035
        %v6038 = vsel %vm609, %v5838, %v5984
        %v6039 = vsel %vm611, %v6038, %v5988
        %v6040 = vsel %vm613, %v6039, %v5992
        %v6041 = vsel %vm615, %v6040, %v5996
        %v6042 = vsel %vm617, %v6041, %v6000
        %v6043 = vsel %vm619, %v6042, %v6004
        %v6044 = vsel %vm621, %v6043, %v6008
        %v6045 = vsel %vm609, %v5974, %v6012
        %v6046 = vsel %vm611, %v6045, %v6016
        %v6047 = vsel %vm613, %v6046, %v6020
        %v6048 = vsel %vm615, %v6047, %v6024
        %v6049 = vsel %vm617, %v6048, %v6028
        %v6050 = vsel %vm619, %v6049, %v6032
        %v6051 = vsel %vm621, %v6050, %v6036
        %6052 = vrot.lane.b32.xlu0 %v5656, 127
        %v6053 = vpop.permute.xlu0 %6052
        %6054 = vrot.lane.b32.xlu0 %v5658, 127
        %v6055 = vpop.permute.xlu0 %6054
        %6056 = vrot.lane.b32.xlu0 %v5661, 127
        %v6057 = vpop.permute.xlu0 %6056
        %6058 = vrot.lane.b32.xlu0 %v5663, 127
        %v6059 = vpop.permute.xlu0 %6058
        %6060 = vrot.lane.b32.xlu0 %v5666, 127
        %v6061 = vpop.permute.xlu0 %6060
        %6062 = vrot.lane.b32.xlu0 %v5668, 127
        %v6063 = vpop.permute.xlu0 %6062
        %6064 = vrot.lane.b32.xlu0 %v5671, 127
        %v6065 = vpop.permute.xlu0 %6064
        %6066 = vrot.lane.b32.xlu0 %v5673, 127
        %v6067 = vpop.permute.xlu0 %6066
        %6068 = vrot.lane.b32.xlu0 %v5676, 127
        %v6069 = vpop.permute.xlu0 %6068
        %6070 = vrot.lane.b32.xlu0 %v5678, 127
        %v6071 = vpop.permute.xlu0 %6070
        %6072 = vrot.lane.b32.xlu0 %v5681, 127
        %v6073 = vpop.permute.xlu0 %6072
        %6074 = vrot.lane.b32.xlu0 %v5683, 127
        %v6075 = vpop.permute.xlu0 %6074
        %6076 = vrot.lane.b32.xlu0 %v5686, 127
        %v6077 = vpop.permute.xlu0 %6076
        %6078 = vrot.lane.b32.xlu0 %v5688, 127
        %v6079 = vpop.permute.xlu0 %6078
        %6080 = vrot.lane.b32.xlu0 %v5691, 127
        %v6081 = vpop.permute.xlu0 %6080
        %6082 = vrot.lane.b32.xlu0 %v5693, 127
        %v6083 = vpop.permute.xlu0 %6082
        %v6100 = vcombine.low %v6053, %v6061
        %v6101 = vcombine.high %v6053, %v6061
        %v6103 = vunpack.c.l.s4 1983009808
        %v6104 = vunpack.c.0.s8 %v6103
        %v6105 = vlaneseq
        %v6106 = vshrl.u32 %v6105, 7
        %v6107 = vsub.s32 %v6104, %v6106
        %v6108 = vrot.slane %v6100, %v6107
        %v6110 = vunpack.c.l.s4 1983009808
        %v6111 = vunpack.c.0.s8 %v6110
        %v6112 = vlaneseq
        %v6113 = vshrl.u32 %v6112, 7
        %v6114 = vsub.s32 %v6111, %v6113
        %v6115 = vrot.slane %v6101, %v6114
        %v6116 = vcombine.low %v6057, %v6065
        %v6117 = vcombine.high %v6057, %v6065
        %v6119 = vunpack.c.l.s4 1983009808
        %v6120 = vunpack.c.0.s8 %v6119
        %v6121 = vlaneseq
        %v6122 = vshrl.u32 %v6121, 7
        %v6123 = vsub.s32 %v6120, %v6122
        %v6124 = vrot.slane %v6116, %v6123
        %v6126 = vunpack.c.l.s4 1983009808
        %v6127 = vunpack.c.0.s8 %v6126
        %v6128 = vlaneseq
        %v6129 = vshrl.u32 %v6128, 7
        %v6130 = vsub.s32 %v6127, %v6129
        %v6131 = vrot.slane %v6117, %v6130
        %v6132 = vcombine.low %v6069, %v6077
        %v6133 = vcombine.high %v6069, %v6077
        %v6135 = vunpack.c.l.s4 1983009808
        %v6136 = vunpack.c.0.s8 %v6135
        %v6137 = vlaneseq
        %v6138 = vshrl.u32 %v6137, 7
        %v6139 = vsub.s32 %v6136, %v6138
        %v6140 = vrot.slane %v6132, %v6139
        %v6142 = vunpack.c.l.s4 1983009808
        %v6143 = vunpack.c.0.s8 %v6142
        %v6144 = vlaneseq
        %v6145 = vshrl.u32 %v6144, 7
        %v6146 = vsub.s32 %v6143, %v6145
        %v6147 = vrot.slane %v6133, %v6146
        %v6148 = vcombine.low %v6073, %v6081
        %v6149 = vcombine.high %v6073, %v6081
        %v6151 = vunpack.c.l.s4 1983009808
        %v6152 = vunpack.c.0.s8 %v6151
        %v6153 = vlaneseq
        %v6154 = vshrl.u32 %v6153, 7
        %v6155 = vsub.s32 %v6152, %v6154
        %v6156 = vrot.slane %v6148, %v6155
        %v6158 = vunpack.c.l.s4 1983009808
        %v6159 = vunpack.c.0.s8 %v6158
        %v6160 = vlaneseq
        %v6161 = vshrl.u32 %v6160, 7
        %v6162 = vsub.s32 %v6159, %v6161
        %v6163 = vrot.slane %v6149, %v6162
        %v6164 = vcombine.low %v6108, %v6124
        %v6165 = vcombine.high %v6108, %v6124
        %v6167 = vunpack.c.l.s4 1934713408
        %v6168 = vunpack.c.0.s8 %v6167
        %v6169 = vlaneseq
        %v6170 = vshrl.u32 %v6169, 7
        %v6171 = vsub.s32 %v6168, %v6170
        %v6172 = vrot.slane %v6164, %v6171
        %v6174 = vunpack.c.l.s4 1934713408
        %v6175 = vunpack.c.0.s8 %v6174
        %v6176 = vlaneseq
        %v6177 = vshrl.u32 %v6176, 7
        %v6178 = vsub.s32 %v6175, %v6177
        %v6179 = vrot.slane %v6165, %v6178
        %v6180 = vcombine.low %v6115, %v6131
        %v6181 = vcombine.high %v6115, %v6131
        %v6183 = vunpack.c.l.s4 1934713408
        %v6184 = vunpack.c.0.s8 %v6183
        %v6185 = vlaneseq
        %v6186 = vshrl.u32 %v6185, 7
        %v6187 = vsub.s32 %v6184, %v6186
        %v6188 = vrot.slane %v6180, %v6187
        %v6190 = vunpack.c.l.s4 1934713408
        %v6191 = vunpack.c.0.s8 %v6190
        %v6192 = vlaneseq
        %v6193 = vshrl.u32 %v6192, 7
        %v6194 = vsub.s32 %v6191, %v6193
        %v6195 = vrot.slane %v6181, %v6194
        %v6196 = vcombine.low %v6140, %v6156
        %v6197 = vcombine.high %v6140, %v6156
        %v6199 = vunpack.c.l.s4 1934713408
        %v6200 = vunpack.c.0.s8 %v6199
        %v6201 = vlaneseq
        %v6202 = vshrl.u32 %v6201, 7
        %v6203 = vsub.s32 %v6200, %v6202
        %v6204 = vrot.slane %v6196, %v6203
        %v6206 = vunpack.c.l.s4 1934713408
        %v6207 = vunpack.c.0.s8 %v6206
        %v6208 = vlaneseq
        %v6209 = vshrl.u32 %v6208, 7
        %v6210 = vsub.s32 %v6207, %v6209
        %v6211 = vrot.slane %v6197, %v6210
        %v6212 = vcombine.low %v6147, %v6163
        %v6213 = vcombine.high %v6147, %v6163
        %v6215 = vunpack.c.l.s4 1934713408
        %v6216 = vunpack.c.0.s8 %v6215
        %v6217 = vlaneseq
        %v6218 = vshrl.u32 %v6217, 7
        %v6219 = vsub.s32 %v6216, %v6218
        %v6220 = vrot.slane %v6212, %v6219
        %v6222 = vunpack.c.l.s4 1934713408
        %v6223 = vunpack.c.0.s8 %v6222
        %v6224 = vlaneseq
        %v6225 = vshrl.u32 %v6224, 7
        %v6226 = vsub.s32 %v6223, %v6225
        %v6227 = vrot.slane %v6213, %v6226
        %v6228 = vcombine.low %v6172, %v6204
        %v6229 = vcombine.high %v6172, %v6204
        %v6230 = vcombine.low %v6179, %v6211
        %v6231 = vcombine.high %v6179, %v6211
        %v6232 = vcombine.low %v6188, %v6220
        %v6233 = vcombine.high %v6188, %v6220
        %v6234 = vcombine.low %v6195, %v6227
        %v6235 = vcombine.high %v6195, %v6227
        %v6236 = vcombine.low %v6055, %v6063
        %v6237 = vcombine.high %v6055, %v6063
        %v6239 = vunpack.c.l.s4 1983009808
        %v6240 = vunpack.c.0.s8 %v6239
        %v6241 = vlaneseq
        %v6242 = vshrl.u32 %v6241, 7
        %v6243 = vsub.s32 %v6240, %v6242
        %v6244 = vrot.slane %v6236, %v6243
        %v6246 = vunpack.c.l.s4 1983009808
        %v6247 = vunpack.c.0.s8 %v6246
        %v6248 = vlaneseq
        %v6249 = vshrl.u32 %v6248, 7
        %v6250 = vsub.s32 %v6247, %v6249
        %v6251 = vrot.slane %v6237, %v6250
        %v6252 = vcombine.low %v6059, %v6067
        %v6253 = vcombine.high %v6059, %v6067
        %v6255 = vunpack.c.l.s4 1983009808
        %v6256 = vunpack.c.0.s8 %v6255
        %v6257 = vlaneseq
        %v6258 = vshrl.u32 %v6257, 7
        %v6259 = vsub.s32 %v6256, %v6258
        %v6260 = vrot.slane %v6252, %v6259
        %v6262 = vunpack.c.l.s4 1983009808
        %v6263 = vunpack.c.0.s8 %v6262
        %v6264 = vlaneseq
        %v6265 = vshrl.u32 %v6264, 7
        %v6266 = vsub.s32 %v6263, %v6265
        %v6267 = vrot.slane %v6253, %v6266
        %v6268 = vcombine.low %v6071, %v6079
        %v6269 = vcombine.high %v6071, %v6079
        %v6271 = vunpack.c.l.s4 1983009808
        %v6272 = vunpack.c.0.s8 %v6271
        %v6273 = vlaneseq
        %v6274 = vshrl.u32 %v6273, 7
        %v6275 = vsub.s32 %v6272, %v6274
        %v6276 = vrot.slane %v6268, %v6275
        %v6278 = vunpack.c.l.s4 1983009808
        %v6279 = vunpack.c.0.s8 %v6278
        %v6280 = vlaneseq
        %v6281 = vshrl.u32 %v6280, 7
        %v6282 = vsub.s32 %v6279, %v6281
        %v6283 = vrot.slane %v6269, %v6282
        %v6284 = vcombine.low %v6075, %v6083
        %v6285 = vcombine.high %v6075, %v6083
        %v6287 = vunpack.c.l.s4 1983009808
        %v6288 = vunpack.c.0.s8 %v6287
        %v6289 = vlaneseq
        %v6290 = vshrl.u32 %v6289, 7
        %v6291 = vsub.s32 %v6288, %v6290
        %v6292 = vrot.slane %v6284, %v6291
        %v6294 = vunpack.c.l.s4 1983009808
        %v6295 = vunpack.c.0.s8 %v6294
        %v6296 = vlaneseq
        %v6297 = vshrl.u32 %v6296, 7
        %v6298 = vsub.s32 %v6295, %v6297
        %v6299 = vrot.slane %v6285, %v6298
        %v6300 = vcombine.low %v6244, %v6260
        %v6301 = vcombine.high %v6244, %v6260
        %v6303 = vunpack.c.l.s4 1934713408
        %v6304 = vunpack.c.0.s8 %v6303
        %v6305 = vlaneseq
        %v6306 = vshrl.u32 %v6305, 7
        %v6307 = vsub.s32 %v6304, %v6306
        %v6308 = vrot.slane %v6300, %v6307
        %v6310 = vunpack.c.l.s4 1934713408
        %v6311 = vunpack.c.0.s8 %v6310
        %v6312 = vlaneseq
        %v6313 = vshrl.u32 %v6312, 7
        %v6314 = vsub.s32 %v6311, %v6313
        %v6315 = vrot.slane %v6301, %v6314
        %v6316 = vcombine.low %v6251, %v6267
        %v6317 = vcombine.high %v6251, %v6267
        %v6319 = vunpack.c.l.s4 1934713408
        %v6320 = vunpack.c.0.s8 %v6319
        %v6321 = vlaneseq
        %v6322 = vshrl.u32 %v6321, 7
        %v6323 = vsub.s32 %v6320, %v6322
        %v6324 = vrot.slane %v6316, %v6323
        %v6326 = vunpack.c.l.s4 1934713408
        %v6327 = vunpack.c.0.s8 %v6326
        %v6328 = vlaneseq
        %v6329 = vshrl.u32 %v6328, 7
        %v6330 = vsub.s32 %v6327, %v6329
        %v6331 = vrot.slane %v6317, %v6330
        %v6332 = vcombine.low %v6276, %v6292
        %v6333 = vcombine.high %v6276, %v6292
        %v6335 = vunpack.c.l.s4 1934713408
        %v6336 = vunpack.c.0.s8 %v6335
        %v6337 = vlaneseq
        %v6338 = vshrl.u32 %v6337, 7
        %v6339 = vsub.s32 %v6336, %v6338
        %v6340 = vrot.slane %v6332, %v6339
        %v6342 = vunpack.c.l.s4 1934713408
        %v6343 = vunpack.c.0.s8 %v6342
        %v6344 = vlaneseq
        %v6345 = vshrl.u32 %v6344, 7
        %v6346 = vsub.s32 %v6343, %v6345
        %v6347 = vrot.slane %v6333, %v6346
        %v6348 = vcombine.low %v6283, %v6299
        %v6349 = vcombine.high %v6283, %v6299
        %v6351 = vunpack.c.l.s4 1934713408
        %v6352 = vunpack.c.0.s8 %v6351
        %v6353 = vlaneseq
        %v6354 = vshrl.u32 %v6353, 7
        %v6355 = vsub.s32 %v6352, %v6354
        %v6356 = vrot.slane %v6348, %v6355
        %v6358 = vunpack.c.l.s4 1934713408
        %v6359 = vunpack.c.0.s8 %v6358
        %v6360 = vlaneseq
        %v6361 = vshrl.u32 %v6360, 7
        %v6362 = vsub.s32 %v6359, %v6361
        %v6363 = vrot.slane %v6349, %v6362
        %v6364 = vcombine.low %v6308, %v6340
        %v6365 = vcombine.high %v6308, %v6340
        %v6366 = vcombine.low %v6315, %v6347
        %v6367 = vcombine.high %v6315, %v6347
        %v6368 = vcombine.low %v6324, %v6356
        %v6369 = vcombine.high %v6324, %v6356
        %v6370 = vcombine.low %v6331, %v6363
        %v6371 = vcombine.high %v6331, %v6363
        %6373 = vrot.lane.b32.xlu0 %v6229, 16
        %v6374 = vpop.permute.xlu0 %6373
        %6377 = vrot.lane.b32.xlu0 %v6230, 32
        %v6378 = vpop.permute.xlu0 %6377
        %6381 = vrot.lane.b32.xlu0 %v6231, 48
        %v6382 = vpop.permute.xlu0 %6381
        %6385 = vrot.lane.b32.xlu0 %v6232, 64
        %v6386 = vpop.permute.xlu0 %6385
        %6389 = vrot.lane.b32.xlu0 %v6233, 80
        %v6390 = vpop.permute.xlu0 %6389
        %6393 = vrot.lane.b32.xlu0 %v6234, 96
        %v6394 = vpop.permute.xlu0 %6393
        %6397 = vrot.lane.b32.xlu0 %v6235, 112
        %v6398 = vpop.permute.xlu0 %6397
        %6401 = vrot.lane.b32.xlu0 %v6365, 16
        %v6402 = vpop.permute.xlu0 %6401
        %6405 = vrot.lane.b32.xlu0 %v6366, 32
        %v6406 = vpop.permute.xlu0 %6405
        %6409 = vrot.lane.b32.xlu0 %v6367, 48
        %v6410 = vpop.permute.xlu0 %6409
        %6413 = vrot.lane.b32.xlu0 %v6368, 64
        %v6414 = vpop.permute.xlu0 %6413
        %6417 = vrot.lane.b32.xlu0 %v6369, 80
        %v6418 = vpop.permute.xlu0 %6417
        %6421 = vrot.lane.b32.xlu0 %v6370, 96
        %v6422 = vpop.permute.xlu0 %6421
        %6425 = vrot.lane.b32.xlu0 %v6371, 112
        %v6426 = vpop.permute.xlu0 %6425
        %v6428 = vsel %vm609, %v6228, %v6374
        %v6429 = vsel %vm611, %v6428, %v6378
        %v6430 = vsel %vm613, %v6429, %v6382
        %v6431 = vsel %vm615, %v6430, %v6386
        %v6432 = vsel %vm617, %v6431, %v6390
        %v6433 = vsel %vm619, %v6432, %v6394
        %v6434 = vsel %vm621, %v6433, %v6398
        %v6435 = vsel %vm609, %v6364, %v6402
        %v6436 = vsel %vm611, %v6435, %v6406
        %v6437 = vsel %vm613, %v6436, %v6410
        %v6438 = vsel %vm615, %v6437, %v6414
        %v6439 = vsel %vm617, %v6438, %v6418
        %v6440 = vsel %vm619, %v6439, %v6422
        %v6441 = vsel %vm621, %v6440, %v6426
        %6442 = vrot.lane.b32.xlu0 %v5656, 126
        %v6443 = vpop.permute.xlu0 %6442
        %6444 = vrot.lane.b32.xlu0 %v5658, 126
        %v6445 = vpop.permute.xlu0 %6444
        %6446 = vrot.lane.b32.xlu0 %v5661, 126
        %v6447 = vpop.permute.xlu0 %6446
        %6448 = vrot.lane.b32.xlu0 %v5663, 126
        %v6449 = vpop.permute.xlu0 %6448
        %6450 = vrot.lane.b32.xlu0 %v5666, 126
        %v6451 = vpop.permute.xlu0 %6450
        %6452 = vrot.lane.b32.xlu0 %v5668, 126
        %v6453 = vpop.permute.xlu0 %6452
        %6454 = vrot.lane.b32.xlu0 %v5671, 126
        %v6455 = vpop.permute.xlu0 %6454
        %6456 = vrot.lane.b32.xlu0 %v5673, 126
        %v6457 = vpop.permute.xlu0 %6456
        %6458 = vrot.lane.b32.xlu0 %v5676, 126
        %v6459 = vpop.permute.xlu0 %6458
        %6460 = vrot.lane.b32.xlu0 %v5678, 126
        %v6461 = vpop.permute.xlu0 %6460
        %6462 = vrot.lane.b32.xlu0 %v5681, 126
        %v6463 = vpop.permute.xlu0 %6462
        %6464 = vrot.lane.b32.xlu0 %v5683, 126
        %v6465 = vpop.permute.xlu0 %6464
        %6466 = vrot.lane.b32.xlu0 %v5686, 126
        %v6467 = vpop.permute.xlu0 %6466
        %6468 = vrot.lane.b32.xlu0 %v5688, 126
        %v6469 = vpop.permute.xlu0 %6468
        %6470 = vrot.lane.b32.xlu0 %v5691, 126
        %v6471 = vpop.permute.xlu0 %6470
        %6472 = vrot.lane.b32.xlu0 %v5693, 126
        %v6473 = vpop.permute.xlu0 %6472
        %v6490 = vcombine.low %v6443, %v6451
        %v6491 = vcombine.high %v6443, %v6451
        %v6493 = vunpack.c.l.s4 1983009808
        %v6494 = vunpack.c.0.s8 %v6493
        %v6495 = vlaneseq
        %v6496 = vshrl.u32 %v6495, 7
        %v6497 = vsub.s32 %v6494, %v6496
        %v6498 = vrot.slane %v6490, %v6497
        %v6500 = vunpack.c.l.s4 1983009808
        %v6501 = vunpack.c.0.s8 %v6500
        %v6502 = vlaneseq
        %v6503 = vshrl.u32 %v6502, 7
        %v6504 = vsub.s32 %v6501, %v6503
        %v6505 = vrot.slane %v6491, %v6504
        %v6506 = vcombine.low %v6447, %v6455
        %v6507 = vcombine.high %v6447, %v6455
        %v6509 = vunpack.c.l.s4 1983009808
        %v6510 = vunpack.c.0.s8 %v6509
        %v6511 = vlaneseq
        %v6512 = vshrl.u32 %v6511, 7
        %v6513 = vsub.s32 %v6510, %v6512
        %v6514 = vrot.slane %v6506, %v6513
        %v6516 = vunpack.c.l.s4 1983009808
        %v6517 = vunpack.c.0.s8 %v6516
        %v6518 = vlaneseq
        %v6519 = vshrl.u32 %v6518, 7
        %v6520 = vsub.s32 %v6517, %v6519
        %v6521 = vrot.slane %v6507, %v6520
        %v6522 = vcombine.low %v6459, %v6467
        %v6523 = vcombine.high %v6459, %v6467
        %v6525 = vunpack.c.l.s4 1983009808
        %v6526 = vunpack.c.0.s8 %v6525
        %v6527 = vlaneseq
        %v6528 = vshrl.u32 %v6527, 7
        %v6529 = vsub.s32 %v6526, %v6528
        %v6530 = vrot.slane %v6522, %v6529
        %v6532 = vunpack.c.l.s4 1983009808
        %v6533 = vunpack.c.0.s8 %v6532
        %v6534 = vlaneseq
        %v6535 = vshrl.u32 %v6534, 7
        %v6536 = vsub.s32 %v6533, %v6535
        %v6537 = vrot.slane %v6523, %v6536
        %v6538 = vcombine.low %v6463, %v6471
        %v6539 = vcombine.high %v6463, %v6471
        %v6541 = vunpack.c.l.s4 1983009808
        %v6542 = vunpack.c.0.s8 %v6541
        %v6543 = vlaneseq
        %v6544 = vshrl.u32 %v6543, 7
        %v6545 = vsub.s32 %v6542, %v6544
        %v6546 = vrot.slane %v6538, %v6545
        %v6548 = vunpack.c.l.s4 1983009808
        %v6549 = vunpack.c.0.s8 %v6548
        %v6550 = vlaneseq
        %v6551 = vshrl.u32 %v6550, 7
        %v6552 = vsub.s32 %v6549, %v6551
        %v6553 = vrot.slane %v6539, %v6552
        %v6554 = vcombine.low %v6498, %v6514
        %v6555 = vcombine.high %v6498, %v6514
        %v6557 = vunpack.c.l.s4 1934713408
        %v6558 = vunpack.c.0.s8 %v6557
        %v6559 = vlaneseq
        %v6560 = vshrl.u32 %v6559, 7
        %v6561 = vsub.s32 %v6558, %v6560
        %v6562 = vrot.slane %v6554, %v6561
        %v6564 = vunpack.c.l.s4 1934713408
        %v6565 = vunpack.c.0.s8 %v6564
        %v6566 = vlaneseq
        %v6567 = vshrl.u32 %v6566, 7
        %v6568 = vsub.s32 %v6565, %v6567
        %v6569 = vrot.slane %v6555, %v6568
        %v6570 = vcombine.low %v6505, %v6521
        %v6571 = vcombine.high %v6505, %v6521
        %v6573 = vunpack.c.l.s4 1934713408
        %v6574 = vunpack.c.0.s8 %v6573
        %v6575 = vlaneseq
        %v6576 = vshrl.u32 %v6575, 7
        %v6577 = vsub.s32 %v6574, %v6576
        %v6578 = vrot.slane %v6570, %v6577
        %v6580 = vunpack.c.l.s4 1934713408
        %v6581 = vunpack.c.0.s8 %v6580
        %v6582 = vlaneseq
        %v6583 = vshrl.u32 %v6582, 7
        %v6584 = vsub.s32 %v6581, %v6583
        %v6585 = vrot.slane %v6571, %v6584
        %v6586 = vcombine.low %v6530, %v6546
        %v6587 = vcombine.high %v6530, %v6546
        %v6589 = vunpack.c.l.s4 1934713408
        %v6590 = vunpack.c.0.s8 %v6589
        %v6591 = vlaneseq
        %v6592 = vshrl.u32 %v6591, 7
        %v6593 = vsub.s32 %v6590, %v6592
        %v6594 = vrot.slane %v6586, %v6593
        %v6596 = vunpack.c.l.s4 1934713408
        %v6597 = vunpack.c.0.s8 %v6596
        %v6598 = vlaneseq
        %v6599 = vshrl.u32 %v6598, 7
        %v6600 = vsub.s32 %v6597, %v6599
        %v6601 = vrot.slane %v6587, %v6600
        %v6602 = vcombine.low %v6537, %v6553
        %v6603 = vcombine.high %v6537, %v6553
        %v6605 = vunpack.c.l.s4 1934713408
        %v6606 = vunpack.c.0.s8 %v6605
        %v6607 = vlaneseq
        %v6608 = vshrl.u32 %v6607, 7
        %v6609 = vsub.s32 %v6606, %v6608
        %v6610 = vrot.slane %v6602, %v6609
        %v6612 = vunpack.c.l.s4 1934713408
        %v6613 = vunpack.c.0.s8 %v6612
        %v6614 = vlaneseq
        %v6615 = vshrl.u32 %v6614, 7
        %v6616 = vsub.s32 %v6613, %v6615
        %v6617 = vrot.slane %v6603, %v6616
        %v6618 = vcombine.low %v6562, %v6594
        %v6619 = vcombine.high %v6562, %v6594
        %v6620 = vcombine.low %v6569, %v6601
        %v6621 = vcombine.high %v6569, %v6601
        %v6622 = vcombine.low %v6578, %v6610
        %v6623 = vcombine.high %v6578, %v6610
        %v6624 = vcombine.low %v6585, %v6617
        %v6625 = vcombine.high %v6585, %v6617
        %v6626 = vcombine.low %v6445, %v6453
        %v6627 = vcombine.high %v6445, %v6453
        %v6629 = vunpack.c.l.s4 1983009808
        %v6630 = vunpack.c.0.s8 %v6629
        %v6631 = vlaneseq
        %v6632 = vshrl.u32 %v6631, 7
        %v6633 = vsub.s32 %v6630, %v6632
        %v6634 = vrot.slane %v6626, %v6633
        %v6636 = vunpack.c.l.s4 1983009808
        %v6637 = vunpack.c.0.s8 %v6636
        %v6638 = vlaneseq
        %v6639 = vshrl.u32 %v6638, 7
        %v6640 = vsub.s32 %v6637, %v6639
        %v6641 = vrot.slane %v6627, %v6640
        %v6642 = vcombine.low %v6449, %v6457
        %v6643 = vcombine.high %v6449, %v6457
        %v6645 = vunpack.c.l.s4 1983009808
        %v6646 = vunpack.c.0.s8 %v6645
        %v6647 = vlaneseq
        %v6648 = vshrl.u32 %v6647, 7
        %v6649 = vsub.s32 %v6646, %v6648
        %v6650 = vrot.slane %v6642, %v6649
        %v6652 = vunpack.c.l.s4 1983009808
        %v6653 = vunpack.c.0.s8 %v6652
        %v6654 = vlaneseq
        %v6655 = vshrl.u32 %v6654, 7
        %v6656 = vsub.s32 %v6653, %v6655
        %v6657 = vrot.slane %v6643, %v6656
        %v6658 = vcombine.low %v6461, %v6469
        %v6659 = vcombine.high %v6461, %v6469
        %v6661 = vunpack.c.l.s4 1983009808
        %v6662 = vunpack.c.0.s8 %v6661
        %v6663 = vlaneseq
        %v6664 = vshrl.u32 %v6663, 7
        %v6665 = vsub.s32 %v6662, %v6664
        %v6666 = vrot.slane %v6658, %v6665
        %v6668 = vunpack.c.l.s4 1983009808
        %v6669 = vunpack.c.0.s8 %v6668
        %v6670 = vlaneseq
        %v6671 = vshrl.u32 %v6670, 7
        %v6672 = vsub.s32 %v6669, %v6671
        %v6673 = vrot.slane %v6659, %v6672
        %v6674 = vcombine.low %v6465, %v6473
        %v6675 = vcombine.high %v6465, %v6473
        %v6677 = vunpack.c.l.s4 1983009808
        %v6678 = vunpack.c.0.s8 %v6677
        %v6679 = vlaneseq
        %v6680 = vshrl.u32 %v6679, 7
        %v6681 = vsub.s32 %v6678, %v6680
        %v6682 = vrot.slane %v6674, %v6681
        %v6684 = vunpack.c.l.s4 1983009808
        %v6685 = vunpack.c.0.s8 %v6684
        %v6686 = vlaneseq
        %v6687 = vshrl.u32 %v6686, 7
        %v6688 = vsub.s32 %v6685, %v6687
        %v6689 = vrot.slane %v6675, %v6688
        %v6690 = vcombine.low %v6634, %v6650
        %v6691 = vcombine.high %v6634, %v6650
        %v6693 = vunpack.c.l.s4 1934713408
        %v6694 = vunpack.c.0.s8 %v6693
        %v6695 = vlaneseq
        %v6696 = vshrl.u32 %v6695, 7
        %v6697 = vsub.s32 %v6694, %v6696
        %v6698 = vrot.slane %v6690, %v6697
        %v6700 = vunpack.c.l.s4 1934713408
        %v6701 = vunpack.c.0.s8 %v6700
        %v6702 = vlaneseq
        %v6703 = vshrl.u32 %v6702, 7
        %v6704 = vsub.s32 %v6701, %v6703
        %v6705 = vrot.slane %v6691, %v6704
        %v6706 = vcombine.low %v6641, %v6657
        %v6707 = vcombine.high %v6641, %v6657
        %v6709 = vunpack.c.l.s4 1934713408
        %v6710 = vunpack.c.0.s8 %v6709
        %v6711 = vlaneseq
        %v6712 = vshrl.u32 %v6711, 7
        %v6713 = vsub.s32 %v6710, %v6712
        %v6714 = vrot.slane %v6706, %v6713
        %v6716 = vunpack.c.l.s4 1934713408
        %v6717 = vunpack.c.0.s8 %v6716
        %v6718 = vlaneseq
        %v6719 = vshrl.u32 %v6718, 7
        %v6720 = vsub.s32 %v6717, %v6719
        %v6721 = vrot.slane %v6707, %v6720
        %v6722 = vcombine.low %v6666, %v6682
        %v6723 = vcombine.high %v6666, %v6682
        %v6725 = vunpack.c.l.s4 1934713408
        %v6726 = vunpack.c.0.s8 %v6725
        %v6727 = vlaneseq
        %v6728 = vshrl.u32 %v6727, 7
        %v6729 = vsub.s32 %v6726, %v6728
        %v6730 = vrot.slane %v6722, %v6729
        %v6732 = vunpack.c.l.s4 1934713408
        %v6733 = vunpack.c.0.s8 %v6732
        %v6734 = vlaneseq
        %v6735 = vshrl.u32 %v6734, 7
        %v6736 = vsub.s32 %v6733, %v6735
        %v6737 = vrot.slane %v6723, %v6736
        %v6738 = vcombine.low %v6673, %v6689
        %v6739 = vcombine.high %v6673, %v6689
        %v6741 = vunpack.c.l.s4 1934713408
        %v6742 = vunpack.c.0.s8 %v6741
        %v6743 = vlaneseq
        %v6744 = vshrl.u32 %v6743, 7
        %v6745 = vsub.s32 %v6742, %v6744
        %v6746 = vrot.slane %v6738, %v6745
        %v6748 = vunpack.c.l.s4 1934713408
        %v6749 = vunpack.c.0.s8 %v6748
        %v6750 = vlaneseq
        %v6751 = vshrl.u32 %v6750, 7
        %v6752 = vsub.s32 %v6749, %v6751
        %v6753 = vrot.slane %v6739, %v6752
        %v6754 = vcombine.low %v6698, %v6730
        %v6755 = vcombine.high %v6698, %v6730
        %v6756 = vcombine.low %v6705, %v6737
        %v6757 = vcombine.high %v6705, %v6737
        %v6758 = vcombine.low %v6714, %v6746
        %v6759 = vcombine.high %v6714, %v6746
        %v6760 = vcombine.low %v6721, %v6753
        %v6761 = vcombine.high %v6721, %v6753
        %6763 = vrot.lane.b32.xlu0 %v6619, 16
        %v6764 = vpop.permute.xlu0 %6763
        %6767 = vrot.lane.b32.xlu0 %v6620, 32
        %v6768 = vpop.permute.xlu0 %6767
        %6771 = vrot.lane.b32.xlu0 %v6621, 48
        %v6772 = vpop.permute.xlu0 %6771
        %6775 = vrot.lane.b32.xlu0 %v6622, 64
        %v6776 = vpop.permute.xlu0 %6775
        %6779 = vrot.lane.b32.xlu0 %v6623, 80
        %v6780 = vpop.permute.xlu0 %6779
        %6783 = vrot.lane.b32.xlu0 %v6624, 96
        %v6784 = vpop.permute.xlu0 %6783
        %6787 = vrot.lane.b32.xlu0 %v6625, 112
        %v6788 = vpop.permute.xlu0 %6787
        %6791 = vrot.lane.b32.xlu0 %v6755, 16
        %v6792 = vpop.permute.xlu0 %6791
        %6795 = vrot.lane.b32.xlu0 %v6756, 32
        %v6796 = vpop.permute.xlu0 %6795
        %6799 = vrot.lane.b32.xlu0 %v6757, 48
        %v6800 = vpop.permute.xlu0 %6799
        %6803 = vrot.lane.b32.xlu0 %v6758, 64
        %v6804 = vpop.permute.xlu0 %6803
        %6807 = vrot.lane.b32.xlu0 %v6759, 80
        %v6808 = vpop.permute.xlu0 %6807
        %6811 = vrot.lane.b32.xlu0 %v6760, 96
        %v6812 = vpop.permute.xlu0 %6811
        %6815 = vrot.lane.b32.xlu0 %v6761, 112
        %v6816 = vpop.permute.xlu0 %6815
        %v6818 = vsel %vm609, %v6618, %v6764
        %v6819 = vsel %vm611, %v6818, %v6768
        %v6820 = vsel %vm613, %v6819, %v6772
        %v6821 = vsel %vm615, %v6820, %v6776
        %v6822 = vsel %vm617, %v6821, %v6780
        %v6823 = vsel %vm619, %v6822, %v6784
        %v6824 = vsel %vm621, %v6823, %v6788
        %v6825 = vsel %vm609, %v6754, %v6792
        %v6826 = vsel %vm611, %v6825, %v6796
        %v6827 = vsel %vm613, %v6826, %v6800
        %v6828 = vsel %vm615, %v6827, %v6804
        %v6829 = vsel %vm617, %v6828, %v6808
        %v6830 = vsel %vm619, %v6829, %v6812
        %v6831 = vsel %vm621, %v6830, %v6816
        %v6832 = vld [vmem:[#allocation7] sm:$0xff]
        %vm6833 = vcmask 588800
        %v6835 = vsel %vm6833, %v6832, 0
        %6837 = vmatprep.subr.mxu0 %v3671
        %6838 = vmatpush1.msra.mxu0 %v3664
        %6839 = vmatprep.subr.mxu0 %v4077
        %6840 = vmatpush1.msra.mxu0 %v4070
        %6841 = vmatprep.subr.mxu0 %v4467
        %6842 = vmatpush1.msra.mxu0 %v4460
        %6843 = vmatprep.subr.mxu0 %v4873
        %6844 = vmatpush1.msra.mxu0 %v4866
        %6845 = vmatprep.subr.mxu0 %v5263
        %6846 = vmatpush1.msra.mxu0 %v5256
        %6847 = vmatprep.subr.mxu0 %v5653
        %6848 = vmatpush1.msra.mxu0 %v5646
        %6849 = vmatprep.subr.mxu0 %v6051
        %6850 = vmatpush1.msra.mxu0 %v6044
        %6851 = vmatprep.subr.mxu0 %v6441
        %6852 = vmatpush1.msra.mxu0 %v6434
        %6853 = vmatprep.subr.mxu0 %v6831
        %6854 = vmatpush1.msra.mxu0 %v6824
        %6855 = vmatprep.subr.mxu0 0.0
        %6856 = vmatpush1.msra.mxu0 0.0
        %6857 = vmatprep.subr.mxu0 0.0
        %6858 = vmatpush1.msra.mxu0 0.0
        %6859 = vmatprep.subr.mxu0 0.0
        %6860 = vmatpush1.msra.mxu0 0.0
        %6861 = vmatprep.subr.mxu0 0.0
        %6862 = vmatpush1.msra.mxu0 0.0
        %6863 = vmatprep.subr.mxu0 0.0
        %6864 = vmatpush1.msra.mxu0 0.0
        %6865 = vmatprep.subr.mxu0 0.0
        %6866 = vmatpush1.msra.mxu0 0.0
        %6867 = vmatprep.subr.mxu0 0.0
        %6868 = vmatpush1.msra.mxu0 0.0
        %6869 = vmatprep.subr.mxu0 0.0
        %6870 = vmatpush1.msra.mxu0 0.0
        %6871 = vmatprep.subr.mxu0 0.0
        %6872 = vmatpush1.msra.mxu0 0.0
        %6873 = vmatprep.subr.mxu0 0.0
        %6874 = vmatpush1.msra.mxu0 0.0
        %6875 = vmatprep.subr.mxu0 0.0
        %6876 = vmatpush1.msra.mxu0 0.0
        %6877 = vmatprep.subr.mxu0 0.0
        %6878 = vmatpush1.msra.mxu0 0.0
        %6879 = vmatprep.subr.mxu0 0.0
        %6880 = vmatpush1.msra.mxu0 0.0
        %6881 = vmatprep.subr.mxu0 0.0
        %6882 = vmatpush1.msra.mxu0 0.0
        %6883 = vmatprep.subr.mxu0 0.0
        %6884 = vmatpush1.msra.mxu0 0.0
        %6885 = vmatprep.subr.mxu0 0.0
        %6886 = vmatpush1.msra.mxu0 0.0
        %6887 = vmatprep.subr.mxu0 0.0
        %6888 = vmatpush1.msra.mxu0 0.0
        %6889 = vmatprep.subr.mxu0 0.0
        %6890 = vmatpush1.msra.mxu0 0.0
        %6891 = vmatprep.subr.mxu0 0.0
        %6892 = vmatpush1.msra.mxu0 0.0
        %6893 = vmatprep.subr.mxu0 0.0
        %6894 = vmatpush1.msra.mxu0 0.0
        %6895 = vmatprep.subr.mxu0 0.0
        %6896 = vmatpush1.msra.mxu0 0.0
        %6897 = vmatprep.subr.mxu0 0.0
        %6898 = vmatpush1.msra.mxu0 0.0
        %6899 = vmatprep.subr.mxu0 0.0
        %6900 = vmatpush1.msra.mxu0 0.0
        %6901 = vmatprep.mubr.f32.mxu0 0.0
        %6902 = vmatmul.mubr.f32.gmra.mrb[0].mxu0 %v6835
        %v6903 = vpop.f32.mrb[0].mxu0
        %v6904 = vadd.f32 0.0, %v6903
        %v6905 = vpop.f32.mrb[0].mxu0
        %v6906 = vadd.f32 0.0, %v6905
        %6907 = vdwg.mxu0
        %v6908 = vadd.f32 %v6904, %v6906
        %6909 = vadd.xlane.f32.xlu0 %v6908
        %v6910 = vpop.xlane.xlu0 %6909
        %v6911 = vmul.f32 %v6910, %v2610
        %v6912 = vsub.f32 %v6904, %v6911
        %v6913 = vsub.f32 %v6906, %v6911
        %v6914 = vmul.f32 %v6912, %v6912
        %v6915 = vmul.f32 %v6913, %v6913
        %v6916 = vadd.f32 %v6914, %v6915
        %6917 = vadd.xlane.f32.xlu0 %v6916
        %v6918 = vpop.xlane.xlu0 %6917
        %v6919 = vmul.f32 %v6918, %v2610
        %v6920 = vadd.f32 %v6919, 1e-05
        %v6921 = vrsqrt.pop %v6920
        %v6922 = vmul.f32 %v6912, %v6921
        %v6923 = vmul.f32 %v6913, %v6921
        %vm6924 = vcmp.gt.f32.partialorder %v6922, 0.0
        %vm6925 = vcmp.gt.f32.partialorder %v6923, 0.0
        %v6926 = vmul.f32 %v6922, 0.1
        %v6927 = vmul.f32 %v6923, 0.1
        %v6928 = vsel %vm6924, %v6922, %v6926
        %v6929 = vsel %vm6925, %v6923, %v6927
        %6930 = vst [vmem:[%s213] sm:$0xff] %v6928
        %6931 = vst [vmem:[%s213 + $0x8] sm:$0xff] %v6929
        %s6932 = sand.u32 %s97, 1
        %s6933 = scalar_lea.sflag [#allocation4], %s6932
        %s6934 = sand.u32 %s97, 1
        %s6935 = smul.addr %s6934, 16
        %s6936 = scalar_lea.vmem [#allocation8], %s6935
        // Predicated region
        $region45: #{tpu_custom_call.1} parent=31 // pred_check
          %p6937 = pneg %p107
        $region46: #{tpu_custom_call.1} parent=31 // pred_check_branch
          %6939 = sbr.rel (%p6937) target = $region48
        $region47: #{tpu_custom_call.1} parent=31 // pred_region
          %s6941 = ssub.s32 256, 256
          %6942 = vsyncadd %s6933, %s6941
          %s6943 = smul.addr %s21, 2
          %s6944 = smul.addr %s6943, 128
          %s6945 = scalar_lea.hbm %s3, %s6944
          %s6947 = sshll.u32 %s6936, 4
          %s6948 = int_to_ptr.vmem [resolvable:$true] %s6947
          %6950 = dma.vmem_to_hbm [thread:$0]  %s6948, 256, %s6945, %s6933
        $region48: #{tpu_custom_call.1} parent=31 // pred_fallthru
          _
      $region32: #{tpu_custom_call.1} parent=5 // pred_fallthru
        _
      %p6951 = scmp.le.s32.totalorder 2, %s16
      // Predicated region
      $region49: #{tpu_custom_call.1} parent=5 // pred_check
        %p6952 = pneg %p6951
      $region50: #{tpu_custom_call.1} parent=5 // pred_check_branch
        %6954 = sbr.rel (%p6952) target = $region52
      $region51: #{tpu_custom_call.1} parent=5 // pred_region
        %s6955 = ssub.s32 %s16, 2
        // Predicated region
        $region53: #{tpu_custom_call.1} parent=51 // pred_check
          %p6956 = pneg %p113
        $region54: #{tpu_custom_call.1} parent=51 // pred_check_branch
          %6958 = sbr.rel (%p6956) target = $region56
        $region55: #{tpu_custom_call.1} parent=51 // pred_region
          %s6959 = sand.u32 %s98, 1
          %s6960 = scalar_lea.sflag [#allocation4], %s6959
          %s6961 = sand.u32 %s98, 1
          %s6962 = smul.addr %s6961, 16
          %s6963 = scalar_lea.vmem [#allocation8], %s6962
          %6964 = dma.done %s6960, 256
        $region56: #{tpu_custom_call.1} parent=51 // pred_fallthru
          _
      $region52: #{tpu_custom_call.1} parent=5 // pred_fallthru
        _
    $region6: #{tpu_custom_call.1} parent=1 // loop_footer
      %s20 = sadd.s32 1, %s16
    $region7: #{tpu_custom_call.1} parent=1 // loop_footer_branch
      %15 = sbr.rel target = $region3
    $region8: #{tpu_custom_call.1} parent=1 // loop_exit
      _
    %6965 = vsyncpa [#allocation3], 1
    %s6966 = scalar_lea.sflag [#allocation3], 1
    %6967 = vsyncpa %s6966, 1
    %6968 = vsyncpa [#allocation6], 1
    %6969 = vsyncpa [#allocation4], 1
    %s6970 = scalar_lea.sflag [#allocation4], 1
    %6971 = vsyncpa %s6970, 1

</llo_original>
